<compile_context>
chip_gen: v7x
topology: tpu7x:2x2x1
jax: 0.10.0
libtpu: 0.0.40
codegen_flags: <defaults>
</compile_context>

<pallas_src>
from functools import partial

import jax
import jax.numpy as jnp
from jax.experimental import pallas as pl
from jax.experimental.pallas import tpu as pltpu

IN_FEATURES = 21 * 21        # 441
HIDDEN = 64
_TM_DEFAULT = 2048           # rows per grid step (~3.6 MiB f32 logits block)
_MIN_PALLAS_BATCH = 512      # below this, fused XLA beats a kernel launch
_MIN_TILE_ROWS = 512         # don't split into 2 tiles unless both are >= this
_VMEM_LIMIT_BYTES = 32 << 20 # covers double-buffered 2048-row blocks on v5e too


def _critic_kernel(logits_ref, w1_ref, b1_ref, w2_ref, b2_ref, w3_ref, b3_ref,
                   out_ref, *, exp_bf16=False):
    x = logits_ref[...].astype(jnp.float32)                    # [TM, 441]

    # --- softmax numerator; denominator is produced by the MXU below ---
    m = jnp.max(x, axis=-1, keepdims=True)                     # [TM, 1]  (XLU)
    if exp_bf16:
        # v6e/v7x only (bf16 EUP); do not enable on v5e.
        e = jnp.exp((x - m).astype(jnp.bfloat16))
    else:
        e = jnp.exp(x - m)                                     # [TM, 441] (EUP)
    e = e.astype(w1_ref.dtype)                                 # bf16 fast path

    # --- Linear(441, 64) with the ones-column trick ------------------------
    # w1_ref is [441, 65]; column 64 is all-ones, so column 64 of h is sum(e).
    h = jnp.dot(e, w1_ref[...], preferred_element_type=jnp.float32)  # [TM, 65]
    s = h[:, HIDDEN:HIDDEN + 1]                                # [TM, 1] = sum(e)
    h1 = h[:, :HIDDEN] * pl.reciprocal(s, approx=False) + b1_ref[...]
    h1 = jnp.maximum(h1, 0.0)                                  # [TM, 64]

    # --- Linear(64, 64) + ReLU ---------------------------------------------
    h2 = jnp.dot(h1, w2_ref[...], preferred_element_type=jnp.float32) + b2_ref[...]
    h2 = jnp.maximum(h2, 0.0)                                  # [TM, 64]

    # --- Linear(64, 1): h2 @ [64, 1] ----------------------------------------
    v = jnp.dot(h2, w3_ref[...], preferred_element_type=jnp.float32) + b3_ref[...]

    out_ref[...] = v.astype(out_ref.dtype)                     # [TM, 1]


def _choose_tile(n, block_m):
    """Pick rows-per-tile.  Prefer an even tile count (>=2) for large N so the
    'parallel' batch axis splits evenly across v7x's two TensorCores."""
    if n <= block_m and n < 2 * _MIN_TILE_ROWS:
        bm = n
    else:
        n_pairs = max(1, -(-n // (2 * block_m)))   # ceil(n / (2*block_m))
        bm = -(-n // (2 * n_pairs))                # ceil(n / (2*n_pairs))
    return max(8, ((bm + 7) // 8) * 8)             # sublane multiple


def _prep_params(params, *, matmul_bf16):
    """Augment W1 with a ones column (sum fold) and pre-transpose W3."""
    w1, b1, w2, b2, w3, b3 = params
    ones_col = jnp.ones((IN_FEATURES, 1), w1.dtype)
    w1_aug = jnp.concatenate([w1, ones_col], axis=1)           # [441, 65]
    if matmul_bf16:
        w1_aug = w1_aug.astype(jnp.bfloat16)
    w3_col = jnp.transpose(w3) if w3.shape == (1, HIDDEN) else w3  # [64, 1]
    return w1_aug, b1, w2, b2, w3_col, b3


def critic_forward_pallas(logits, params, *, block_m=_TM_DEFAULT,
                          matmul_bf16=True, logits_bf16=False, exp_bf16=False):
    """Tiled Pallas path. logits: [N, 441] f32 -> [N] f32."""
    N, F = logits.shape
    assert F == IN_FEATURES, F

    w1_aug, b1, w2, b2, w3_col, b3 = _prep_params(params, matmul_bf16=matmul_bf16)

    bm = _choose_tile(N, block_m)
    grid_m = pl.cdiv(N, bm)
    rows = grid_m * bm                                         # padded row count

    logits_in = logits.astype(jnp.bfloat16) if logits_bf16 else logits
    logit_bytes = 2 if logits_bf16 else 4

    cost = pl.CostEstimate(
        flops=2 * rows * (IN_FEATURES * (HIDDEN + 1) + HIDDEN * HIDDEN + HIDDEN),
        transcendentals=rows * IN_FEATURES,
        bytes_accessed=rows * IN_FEATURES * logit_bytes + rows * 4
        + sum(int(p.size) * p.dtype.itemsize
              for p in (w1_aug, b1, w2, b2, w3_col, b3)),
    )

    out = pl.pallas_call(
        partial(_critic_kernel, exp_bf16=exp_bf16),
        out_shape=jax.ShapeDtypeStruct((grid_m, bm, 1), jnp.float32),
        grid_spec=pltpu.PrefetchScalarGridSpec(
            num_scalar_prefetch=0,
            grid=(grid_m,),
            in_specs=[
                # batch-tiled logits: the only array streamed per grid step
                pl.BlockSpec((bm, IN_FEATURES), lambda i: (i, 0)),
                # weights/biases: constant block index -> VMEM-resident, no re-DMA
                pl.BlockSpec(w1_aug.shape, lambda i: (0, 0)),
                pl.BlockSpec(b1.shape, lambda i: (0, 0)),
                pl.BlockSpec(w2.shape, lambda i: (0, 0)),
                pl.BlockSpec(b2.shape, lambda i: (0, 0)),
                pl.BlockSpec(w3_col.shape, lambda i: (0, 0)),
                pl.BlockSpec(b3.shape, lambda i: (0, 0)),
            ],
            out_specs=pl.BlockSpec((None, bm, 1), lambda i: (i, 0, 0)),
        ),
        compiler_params=pltpu.CompilerParams(
            dimension_semantics=("parallel",),
            vmem_limit_bytes=_VMEM_LIMIT_BYTES),
        cost_estimate=cost,
    )(logits_in, w1_aug, b1, w2, b2, w3_col, b3)

    # (grid_m, bm, 1) -> flat -> first N values.  Rows past N in the last tile
    # were computed from unspecified padded data; everything is row-independent
    # so they never contaminate valid rows and are sliced off here.
    return out.reshape(-1)[:N]


def _critic_forward_jax(logits, params):
    """Plain-JAX forward (reference + small-batch fallback)."""
    w1, b1, w2, b2, w3, b3 = params
    p = jax.nn.softmax(logits, axis=-1)
    h1 = jnp.maximum(p @ w1 + b1, 0.0)
    h2 = jnp.maximum(h1 @ w2 + b2, 0.0)
    v = h2 @ w3.T + b3                       # w3 stored [1, 64] (out, in)
    return jnp.squeeze(v, axis=-1)


def critic_forward(dense_map, sparse_map, logits, params,
                   *, min_pallas_batch=_MIN_PALLAS_BATCH, **kwargs):
    """Pallas implementation of Critic.forward (signature parity with PyTorch)."""
    del dense_map, sparse_map  # unused by the reference module as well
    if logits.shape[0] < min_pallas_batch:
        # Tiny batches: per-grid-step + launch overhead exceeds the work.
        return _critic_forward_jax(logits, params)
    return critic_forward_pallas(logits, params, **kwargs)


def init_critic_params(key):
    """Deterministic init mimicking nn.Linear default (U[-1/sqrt(fan_in), +])."""
    def uniform(k, shape, fan_in):
        bound = 1.0 / (fan_in ** 0.5)
        return jax.random.uniform(k, shape, jnp.float32, -bound, bound)

    ks = jax.random.split(key, 6)
    w1 = uniform(ks[0], (IN_FEATURES, HIDDEN), IN_FEATURES)   # [in, out]
    b1 = uniform(ks[1], (1, HIDDEN), IN_FEATURES)
    w2 = uniform(ks[2], (HIDDEN, HIDDEN), HIDDEN)             # [in, out]
    b2 = uniform(ks[3], (1, HIDDEN), HIDDEN)
    w3 = uniform(ks[4], (1, HIDDEN), HIDDEN)                  # [out=1, in=64]
    b3 = uniform(ks[5], (1, 1), HIDDEN)
    return (w1, b1, w2, b2, w3, b3)


if __name__ == "__main__":
    key = jax.random.PRNGKey(0)
    kp, kd, ks, kl, kl2 = jax.random.split(key, 5)

    params = init_critic_params(kp)

    # --- batch large enough to hit the tiled Pallas path (2 tiles, partial tail) ---
    N = 1250
    dense_map = jax.random.normal(kd, (N, IN_FEATURES, 6), jnp.float32)
    sparse_map = jax.random.normal(ks, (N, IN_FEATURES, 6), jnp.float32)
    logits = jax.random.normal(kl, (N, IN_FEATURES), jnp.float32)

    ref = _critic_forward_jax(logits, params)

    # Default fast path: bf16 first matmul (f32 accumulation).
    out = jax.block_until_ready(critic_forward(dense_map, sparse_map, logits, params))
    assert out.shape == (N,), out.shape
    assert jnp.allclose(out, ref, atol=1e-2, rtol=2e-2), (out, ref)

    # Exact-f32 path: tight tolerance (only MXU/fold rounding differences).
    out_f32 = jax.block_until_ready(
        critic_forward_pallas(logits, params, matmul_bf16=False))
    assert out_f32.shape == (N,), out_f32.shape
    assert jnp.allclose(out_f32, ref, atol=5e-4, rtol=1e-3), (out_f32, ref)

    # --- tiny batch: dispatcher takes the plain-JAX path ---
    N_small = 8
    logits_small = jax.random.normal(kl2, (N_small, IN_FEATURES), jnp.float32)
    dm_s = jnp.zeros((N_small, IN_FEATURES, 6), jnp.float32)
    sm_s = jnp.zeros((N_small, IN_FEATURES, 6), jnp.float32)
    out_small = jax.block_until_ready(
        critic_forward(dm_s, sm_s, logits_small, params))
    ref_small = _critic_forward_jax(logits_small, params)
    assert out_small.shape == (N_small,), out_small.shape
    assert jnp.allclose(out_small, ref_small, atol=5e-4, rtol=1e-3)

    print("KERNEL_OK")
</pallas_src>

<mosaic_0001>
module attributes {stable_mosaic.version = 11 : i64} {
  func.func @_critic_kernel(%arg0: i32, %arg1: memref<632x441xf32, #tpu.memory_space<vmem>>, %arg2: memref<441x65xbf16, #tpu.memory_space<vmem>>, %arg3: memref<1x64xf32, #tpu.memory_space<vmem>>, %arg4: memref<64x64xf32, #tpu.memory_space<vmem>>, %arg5: memref<1x64xf32, #tpu.memory_space<vmem>>, %arg6: memref<64x1xf32, #tpu.memory_space<vmem>>, %arg7: memref<1x1xf32, #tpu.memory_space<vmem>>, %arg8: memref<1x632x1xf32, #tpu.memory_space<vmem>>) attributes {dimension_semantics = [#tpu.dimension_semantics<parallel>], iteration_bounds = array<i64: 2>, scalar_prefetch = 0 : i64, scratch_operands = 0 : i64, tpu.core_type = #tpu.core_type<tc>, window_params = [{transform_indices = @transform_0, window_bounds = array<i64: 632, 441>}, {pipeline_mode = #tpu.pipeline_mode<synchronous>, transform_indices = @transform_1, window_bounds = array<i64: 441, 65>}, {pipeline_mode = #tpu.pipeline_mode<synchronous>, transform_indices = @transform_2, window_bounds = array<i64: 1, 64>}, {pipeline_mode = #tpu.pipeline_mode<synchronous>, transform_indices = @transform_3, window_bounds = array<i64: 64, 64>}, {pipeline_mode = #tpu.pipeline_mode<synchronous>, transform_indices = @transform_4, window_bounds = array<i64: 1, 64>}, {pipeline_mode = #tpu.pipeline_mode<synchronous>, transform_indices = @transform_5, window_bounds = array<i64: 64, 1>}, {pipeline_mode = #tpu.pipeline_mode<synchronous>, transform_indices = @transform_6, window_bounds = array<i64: 1, 1>}, {transform_indices = @transform_7, window_bounds = array<i64: 1, 632, 1>}]} {
    %c0 = arith.constant 0 : index
    %c0_0 = arith.constant 0 : index
    %0 = vector.load %arg1[%c0, %c0_0] : memref<632x441xf32, #tpu.memory_space<vmem>>, vector<632x441xf32>
    %cst = arith.constant dense<0xFF800000> : vector<632xf32>
    %1 = vector.multi_reduction <maximumf>, %0, %cst [1] : vector<632x441xf32> to vector<632xf32>
    %2 = vector.shape_cast %1 : vector<632xf32> to vector<632x1xf32>
    %3 = vector.broadcast %2 : vector<632x1xf32> to vector<632x441xf32>
    %4 = arith.subf %0, %3 : vector<632x441xf32>
    %5 = math.exp %4 : vector<632x441xf32>
    %6 = arith.truncf %5 : vector<632x441xf32> to vector<632x441xbf16>
    %c0_1 = arith.constant 0 : index
    %c0_2 = arith.constant 0 : index
    %7 = vector.load %arg2[%c0_1, %c0_2] : memref<441x65xbf16, #tpu.memory_space<vmem>>, vector<441x65xbf16>
    %cst_3 = arith.constant dense<0.000000e+00> : vector<632x65xf32>
    %8 = tpu.matmul %6, %7, %cst_3 {dimension_numbers = #tpu.dot_dimension_numbers<[1], [0], [0], [1], [0, 0, 1, 1], [], []>} : vector<632x441xbf16>, vector<441x65xbf16>, vector<632x65xf32> -> vector<632x65xf32>
    %9 = vector.extract_strided_slice %8 {offsets = [0, 64], sizes = [632, 1], strides = [1, 1]} : vector<632x65xf32> to vector<632x1xf32>
    %10 = vector.extract_strided_slice %8 {offsets = [0, 0], sizes = [632, 64], strides = [1, 1]} : vector<632x65xf32> to vector<632x64xf32>
    %11 = tpu.reciprocal %9 : vector<632x1xf32> -> vector<632x1xf32>
    %12 = vector.broadcast %11 : vector<632x1xf32> to vector<632x64xf32>
    %13 = arith.mulf %10, %12 : vector<632x64xf32>
    %c0_4 = arith.constant 0 : index
    %c0_5 = arith.constant 0 : index
    %14 = vector.load %arg3[%c0_4, %c0_5] : memref<1x64xf32, #tpu.memory_space<vmem>>, vector<1x64xf32>
    %15 = vector.broadcast %14 : vector<1x64xf32> to vector<632x64xf32>
    %16 = arith.addf %13, %15 : vector<632x64xf32>
    %cst_6 = arith.constant 0.000000e+00 : f32
    %17 = vector.broadcast %cst_6 : f32 to vector<632x64xf32>
    %18 = arith.maximumf %16, %17 : vector<632x64xf32>
    %c0_7 = arith.constant 0 : index
    %c0_8 = arith.constant 0 : index
    %19 = vector.load %arg4[%c0_7, %c0_8] : memref<64x64xf32, #tpu.memory_space<vmem>>, vector<64x64xf32>
    %cst_9 = arith.constant dense<0.000000e+00> : vector<632x64xf32>
    %20 = tpu.matmul %18, %19, %cst_9 {dimension_numbers = #tpu.dot_dimension_numbers<[1], [0], [0], [1], [0, 0, 1, 1], [], []>} : vector<632x64xf32>, vector<64x64xf32>, vector<632x64xf32> -> vector<632x64xf32>
    %c0_10 = arith.constant 0 : index
    %c0_11 = arith.constant 0 : index
    %21 = vector.load %arg5[%c0_10, %c0_11] : memref<1x64xf32, #tpu.memory_space<vmem>>, vector<1x64xf32>
    %22 = vector.broadcast %21 : vector<1x64xf32> to vector<632x64xf32>
    %23 = arith.addf %20, %22 : vector<632x64xf32>
    %cst_12 = arith.constant 0.000000e+00 : f32
    %24 = vector.broadcast %cst_12 : f32 to vector<632x64xf32>
    %25 = arith.maximumf %23, %24 : vector<632x64xf32>
    %c0_13 = arith.constant 0 : index
    %c0_14 = arith.constant 0 : index
    %26 = vector.load %arg6[%c0_13, %c0_14] : memref<64x1xf32, #tpu.memory_space<vmem>>, vector<64x1xf32>
    %cst_15 = arith.constant dense<0.000000e+00> : vector<632x1xf32>
    %27 = tpu.matmul %25, %26, %cst_15 {dimension_numbers = #tpu.dot_dimension_numbers<[1], [0], [0], [1], [0, 0, 1, 1], [], []>} : vector<632x64xf32>, vector<64x1xf32>, vector<632x1xf32> -> vector<632x1xf32>
    %c0_16 = arith.constant 0 : index
    %c0_17 = arith.constant 0 : index
    %28 = vector.load %arg7[%c0_16, %c0_17] : memref<1x1xf32, #tpu.memory_space<vmem>>, vector<1x1xf32>
    %29 = vector.broadcast %28 : vector<1x1xf32> to vector<632x1xf32>
    %30 = arith.addf %27, %29 : vector<632x1xf32>
    %c0_18 = arith.constant 0 : index
    %c0_19 = arith.constant 0 : index
    %c0_20 = arith.constant 0 : index
    %31 = vector.load %arg8[%c0_18, %c0_19, %c0_20] : memref<1x632x1xf32, #tpu.memory_space<vmem>>, vector<1x632x1xf32>
    %32 = vector.shape_cast %31 : vector<1x632x1xf32> to vector<632x1xf32>
    %33 = vector.shape_cast %30 : vector<632x1xf32> to vector<1x632x1xf32>
    tpu.vector_store %arg8[%c0_18, %c0_19, %c0_20], %33 {strides = array<i32>} : memref<1x632x1xf32, #tpu.memory_space<vmem>>, vector<1x632x1xf32>,
    return
  }
  func.func @transform_0(%arg0: i32) -> (i32, i32) {
    %c0_i32 = arith.constant 0 : i32
    %c0_i32_0 = arith.constant 0 : i32
    return %arg0, %c0_i32 : i32, i32
  }
  func.func @transform_1(%arg0: i32) -> (i32, i32) {
    %c0_i32 = arith.constant 0 : i32
    %c0_i32_0 = arith.constant 0 : i32
    %c0_i32_1 = arith.constant 0 : i32
    return %c0_i32, %c0_i32_0 : i32, i32
  }
  func.func @transform_2(%arg0: i32) -> (i32, i32) {
    %c0_i32 = arith.constant 0 : i32
    %c0_i32_0 = arith.constant 0 : i32
    %c0_i32_1 = arith.constant 0 : i32
    return %c0_i32, %c0_i32_0 : i32, i32
  }
  func.func @transform_3(%arg0: i32) -> (i32, i32) {
    %c0_i32 = arith.constant 0 : i32
    %c0_i32_0 = arith.constant 0 : i32
    %c0_i32_1 = arith.constant 0 : i32
    return %c0_i32, %c0_i32_0 : i32, i32
  }
  func.func @transform_4(%arg0: i32) -> (i32, i32) {
    %c0_i32 = arith.constant 0 : i32
    %c0_i32_0 = arith.constant 0 : i32
    %c0_i32_1 = arith.constant 0 : i32
    return %c0_i32, %c0_i32_0 : i32, i32
  }
  func.func @transform_5(%arg0: i32) -> (i32, i32) {
    %c0_i32 = arith.constant 0 : i32
    %c0_i32_0 = arith.constant 0 : i32
    %c0_i32_1 = arith.constant 0 : i32
    return %c0_i32, %c0_i32_0 : i32, i32
  }
  func.func @transform_6(%arg0: i32) -> (i32, i32) {
    %c0_i32 = arith.constant 0 : i32
    %c0_i32_0 = arith.constant 0 : i32
    %c0_i32_1 = arith.constant 0 : i32
    return %c0_i32, %c0_i32_0 : i32, i32
  }
  func.func @transform_7(%arg0: i32) -> (i32, i32, i32) {
    %c0_i32 = arith.constant 0 : i32
    %c0_i32_0 = arith.constant 0 : i32
    %c0_i32_1 = arith.constant 0 : i32
    return %arg0, %c0_i32, %c0_i32_0 : i32, i32, i32
  }
}

</mosaic_0001>

<llo_original>
// kernel: tpu_custom_call.1
$region0: #{tpu_custom_call.1}
  #allocation0 [shape = 'u32[]', space=smem, size = 0x4, offset = 0x4, fixed_abs, tag = 'smem constant byte address 0x4 - core index']
  #allocation1 [shape = 'u32[144,128]{1,0:T(1,128)}', space=vmem, size = 0x12000, scoped, tag = 'internal scratch']
  #allocation2 [shape = 'f32[1,1]{1,0:T(1,128)S(1)}', space=vmem, size = 0x200, scoped, tag = 'scoped memory for tpu_custom_call.1']
  %s0 = inlined_call_operand.vmem [shape: f32[1250,441], index: 0, kind: input, shape index: {}]
  %s1 = inlined_call_operand.vmem [shape: bf16[441,65], index: 1, kind: input, shape index: {}]
  %s2 = inlined_call_operand.vmem [shape: f32[1,64], index: 2, kind: input, shape index: {}]
  %s3 = inlined_call_operand.vmem [shape: f32[64,64], index: 3, kind: input, shape index: {}]
  %s4 = inlined_call_operand.vmem [shape: f32[1,64], index: 4, kind: input, shape index: {}]
  %s5 = inlined_call_operand.vmem [shape: f32[64,1], index: 5, kind: input, shape index: {}]
  %s6 = inlined_call_operand.<no memory space> [shape: f32[1,1], index: 6, kind: input, shape index: {}]
  %s7 = inlined_call_operand.vmem [shape: f32[2,632,1], index: 7, kind: output, shape index: {}]
  %s8 = sld [smem:[#allocation0]]
  $region61: #{tpu_custom_call.1} parent=0
    _
  %s10 = ssub.s32 1, %s8
  %s11 = scalar_select 0, %s10, %s8
  %v12 = vstv %s6
  %13 = vst [vmem:[#allocation2] sm:$0x1] %v12
  loop: start=0, step=1, limit=4
  $region2: #{tpu_custom_call.1} parent=0 // loop_pre_header
    _
  $region3: #{tpu_custom_call.1} parent=0 // loop_header
    %s15 = sphi 0, %s19
    %p16 = scmp.ge.s32.totalorder %s15, 4
    %s25 = sphi 0, %s27
    %s28 = sphi 0, %s25
    %s29 = sphi 0, %s28
    %s45 = sphi 0, %s29
    %s49 = sphi 0, %s49
    %s51 = sphi 0, %s49
    %s52 = sphi 0, %s51
    %s66 = sphi 0, %s52
    %s70 = sphi 0, %s70
    %s72 = sphi 0, %s70
    %s73 = sphi 0, %s72
    %s87 = sphi 0, %s73
    %s91 = sphi 0, %s91
    %s93 = sphi 0, %s91
    %s94 = sphi 0, %s93
    %s108 = sphi 0, %s94
    %s112 = sphi 0, %s112
    %s114 = sphi 0, %s112
    %s115 = sphi 0, %s114
    %s129 = sphi 0, %s115
    %s133 = sphi 0, %s133
    %s135 = sphi 0, %s133
    %s136 = sphi 0, %s135
    %s150 = sphi 0, %s136
    %s154 = sphi 0, %s154
    %s156 = sphi 0, %s154
    %s157 = sphi 0, %s156
    %s171 = sphi 0, %s157
    %s177 = sphi 0, %s179
    %s180 = sphi 0, %s177
    %s181 = sphi 0, %s180
    %s197 = sphi 0, %s181
  $region4: #{tpu_custom_call.1} parent=0 // loop_header_branch
    %18 = sbr.rel (%p16) target = $region8
  $region5: #{tpu_custom_call.1} parent=0 // loop_body
    %s20 = ssub.s32 %s15, 1
    %s21 = ssub.s32 %s15, 2
    %s22 = sadd.s32 %s15, 1
    %s23 = ssub.s32 %s15, %s22
    %p24 = scmp.eq.s32.totalorder %s23, 0
    %s26 = sadd.s32 %s25, 1
    %s27 = scalar_select %p24, %s25, %s26
    %p30 = pneg %p24
    %p31 = scmp.eq.s32.totalorder %s15, 1
    %p32 = por %p30, %p31
    %p33 = scmp.ne.s32.totalorder %s25, %s28
    %p34 = scmp.eq.s32.totalorder %s15, 0
    %p35 = por %p33, %p34
    %p36 = scmp.ne.s32.totalorder %s25, %s28
    %p37 = scmp.eq.s32.totalorder %s20, 1
    %p38 = por %p36, %p37
    %p39 = scmp.ne.s32.totalorder %s28, %s29
    %p40 = scmp.eq.s32.totalorder %s20, 0
    %p41 = por %p39, %p40
    %p42 = scmp.ne.s32.totalorder %s28, %s29
    %p43 = scmp.eq.s32.totalorder %s21, 1
    %p44 = por %p42, %p43
    %p46 = scmp.ne.s32.totalorder %s29, %s45
    %p47 = scmp.eq.s32.totalorder %s21, 0
    %p48 = por %p46, %p47
    %s50 = sadd.s32 %s49, 1
    %p53 = scmp.eq.s32.totalorder %s15, 1
    %p54 = scmp.ne.s32.totalorder %s49, %s51
    %p55 = scmp.eq.s32.totalorder %s15, 0
    %p56 = por %p54, %p55
    %p57 = scmp.ne.s32.totalorder %s49, %s51
    %p58 = scmp.eq.s32.totalorder %s20, 1
    %p59 = por %p57, %p58
    %p60 = scmp.ne.s32.totalorder %s51, %s52
    %p61 = scmp.eq.s32.totalorder %s20, 0
    %p62 = por %p60, %p61
    %p63 = scmp.ne.s32.totalorder %s51, %s52
    %p64 = scmp.eq.s32.totalorder %s21, 1
    %p65 = por %p63, %p64
    %p67 = scmp.ne.s32.totalorder %s52, %s66
    %p68 = scmp.eq.s32.totalorder %s21, 0
    %p69 = por %p67, %p68
    %s71 = sadd.s32 %s70, 1
    %p74 = scmp.eq.s32.totalorder %s15, 1
    %p75 = scmp.ne.s32.totalorder %s70, %s72
    %p76 = scmp.eq.s32.totalorder %s15, 0
    %p77 = por %p75, %p76
    %p78 = scmp.ne.s32.totalorder %s70, %s72
    %p79 = scmp.eq.s32.totalorder %s20, 1
    %p80 = por %p78, %p79
    %p81 = scmp.ne.s32.totalorder %s72, %s73
    %p82 = scmp.eq.s32.totalorder %s20, 0
    %p83 = por %p81, %p82
    %p84 = scmp.ne.s32.totalorder %s72, %s73
    %p85 = scmp.eq.s32.totalorder %s21, 1
    %p86 = por %p84, %p85
    %p88 = scmp.ne.s32.totalorder %s73, %s87
    %p89 = scmp.eq.s32.totalorder %s21, 0
    %p90 = por %p88, %p89
    %s92 = sadd.s32 %s91, 1
    %p95 = scmp.eq.s32.totalorder %s15, 1
    %p96 = scmp.ne.s32.totalorder %s91, %s93
    %p97 = scmp.eq.s32.totalorder %s15, 0
    %p98 = por %p96, %p97
    %p99 = scmp.ne.s32.totalorder %s91, %s93
    %p100 = scmp.eq.s32.totalorder %s20, 1
    %p101 = por %p99, %p100
    %p102 = scmp.ne.s32.totalorder %s93, %s94
    %p103 = scmp.eq.s32.totalorder %s20, 0
    %p104 = por %p102, %p103
    %p105 = scmp.ne.s32.totalorder %s93, %s94
    %p106 = scmp.eq.s32.totalorder %s21, 1
    %p107 = por %p105, %p106
    %p109 = scmp.ne.s32.totalorder %s94, %s108
    %p110 = scmp.eq.s32.totalorder %s21, 0
    %p111 = por %p109, %p110
    %s113 = sadd.s32 %s112, 1
    %p116 = scmp.eq.s32.totalorder %s15, 1
    %p117 = scmp.ne.s32.totalorder %s112, %s114
    %p118 = scmp.eq.s32.totalorder %s15, 0
    %p119 = por %p117, %p118
    %p120 = scmp.ne.s32.totalorder %s112, %s114
    %p121 = scmp.eq.s32.totalorder %s20, 1
    %p122 = por %p120, %p121
    %p123 = scmp.ne.s32.totalorder %s114, %s115
    %p124 = scmp.eq.s32.totalorder %s20, 0
    %p125 = por %p123, %p124
    %p126 = scmp.ne.s32.totalorder %s114, %s115
    %p127 = scmp.eq.s32.totalorder %s21, 1
    %p128 = por %p126, %p127
    %p130 = scmp.ne.s32.totalorder %s115, %s129
    %p131 = scmp.eq.s32.totalorder %s21, 0
    %p132 = por %p130, %p131
    %s134 = sadd.s32 %s133, 1
    %p137 = scmp.eq.s32.totalorder %s15, 1
    %p138 = scmp.ne.s32.totalorder %s133, %s135
    %p139 = scmp.eq.s32.totalorder %s15, 0
    %p140 = por %p138, %p139
    %p141 = scmp.ne.s32.totalorder %s133, %s135
    %p142 = scmp.eq.s32.totalorder %s20, 1
    %p143 = por %p141, %p142
    %p144 = scmp.ne.s32.totalorder %s135, %s136
    %p145 = scmp.eq.s32.totalorder %s20, 0
    %p146 = por %p144, %p145
    %p147 = scmp.ne.s32.totalorder %s135, %s136
    %p148 = scmp.eq.s32.totalorder %s21, 1
    %p149 = por %p147, %p148
    %p151 = scmp.ne.s32.totalorder %s136, %s150
    %p152 = scmp.eq.s32.totalorder %s21, 0
    %p153 = por %p151, %p152
    %s155 = sadd.s32 %s154, 1
    %p158 = scmp.eq.s32.totalorder %s15, 1
    %p159 = scmp.ne.s32.totalorder %s154, %s156
    %p160 = scmp.eq.s32.totalorder %s15, 0
    %p161 = por %p159, %p160
    %p162 = scmp.ne.s32.totalorder %s154, %s156
    %p163 = scmp.eq.s32.totalorder %s20, 1
    %p164 = por %p162, %p163
    %p165 = scmp.ne.s32.totalorder %s156, %s157
    %p166 = scmp.eq.s32.totalorder %s20, 0
    %p167 = por %p165, %p166
    %p168 = scmp.ne.s32.totalorder %s156, %s157
    %p169 = scmp.eq.s32.totalorder %s21, 1
    %p170 = por %p168, %p169
    %p172 = scmp.ne.s32.totalorder %s157, %s171
    %p173 = scmp.eq.s32.totalorder %s21, 0
    %p174 = por %p172, %p173
    %s175 = ssub.s32 %s15, %s22
    %p176 = scmp.eq.s32.totalorder %s175, 0
    %s178 = sadd.s32 %s177, 1
    %s179 = scalar_select %p176, %s177, %s178
    %p182 = pneg %p176
    %p183 = scmp.eq.s32.totalorder %s15, 1
    %p184 = por %p182, %p183
    %p185 = scmp.ne.s32.totalorder %s177, %s180
    %p186 = scmp.eq.s32.totalorder %s15, 0
    %p187 = por %p185, %p186
    %p188 = scmp.ne.s32.totalorder %s177, %s180
    %p189 = scmp.eq.s32.totalorder %s20, 1
    %p190 = por %p188, %p189
    %p191 = scmp.ne.s32.totalorder %s180, %s181
    %p192 = scmp.eq.s32.totalorder %s20, 0
    %p193 = por %p191, %p192
    %p194 = scmp.ne.s32.totalorder %s180, %s181
    %p195 = scmp.eq.s32.totalorder %s21, 1
    %p196 = por %p194, %p195
    %p198 = scmp.ne.s32.totalorder %s181, %s197
    %p199 = scmp.eq.s32.totalorder %s21, 0
    %p200 = por %p198, %p199
    %p201 = scmp.le.s32.totalorder 1, %s15
    %p202 = scmp.lt.s32.totalorder %s15, 3
    %p203 = pnand %p201, %p202
    %p204 = pneg %p203
    // Predicated region
    $region9: #{tpu_custom_call.1} parent=5 // pred_check
      _
    $region10: #{tpu_custom_call.1} parent=5 // pred_check_branch
      %206 = sbr.rel (%p203) target = $region12
    $region11: #{tpu_custom_call.1} parent=5 // pred_region
      %s207 = ssub.s32 %s15, 1
      // Predicated region
      $region13: #{tpu_custom_call.1} parent=11 // pred_check
        %p208 = pneg %p62
      $region14: #{tpu_custom_call.1} parent=11 // pred_check_branch
        %210 = sbr.rel (%p208) target = $region16
      $region15: #{tpu_custom_call.1} parent=11 // pred_region
        _
      $region16: #{tpu_custom_call.1} parent=11 // pred_fallthru
        _
      // Predicated region
      $region17: #{tpu_custom_call.1} parent=11 // pred_check
        %p211 = pneg %p83
      $region18: #{tpu_custom_call.1} parent=11 // pred_check_branch
        %213 = sbr.rel (%p211) target = $region20
      $region19: #{tpu_custom_call.1} parent=11 // pred_region
        _
      $region20: #{tpu_custom_call.1} parent=11 // pred_fallthru
        _
      // Predicated region
      $region21: #{tpu_custom_call.1} parent=11 // pred_check
        %p214 = pneg %p104
      $region22: #{tpu_custom_call.1} parent=11 // pred_check_branch
        %216 = sbr.rel (%p214) target = $region24
      $region23: #{tpu_custom_call.1} parent=11 // pred_region
        _
      $region24: #{tpu_custom_call.1} parent=11 // pred_fallthru
        _
      // Predicated region
      $region25: #{tpu_custom_call.1} parent=11 // pred_check
        %p217 = pneg %p125
      $region26: #{tpu_custom_call.1} parent=11 // pred_check_branch
        %219 = sbr.rel (%p217) target = $region28
      $region27: #{tpu_custom_call.1} parent=11 // pred_region
        _
      $region28: #{tpu_custom_call.1} parent=11 // pred_fallthru
        _
      // Predicated region
      $region29: #{tpu_custom_call.1} parent=11 // pred_check
        %p220 = pneg %p146
      $region30: #{tpu_custom_call.1} parent=11 // pred_check_branch
        %222 = sbr.rel (%p220) target = $region32
      $region31: #{tpu_custom_call.1} parent=11 // pred_region
        _
      $region32: #{tpu_custom_call.1} parent=11 // pred_fallthru
        _
      // Predicated region
      $region33: #{tpu_custom_call.1} parent=11 // pred_check
        %p223 = pneg %p167
      $region34: #{tpu_custom_call.1} parent=11 // pred_check_branch
        %225 = sbr.rel (%p223) target = $region36
      $region35: #{tpu_custom_call.1} parent=11 // pred_region
        _
      $region36: #{tpu_custom_call.1} parent=11 // pred_fallthru
        _
    $region12: #{tpu_custom_call.1} parent=5 // pred_fallthru
      _
    %p226 = scmp.lt.s32.totalorder %s15, 2
    // Predicated region
    $region37: #{tpu_custom_call.1} parent=5 // pred_check
      %p227 = pneg %p226
    $region38: #{tpu_custom_call.1} parent=5 // pred_check_branch
      %229 = sbr.rel (%p227) target = $region40
    $region39: #{tpu_custom_call.1} parent=5 // pred_region
      // Predicated region
      $region41: #{tpu_custom_call.1} parent=39 // pred_check
        %p230 = pneg %p35
      $region42: #{tpu_custom_call.1} parent=39 // pred_check_branch
        %232 = sbr.rel (%p230) target = $region44
      $region43: #{tpu_custom_call.1} parent=39 // pred_region
        %s233 = smul.u32 79, %s15
        %s234 = ssub.s32 157, %s233
        %p235 = scmp.lt.s32.totalorder %s234, 79
        %s236 = scalar_select %p235, %s234, 79
        %s237 = smul.u32 128, %s236
        %s238 = smul.u32 %s237, 4
        %p239 = scmp.lt.s32.totalorder %s233, 156
        %s240 = scalar_select %p239, %s233, 156
        %s241 = smul.addr %s240, 4
        %s242 = smul.addr %s241, 8
        %s243 = scalar_lea.vmem %s0, %s242
        %s244 = smul.u32 79, %s15
        %s245 = ssub.s32 157, %s244
        %p246 = scmp.lt.s32.totalorder %s245, 79
        %s247 = scalar_select %p246, %s245, 79
        %s248 = smul.u32 128, %s247
        %s249 = smul.u32 %s248, 4
      $region44: #{tpu_custom_call.1} parent=39 // pred_fallthru
        _
    $region40: #{tpu_custom_call.1} parent=5 // pred_fallthru
      _
    %p250 = scmp.le.s32.totalorder 1, %s15
    %p251 = scmp.lt.s32.totalorder %s15, 3
    %p252 = pnand %p250, %p251
    %p253 = pneg %p252
    // Predicated region
    $region45: #{tpu_custom_call.1} parent=5 // pred_check
      _
    $region46: #{tpu_custom_call.1} parent=5 // pred_check_branch
      %255 = sbr.rel (%p252) target = $region48
    $region47: #{tpu_custom_call.1} parent=5 // pred_region
      %s256 = ssub.s32 %s15, 1
      %s257 = smul.u32 79, %s20
      %s258 = ssub.s32 157, %s257
      %p259 = scmp.lt.s32.totalorder %s258, 79
      %s260 = scalar_select %p259, %s258, 79
      %s261 = smul.u32 128, %s260
      %s262 = smul.u32 %s261, 4
      %p263 = scmp.lt.s32.totalorder %s257, 156
      %s264 = scalar_select %p263, %s257, 156
      %s265 = smul.addr %s264, 4
      %s266 = smul.addr %s265, 8
      %s267 = scalar_lea.vmem %s0, %s266
      %p268 = pneg %p41
      %p269 = pneg %p38
      %p270 = pneg %p62
      %p271 = pneg %p59
      %p272 = pneg %p83
      %p273 = pneg %p80
      %p274 = pneg %p104
      %p275 = pneg %p101
      %p276 = pneg %p125
      %p277 = pneg %p122
      %p278 = pneg %p146
      %p279 = pneg %p143
      %p280 = pneg %p167
      %p281 = pneg %p164
      %p282 = pneg %p193
      %p283 = pneg %p190
      %p284 = scmp.lt.s32.totalorder %s20, 1
      %s285 = scalar_select %p284, %s20, 1
      %s286 = smul.addr %s285, 79
      %s287 = smul.addr %s286, 8
      %s288 = scalar_lea.vmem %s7, %s287
      %s289 = smul.u32 79, %s20
      %s290 = ssub.s32 157, %s289
      %p291 = scmp.lt.s32.totalorder %s290, 79
      %s292 = scalar_select %p291, %s290, 79
      %s293 = smul.u32 128, %s292
      %s294 = smul.u32 %s293, 4
      %p295 = scmp.lt.s32.totalorder %s289, 156
      %s296 = scalar_select %p295, %s289, 156
      %s297 = smul.addr %s296, 4
      %s298 = smul.addr %s297, 8
      %s299 = scalar_lea.vmem %s0, %s298
      %s300 = smul.u32 79, %s20
      %s301 = ssub.s32 157, %s300
      %p302 = scmp.lt.s32.totalorder %s301, 79
      %s303 = scalar_select %p302, %s301, 79
      %s304 = smul.u32 128, %s303
      %s305 = smul.u32 %s304, 4
      %p306 = scmp.lt.s32.totalorder %s20, 1
      %s307 = scalar_select %p306, %s20, 1
      %s308 = smul.addr %s307, 79
      %s309 = smul.addr %s308, 8
      %s310 = scalar_lea.vmem %s7, %s309
      %v312 = vld [vmem:[%s299] sm:$0xff]
      %v313 = vld [vmem:[%s299 + $0x8] sm:$0xff]
      %v314 = vld [vmem:[%s299 + $0x10] sm:$0xff]
      %v315 = vld [vmem:[%s299 + $0x18] sm:$0xff]
      %v316 = vld [vmem:[%s299 + $0x20] sm:$0xff]
      %v317 = vld [vmem:[%s299 + $0x28] sm:$0xff]
      %v318 = vld [vmem:[%s299 + $0x30] sm:$0xff]
      %v319 = vld [vmem:[%s299 + $0x38] sm:$0xff]
      %v320 = vld [vmem:[%s299 + $0x40] sm:$0xff]
      %v321 = vld [vmem:[%s299 + $0x48] sm:$0xff]
      %v322 = vld [vmem:[%s299 + $0x50] sm:$0xff]
      %v323 = vld [vmem:[%s299 + $0x58] sm:$0xff]
      %v324 = vld [vmem:[%s299 + $0x60] sm:$0xff]
      %v325 = vld [vmem:[%s299 + $0x68] sm:$0xff]
      %v326 = vld [vmem:[%s299 + $0x70] sm:$0xff]
      %v327 = vld [vmem:[%s299 + $0x78] sm:$0xff]
      %v328 = vld [vmem:[%s299 + $0x80] sm:$0xff]
      %v329 = vld [vmem:[%s299 + $0x88] sm:$0xff]
      %v330 = vld [vmem:[%s299 + $0x90] sm:$0xff]
      %v331 = vld [vmem:[%s299 + $0x98] sm:$0xff]
      %v332 = vld [vmem:[%s299 + $0xa0] sm:$0xff]
      %v333 = vld [vmem:[%s299 + $0xa8] sm:$0xff]
      %v334 = vld [vmem:[%s299 + $0xb0] sm:$0xff]
      %v335 = vld [vmem:[%s299 + $0xb8] sm:$0xff]
      %v336 = vld [vmem:[%s299 + $0xc0] sm:$0xff]
      %v337 = vld [vmem:[%s299 + $0xc8] sm:$0xff]
      %v338 = vld [vmem:[%s299 + $0xd0] sm:$0xff]
      %v339 = vld [vmem:[%s299 + $0xd8] sm:$0xff]
      %v340 = vld [vmem:[%s299 + $0xe0] sm:$0xff]
      %v341 = vld [vmem:[%s299 + $0xe8] sm:$0xff]
      %v342 = vld [vmem:[%s299 + $0xf0] sm:$0xff]
      %v343 = vld [vmem:[%s299 + $0xf8] sm:$0xff]
      %v344 = vld [vmem:[%s299 + $0x100] sm:$0xff]
      %v345 = vld [vmem:[%s299 + $0x108] sm:$0xff]
      %v346 = vld [vmem:[%s299 + $0x110] sm:$0xff]
      %v347 = vld [vmem:[%s299 + $0x118] sm:$0xff]
      %v348 = vld [vmem:[%s299 + $0x120] sm:$0xff]
      %v349 = vld [vmem:[%s299 + $0x128] sm:$0xff]
      %v350 = vld [vmem:[%s299 + $0x130] sm:$0xff]
      %v351 = vld [vmem:[%s299 + $0x138] sm:$0xff]
      %v352 = vld [vmem:[%s299 + $0x140] sm:$0xff]
      %v353 = vld [vmem:[%s299 + $0x148] sm:$0xff]
      %v354 = vld [vmem:[%s299 + $0x150] sm:$0xff]
      %v355 = vld [vmem:[%s299 + $0x158] sm:$0xff]
      %v356 = vld [vmem:[%s299 + $0x160] sm:$0xff]
      %v357 = vld [vmem:[%s299 + $0x168] sm:$0xff]
      %v358 = vld [vmem:[%s299 + $0x170] sm:$0xff]
      %v359 = vld [vmem:[%s299 + $0x178] sm:$0xff]
      %v360 = vld [vmem:[%s299 + $0x180] sm:$0xff]
      %v361 = vld [vmem:[%s299 + $0x188] sm:$0xff]
      %v362 = vld [vmem:[%s299 + $0x190] sm:$0xff]
      %v363 = vld [vmem:[%s299 + $0x198] sm:$0xff]
      %v364 = vld [vmem:[%s299 + $0x1a0] sm:$0xff]
      %v365 = vld [vmem:[%s299 + $0x1a8] sm:$0xff]
      %v366 = vld [vmem:[%s299 + $0x1b0] sm:$0xff]
      %v367 = vld [vmem:[%s299 + $0x1b8] sm:$0xff]
      %v368 = vld [vmem:[%s299 + $0x1c0] sm:$0xff]
      %v369 = vld [vmem:[%s299 + $0x1c8] sm:$0xff]
      %v370 = vld [vmem:[%s299 + $0x1d0] sm:$0xff]
      %v371 = vld [vmem:[%s299 + $0x1d8] sm:$0xff]
      %v372 = vld [vmem:[%s299 + $0x1e0] sm:$0xff]
      %v373 = vld [vmem:[%s299 + $0x1e8] sm:$0xff]
      %v374 = vld [vmem:[%s299 + $0x1f0] sm:$0xff]
      %v375 = vld [vmem:[%s299 + $0x1f8] sm:$0xff]
      %v376 = vld [vmem:[%s299 + $0x200] sm:$0xff]
      %v377 = vld [vmem:[%s299 + $0x208] sm:$0xff]
      %v378 = vld [vmem:[%s299 + $0x210] sm:$0xff]
      %v379 = vld [vmem:[%s299 + $0x218] sm:$0xff]
      %v380 = vld [vmem:[%s299 + $0x220] sm:$0xff]
      %v381 = vld [vmem:[%s299 + $0x228] sm:$0xff]
      %v382 = vld [vmem:[%s299 + $0x230] sm:$0xff]
      %v383 = vld [vmem:[%s299 + $0x238] sm:$0xff]
      %v384 = vld [vmem:[%s299 + $0x240] sm:$0xff]
      %v385 = vld [vmem:[%s299 + $0x248] sm:$0xff]
      %v386 = vld [vmem:[%s299 + $0x250] sm:$0xff]
      %v387 = vld [vmem:[%s299 + $0x258] sm:$0xff]
      %v388 = vld [vmem:[%s299 + $0x260] sm:$0xff]
      %v389 = vld [vmem:[%s299 + $0x268] sm:$0xff]
      %v390 = vld [vmem:[%s299 + $0x270] sm:$0xff]
      %v391 = vld [vmem:[%s299 + $0x278] sm:$0xff]
      %v392 = vld [vmem:[%s299 + $0x280] sm:$0xff]
      %v393 = vld [vmem:[%s299 + $0x288] sm:$0xff]
      %v394 = vld [vmem:[%s299 + $0x290] sm:$0xff]
      %v395 = vld [vmem:[%s299 + $0x298] sm:$0xff]
      %v396 = vld [vmem:[%s299 + $0x2a0] sm:$0xff]
      %v397 = vld [vmem:[%s299 + $0x2a8] sm:$0xff]
      %v398 = vld [vmem:[%s299 + $0x2b0] sm:$0xff]
      %v399 = vld [vmem:[%s299 + $0x2b8] sm:$0xff]
      %v400 = vld [vmem:[%s299 + $0x2c0] sm:$0xff]
      %v401 = vld [vmem:[%s299 + $0x2c8] sm:$0xff]
      %v402 = vld [vmem:[%s299 + $0x2d0] sm:$0xff]
      %v403 = vld [vmem:[%s299 + $0x2d8] sm:$0xff]
      %v404 = vld [vmem:[%s299 + $0x2e0] sm:$0xff]
      %v405 = vld [vmem:[%s299 + $0x2e8] sm:$0xff]
      %v406 = vld [vmem:[%s299 + $0x2f0] sm:$0xff]
      %v407 = vld [vmem:[%s299 + $0x2f8] sm:$0xff]
      %v408 = vld [vmem:[%s299 + $0x300] sm:$0xff]
      %v409 = vld [vmem:[%s299 + $0x308] sm:$0xff]
      %v410 = vld [vmem:[%s299 + $0x310] sm:$0xff]
      %v411 = vld [vmem:[%s299 + $0x318] sm:$0xff]
      %v412 = vld [vmem:[%s299 + $0x320] sm:$0xff]
      %v413 = vld [vmem:[%s299 + $0x328] sm:$0xff]
      %v414 = vld [vmem:[%s299 + $0x330] sm:$0xff]
      %v415 = vld [vmem:[%s299 + $0x338] sm:$0xff]
      %v416 = vld [vmem:[%s299 + $0x340] sm:$0xff]
      %v417 = vld [vmem:[%s299 + $0x348] sm:$0xff]
      %v418 = vld [vmem:[%s299 + $0x350] sm:$0xff]
      %v419 = vld [vmem:[%s299 + $0x358] sm:$0xff]
      %v420 = vld [vmem:[%s299 + $0x360] sm:$0xff]
      %v421 = vld [vmem:[%s299 + $0x368] sm:$0xff]
      %v422 = vld [vmem:[%s299 + $0x370] sm:$0xff]
      %v423 = vld [vmem:[%s299 + $0x378] sm:$0xff]
      %v424 = vld [vmem:[%s299 + $0x380] sm:$0xff]
      %v425 = vld [vmem:[%s299 + $0x388] sm:$0xff]
      %v426 = vld [vmem:[%s299 + $0x390] sm:$0xff]
      %v427 = vld [vmem:[%s299 + $0x398] sm:$0xff]
      %v428 = vld [vmem:[%s299 + $0x3a0] sm:$0xff]
      %v429 = vld [vmem:[%s299 + $0x3a8] sm:$0xff]
      %v430 = vld [vmem:[%s299 + $0x3b0] sm:$0xff]
      %v431 = vld [vmem:[%s299 + $0x3b8] sm:$0xff]
      %v432 = vld [vmem:[%s299 + $0x3c0] sm:$0xff]
      %v433 = vld [vmem:[%s299 + $0x3c8] sm:$0xff]
      %v434 = vld [vmem:[%s299 + $0x3d0] sm:$0xff]
      %v435 = vld [vmem:[%s299 + $0x3d8] sm:$0xff]
      %v436 = vld [vmem:[%s299 + $0x3e0] sm:$0xff]
      %v437 = vld [vmem:[%s299 + $0x3e8] sm:$0xff]
      %v438 = vld [vmem:[%s299 + $0x3f0] sm:$0xff]
      %v439 = vld [vmem:[%s299 + $0x3f8] sm:$0xff]
      %v440 = vld [vmem:[%s299 + $0x400] sm:$0xff]
      %v441 = vld [vmem:[%s299 + $0x408] sm:$0xff]
      %v442 = vld [vmem:[%s299 + $0x410] sm:$0xff]
      %v443 = vld [vmem:[%s299 + $0x418] sm:$0xff]
      %v444 = vld [vmem:[%s299 + $0x420] sm:$0xff]
      %v445 = vld [vmem:[%s299 + $0x428] sm:$0xff]
      %v446 = vld [vmem:[%s299 + $0x430] sm:$0xff]
      %v447 = vld [vmem:[%s299 + $0x438] sm:$0xff]
      %v448 = vld [vmem:[%s299 + $0x440] sm:$0xff]
      %v449 = vld [vmem:[%s299 + $0x448] sm:$0xff]
      %v450 = vld [vmem:[%s299 + $0x450] sm:$0xff]
      %v451 = vld [vmem:[%s299 + $0x458] sm:$0xff]
      %v452 = vld [vmem:[%s299 + $0x460] sm:$0xff]
      %v453 = vld [vmem:[%s299 + $0x468] sm:$0xff]
      %v454 = vld [vmem:[%s299 + $0x470] sm:$0xff]
      %v455 = vld [vmem:[%s299 + $0x478] sm:$0xff]
      %v456 = vld [vmem:[%s299 + $0x480] sm:$0xff]
      %v457 = vld [vmem:[%s299 + $0x488] sm:$0xff]
      %v458 = vld [vmem:[%s299 + $0x490] sm:$0xff]
      %v459 = vld [vmem:[%s299 + $0x498] sm:$0xff]
      %v460 = vld [vmem:[%s299 + $0x4a0] sm:$0xff]
      %v461 = vld [vmem:[%s299 + $0x4a8] sm:$0xff]
      %v462 = vld [vmem:[%s299 + $0x4b0] sm:$0xff]
      %v463 = vld [vmem:[%s299 + $0x4b8] sm:$0xff]
      %v464 = vld [vmem:[%s299 + $0x4c0] sm:$0xff]
      %v465 = vld [vmem:[%s299 + $0x4c8] sm:$0xff]
      %v466 = vld [vmem:[%s299 + $0x4d0] sm:$0xff]
      %v467 = vld [vmem:[%s299 + $0x4d8] sm:$0xff]
      %v468 = vld [vmem:[%s299 + $0x4e0] sm:$0xff]
      %v469 = vld [vmem:[%s299 + $0x4e8] sm:$0xff]
      %v470 = vld [vmem:[%s299 + $0x4f0] sm:$0xff]
      %v471 = vld [vmem:[%s299 + $0x4f8] sm:$0xff]
      %v472 = vld [vmem:[%s299 + $0x500] sm:$0xff]
      %v473 = vld [vmem:[%s299 + $0x508] sm:$0xff]
      %v474 = vld [vmem:[%s299 + $0x510] sm:$0xff]
      %v475 = vld [vmem:[%s299 + $0x518] sm:$0xff]
      %v476 = vld [vmem:[%s299 + $0x520] sm:$0xff]
      %v477 = vld [vmem:[%s299 + $0x528] sm:$0xff]
      %v478 = vld [vmem:[%s299 + $0x530] sm:$0xff]
      %v479 = vld [vmem:[%s299 + $0x538] sm:$0xff]
      %v480 = vld [vmem:[%s299 + $0x540] sm:$0xff]
      %v481 = vld [vmem:[%s299 + $0x548] sm:$0xff]
      %v482 = vld [vmem:[%s299 + $0x550] sm:$0xff]
      %v483 = vld [vmem:[%s299 + $0x558] sm:$0xff]
      %v484 = vld [vmem:[%s299 + $0x560] sm:$0xff]
      %v485 = vld [vmem:[%s299 + $0x568] sm:$0xff]
      %v486 = vld [vmem:[%s299 + $0x570] sm:$0xff]
      %v487 = vld [vmem:[%s299 + $0x578] sm:$0xff]
      %v488 = vld [vmem:[%s299 + $0x580] sm:$0xff]
      %v489 = vld [vmem:[%s299 + $0x588] sm:$0xff]
      %v490 = vld [vmem:[%s299 + $0x590] sm:$0xff]
      %v491 = vld [vmem:[%s299 + $0x598] sm:$0xff]
      %v492 = vld [vmem:[%s299 + $0x5a0] sm:$0xff]
      %v493 = vld [vmem:[%s299 + $0x5a8] sm:$0xff]
      %v494 = vld [vmem:[%s299 + $0x5b0] sm:$0xff]
      %v495 = vld [vmem:[%s299 + $0x5b8] sm:$0xff]
      %v496 = vld [vmem:[%s299 + $0x5c0] sm:$0xff]
      %v497 = vld [vmem:[%s299 + $0x5c8] sm:$0xff]
      %v498 = vld [vmem:[%s299 + $0x5d0] sm:$0xff]
      %v499 = vld [vmem:[%s299 + $0x5d8] sm:$0xff]
      %v500 = vld [vmem:[%s299 + $0x5e0] sm:$0xff]
      %v501 = vld [vmem:[%s299 + $0x5e8] sm:$0xff]
      %v502 = vld [vmem:[%s299 + $0x5f0] sm:$0xff]
      %v503 = vld [vmem:[%s299 + $0x5f8] sm:$0xff]
      %v504 = vld [vmem:[%s299 + $0x600] sm:$0xff]
      %v505 = vld [vmem:[%s299 + $0x608] sm:$0xff]
      %v506 = vld [vmem:[%s299 + $0x610] sm:$0xff]
      %v507 = vld [vmem:[%s299 + $0x618] sm:$0xff]
      %v508 = vld [vmem:[%s299 + $0x620] sm:$0xff]
      %v509 = vld [vmem:[%s299 + $0x628] sm:$0xff]
      %v510 = vld [vmem:[%s299 + $0x630] sm:$0xff]
      %v511 = vld [vmem:[%s299 + $0x638] sm:$0xff]
      %v512 = vld [vmem:[%s299 + $0x640] sm:$0xff]
      %v513 = vld [vmem:[%s299 + $0x648] sm:$0xff]
      %v514 = vld [vmem:[%s299 + $0x650] sm:$0xff]
      %v515 = vld [vmem:[%s299 + $0x658] sm:$0xff]
      %v516 = vld [vmem:[%s299 + $0x660] sm:$0xff]
      %v517 = vld [vmem:[%s299 + $0x668] sm:$0xff]
      %v518 = vld [vmem:[%s299 + $0x670] sm:$0xff]
      %v519 = vld [vmem:[%s299 + $0x678] sm:$0xff]
      %v520 = vld [vmem:[%s299 + $0x680] sm:$0xff]
      %v521 = vld [vmem:[%s299 + $0x688] sm:$0xff]
      %v522 = vld [vmem:[%s299 + $0x690] sm:$0xff]
      %v523 = vld [vmem:[%s299 + $0x698] sm:$0xff]
      %v524 = vld [vmem:[%s299 + $0x6a0] sm:$0xff]
      %v525 = vld [vmem:[%s299 + $0x6a8] sm:$0xff]
      %v526 = vld [vmem:[%s299 + $0x6b0] sm:$0xff]
      %v527 = vld [vmem:[%s299 + $0x6b8] sm:$0xff]
      %v528 = vld [vmem:[%s299 + $0x6c0] sm:$0xff]
      %v529 = vld [vmem:[%s299 + $0x6c8] sm:$0xff]
      %v530 = vld [vmem:[%s299 + $0x6d0] sm:$0xff]
      %v531 = vld [vmem:[%s299 + $0x6d8] sm:$0xff]
      %v532 = vld [vmem:[%s299 + $0x6e0] sm:$0xff]
      %v533 = vld [vmem:[%s299 + $0x6e8] sm:$0xff]
      %v534 = vld [vmem:[%s299 + $0x6f0] sm:$0xff]
      %v535 = vld [vmem:[%s299 + $0x6f8] sm:$0xff]
      %v536 = vld [vmem:[%s299 + $0x700] sm:$0xff]
      %v537 = vld [vmem:[%s299 + $0x708] sm:$0xff]
      %v538 = vld [vmem:[%s299 + $0x710] sm:$0xff]
      %v539 = vld [vmem:[%s299 + $0x718] sm:$0xff]
      %v540 = vld [vmem:[%s299 + $0x720] sm:$0xff]
      %v541 = vld [vmem:[%s299 + $0x728] sm:$0xff]
      %v542 = vld [vmem:[%s299 + $0x730] sm:$0xff]
      %v543 = vld [vmem:[%s299 + $0x738] sm:$0xff]
      %v544 = vld [vmem:[%s299 + $0x740] sm:$0xff]
      %v545 = vld [vmem:[%s299 + $0x748] sm:$0xff]
      %v546 = vld [vmem:[%s299 + $0x750] sm:$0xff]
      %v547 = vld [vmem:[%s299 + $0x758] sm:$0xff]
      %v548 = vld [vmem:[%s299 + $0x760] sm:$0xff]
      %v549 = vld [vmem:[%s299 + $0x768] sm:$0xff]
      %v550 = vld [vmem:[%s299 + $0x770] sm:$0xff]
      %v551 = vld [vmem:[%s299 + $0x778] sm:$0xff]
      %v552 = vld [vmem:[%s299 + $0x780] sm:$0xff]
      %v553 = vld [vmem:[%s299 + $0x788] sm:$0xff]
      %v554 = vld [vmem:[%s299 + $0x790] sm:$0xff]
      %v555 = vld [vmem:[%s299 + $0x798] sm:$0xff]
      %v556 = vld [vmem:[%s299 + $0x7a0] sm:$0xff]
      %v557 = vld [vmem:[%s299 + $0x7a8] sm:$0xff]
      %v558 = vld [vmem:[%s299 + $0x7b0] sm:$0xff]
      %v559 = vld [vmem:[%s299 + $0x7b8] sm:$0xff]
      %v560 = vld [vmem:[%s299 + $0x7c0] sm:$0xff]
      %v561 = vld [vmem:[%s299 + $0x7c8] sm:$0xff]
      %v562 = vld [vmem:[%s299 + $0x7d0] sm:$0xff]
      %v563 = vld [vmem:[%s299 + $0x7d8] sm:$0xff]
      %v564 = vld [vmem:[%s299 + $0x7e0] sm:$0xff]
      %v565 = vld [vmem:[%s299 + $0x7e8] sm:$0xff]
      %v566 = vld [vmem:[%s299 + $0x7f0] sm:$0xff]
      %v567 = vld [vmem:[%s299 + $0x7f8] sm:$0xff]
      %v568 = vld [vmem:[%s299 + $0x800] sm:$0xff]
      %v569 = vld [vmem:[%s299 + $0x808] sm:$0xff]
      %v570 = vld [vmem:[%s299 + $0x810] sm:$0xff]
      %v571 = vld [vmem:[%s299 + $0x818] sm:$0xff]
      %v572 = vld [vmem:[%s299 + $0x820] sm:$0xff]
      %v573 = vld [vmem:[%s299 + $0x828] sm:$0xff]
      %v574 = vld [vmem:[%s299 + $0x830] sm:$0xff]
      %v575 = vld [vmem:[%s299 + $0x838] sm:$0xff]
      %v576 = vld [vmem:[%s299 + $0x840] sm:$0xff]
      %v577 = vld [vmem:[%s299 + $0x848] sm:$0xff]
      %v578 = vld [vmem:[%s299 + $0x850] sm:$0xff]
      %v579 = vld [vmem:[%s299 + $0x858] sm:$0xff]
      %v580 = vld [vmem:[%s299 + $0x860] sm:$0xff]
      %v581 = vld [vmem:[%s299 + $0x868] sm:$0xff]
      %v582 = vld [vmem:[%s299 + $0x870] sm:$0xff]
      %v583 = vld [vmem:[%s299 + $0x878] sm:$0xff]
      %v584 = vld [vmem:[%s299 + $0x880] sm:$0xff]
      %v585 = vld [vmem:[%s299 + $0x888] sm:$0xff]
      %v586 = vld [vmem:[%s299 + $0x890] sm:$0xff]
      %v587 = vld [vmem:[%s299 + $0x898] sm:$0xff]
      %v588 = vld [vmem:[%s299 + $0x8a0] sm:$0xff]
      %v589 = vld [vmem:[%s299 + $0x8a8] sm:$0xff]
      %v590 = vld [vmem:[%s299 + $0x8b0] sm:$0xff]
      %v591 = vld [vmem:[%s299 + $0x8b8] sm:$0xff]
      %v592 = vld [vmem:[%s299 + $0x8c0] sm:$0xff]
      %v593 = vld [vmem:[%s299 + $0x8c8] sm:$0xff]
      %v594 = vld [vmem:[%s299 + $0x8d0] sm:$0xff]
      %v595 = vld [vmem:[%s299 + $0x8d8] sm:$0xff]
      %v596 = vld [vmem:[%s299 + $0x8e0] sm:$0xff]
      %v597 = vld [vmem:[%s299 + $0x8e8] sm:$0xff]
      %v598 = vld [vmem:[%s299 + $0x8f0] sm:$0xff]
      %v599 = vld [vmem:[%s299 + $0x8f8] sm:$0xff]
      %v600 = vld [vmem:[%s299 + $0x900] sm:$0xff]
      %v601 = vld [vmem:[%s299 + $0x908] sm:$0xff]
      %v602 = vld [vmem:[%s299 + $0x910] sm:$0xff]
      %v603 = vld [vmem:[%s299 + $0x918] sm:$0xff]
      %v604 = vld [vmem:[%s299 + $0x920] sm:$0xff]
      %v605 = vld [vmem:[%s299 + $0x928] sm:$0xff]
      %v606 = vld [vmem:[%s299 + $0x930] sm:$0xff]
      %v607 = vld [vmem:[%s299 + $0x938] sm:$0xff]
      %v608 = vld [vmem:[%s299 + $0x940] sm:$0xff]
      %v609 = vld [vmem:[%s299 + $0x948] sm:$0xff]
      %v610 = vld [vmem:[%s299 + $0x950] sm:$0xff]
      %v611 = vld [vmem:[%s299 + $0x958] sm:$0xff]
      %v612 = vld [vmem:[%s299 + $0x960] sm:$0xff]
      %v613 = vld [vmem:[%s299 + $0x968] sm:$0xff]
      %v614 = vld [vmem:[%s299 + $0x970] sm:$0xff]
      %v615 = vld [vmem:[%s299 + $0x978] sm:$0xff]
      %v616 = vld [vmem:[%s299 + $0x980] sm:$0xff]
      %v617 = vld [vmem:[%s299 + $0x988] sm:$0xff]
      %v618 = vld [vmem:[%s299 + $0x990] sm:$0xff]
      %v619 = vld [vmem:[%s299 + $0x998] sm:$0xff]
      %v620 = vld [vmem:[%s299 + $0x9a0] sm:$0xff]
      %v621 = vld [vmem:[%s299 + $0x9a8] sm:$0xff]
      %v622 = vld [vmem:[%s299 + $0x9b0] sm:$0xff]
      %v623 = vld [vmem:[%s299 + $0x9b8] sm:$0xff]
      %v624 = vld [vmem:[%s299 + $0x9c0] sm:$0xff]
      %v625 = vld [vmem:[%s299 + $0x9c8] sm:$0xff]
      %v626 = vld [vmem:[%s299 + $0x9d0] sm:$0xff]
      %v627 = vld [vmem:[%s299 + $0x9d8] sm:$0xff]
      %v628 = vmax.f32 %v312, %v313
      %v629 = vmax.f32 %v628, %v314
      %vm630 = vcmask 465920
      %v631 = vsel %vm630, %v315, -inf
      %v632 = vmax.f32 %v629, %v631
      %633 = vmax.xlane.f32.xlu0 %v632
      %v634 = vpop.xlane.xlu0 %633
      %v635 = vmax.f32 %v316, %v317
      %v636 = vmax.f32 %v635, %v318
      %v637 = vsel %vm630, %v319, -inf
      %v638 = vmax.f32 %v636, %v637
      %639 = vmax.xlane.f32.xlu0 %v638
      %v640 = vpop.xlane.xlu0 %639
      %v641 = vmax.f32 %v320, %v321
      %v642 = vmax.f32 %v641, %v322
      %v643 = vsel %vm630, %v323, -inf
      %v644 = vmax.f32 %v642, %v643
      %645 = vmax.xlane.f32.xlu0 %v644
      %v646 = vpop.xlane.xlu0 %645
      %v647 = vmax.f32 %v324, %v325
      %v648 = vmax.f32 %v647, %v326
      %v649 = vsel %vm630, %v327, -inf
      %v650 = vmax.f32 %v648, %v649
      %651 = vmax.xlane.f32.xlu0 %v650
      %v652 = vpop.xlane.xlu0 %651
      %v653 = vmax.f32 %v328, %v329
      %v654 = vmax.f32 %v653, %v330
      %v655 = vsel %vm630, %v331, -inf
      %v656 = vmax.f32 %v654, %v655
      %657 = vmax.xlane.f32.xlu0 %v656
      %v658 = vpop.xlane.xlu0 %657
      %v659 = vmax.f32 %v332, %v333
      %v660 = vmax.f32 %v659, %v334
      %v661 = vsel %vm630, %v335, -inf
      %v662 = vmax.f32 %v660, %v661
      %663 = vmax.xlane.f32.xlu0 %v662
      %v664 = vpop.xlane.xlu0 %663
      %v665 = vmax.f32 %v336, %v337
      %v666 = vmax.f32 %v665, %v338
      %v667 = vsel %vm630, %v339, -inf
      %v668 = vmax.f32 %v666, %v667
      %669 = vmax.xlane.f32.xlu0 %v668
      %v670 = vpop.xlane.xlu0 %669
      %v671 = vmax.f32 %v340, %v341
      %v672 = vmax.f32 %v671, %v342
      %v673 = vsel %vm630, %v343, -inf
      %v674 = vmax.f32 %v672, %v673
      %675 = vmax.xlane.f32.xlu0 %v674
      %v676 = vpop.xlane.xlu0 %675
      %v677 = vmax.f32 %v344, %v345
      %v678 = vmax.f32 %v677, %v346
      %v679 = vsel %vm630, %v347, -inf
      %v680 = vmax.f32 %v678, %v679
      %681 = vmax.xlane.f32.xlu0 %v680
      %v682 = vpop.xlane.xlu0 %681
      %v683 = vmax.f32 %v348, %v349
      %v684 = vmax.f32 %v683, %v350
      %v685 = vsel %vm630, %v351, -inf
      %v686 = vmax.f32 %v684, %v685
      %687 = vmax.xlane.f32.xlu0 %v686
      %v688 = vpop.xlane.xlu0 %687
      %v689 = vmax.f32 %v352, %v353
      %v690 = vmax.f32 %v689, %v354
      %v691 = vsel %vm630, %v355, -inf
      %v692 = vmax.f32 %v690, %v691
      %693 = vmax.xlane.f32.xlu0 %v692
      %v694 = vpop.xlane.xlu0 %693
      %v695 = vmax.f32 %v356, %v357
      %v696 = vmax.f32 %v695, %v358
      %v697 = vsel %vm630, %v359, -inf
      %v698 = vmax.f32 %v696, %v697
      %699 = vmax.xlane.f32.xlu0 %v698
      %v700 = vpop.xlane.xlu0 %699
      %v701 = vmax.f32 %v360, %v361
      %v702 = vmax.f32 %v701, %v362
      %v703 = vsel %vm630, %v363, -inf
      %v704 = vmax.f32 %v702, %v703
      %705 = vmax.xlane.f32.xlu0 %v704
      %v706 = vpop.xlane.xlu0 %705
      %v707 = vmax.f32 %v364, %v365
      %v708 = vmax.f32 %v707, %v366
      %v709 = vsel %vm630, %v367, -inf
      %v710 = vmax.f32 %v708, %v709
      %711 = vmax.xlane.f32.xlu0 %v710
      %v712 = vpop.xlane.xlu0 %711
      %v713 = vmax.f32 %v368, %v369
      %v714 = vmax.f32 %v713, %v370
      %v715 = vsel %vm630, %v371, -inf
      %v716 = vmax.f32 %v714, %v715
      %717 = vmax.xlane.f32.xlu0 %v716
      %v718 = vpop.xlane.xlu0 %717
      %v719 = vmax.f32 %v372, %v373
      %v720 = vmax.f32 %v719, %v374
      %v721 = vsel %vm630, %v375, -inf
      %v722 = vmax.f32 %v720, %v721
      %723 = vmax.xlane.f32.xlu0 %v722
      %v724 = vpop.xlane.xlu0 %723
      %v725 = vmax.f32 %v376, %v377
      %v726 = vmax.f32 %v725, %v378
      %v727 = vsel %vm630, %v379, -inf
      %v728 = vmax.f32 %v726, %v727
      %729 = vmax.xlane.f32.xlu0 %v728
      %v730 = vpop.xlane.xlu0 %729
      %v731 = vmax.f32 %v380, %v381
      %v732 = vmax.f32 %v731, %v382
      %v733 = vsel %vm630, %v383, -inf
      %v734 = vmax.f32 %v732, %v733
      %735 = vmax.xlane.f32.xlu0 %v734
      %v736 = vpop.xlane.xlu0 %735
      %v737 = vmax.f32 %v384, %v385
      %v738 = vmax.f32 %v737, %v386
      %v739 = vsel %vm630, %v387, -inf
      %v740 = vmax.f32 %v738, %v739
      %741 = vmax.xlane.f32.xlu0 %v740
      %v742 = vpop.xlane.xlu0 %741
      %v743 = vmax.f32 %v388, %v389
      %v744 = vmax.f32 %v743, %v390
      %v745 = vsel %vm630, %v391, -inf
      %v746 = vmax.f32 %v744, %v745
      %747 = vmax.xlane.f32.xlu0 %v746
      %v748 = vpop.xlane.xlu0 %747
      %v749 = vmax.f32 %v392, %v393
      %v750 = vmax.f32 %v749, %v394
      %v751 = vsel %vm630, %v395, -inf
      %v752 = vmax.f32 %v750, %v751
      %753 = vmax.xlane.f32.xlu0 %v752
      %v754 = vpop.xlane.xlu0 %753
      %v755 = vmax.f32 %v396, %v397
      %v756 = vmax.f32 %v755, %v398
      %v757 = vsel %vm630, %v399, -inf
      %v758 = vmax.f32 %v756, %v757
      %759 = vmax.xlane.f32.xlu0 %v758
      %v760 = vpop.xlane.xlu0 %759
      %v761 = vmax.f32 %v400, %v401
      %v762 = vmax.f32 %v761, %v402
      %v763 = vsel %vm630, %v403, -inf
      %v764 = vmax.f32 %v762, %v763
      %765 = vmax.xlane.f32.xlu0 %v764
      %v766 = vpop.xlane.xlu0 %765
      %v767 = vmax.f32 %v404, %v405
      %v768 = vmax.f32 %v767, %v406
      %v769 = vsel %vm630, %v407, -inf
      %v770 = vmax.f32 %v768, %v769
      %771 = vmax.xlane.f32.xlu0 %v770
      %v772 = vpop.xlane.xlu0 %771
      %v773 = vmax.f32 %v408, %v409
      %v774 = vmax.f32 %v773, %v410
      %v775 = vsel %vm630, %v411, -inf
      %v776 = vmax.f32 %v774, %v775
      %777 = vmax.xlane.f32.xlu0 %v776
      %v778 = vpop.xlane.xlu0 %777
      %v779 = vmax.f32 %v412, %v413
      %v780 = vmax.f32 %v779, %v414
      %v781 = vsel %vm630, %v415, -inf
      %v782 = vmax.f32 %v780, %v781
      %783 = vmax.xlane.f32.xlu0 %v782
      %v784 = vpop.xlane.xlu0 %783
      %v785 = vmax.f32 %v416, %v417
      %v786 = vmax.f32 %v785, %v418
      %v787 = vsel %vm630, %v419, -inf
      %v788 = vmax.f32 %v786, %v787
      %789 = vmax.xlane.f32.xlu0 %v788
      %v790 = vpop.xlane.xlu0 %789
      %v791 = vmax.f32 %v420, %v421
      %v792 = vmax.f32 %v791, %v422
      %v793 = vsel %vm630, %v423, -inf
      %v794 = vmax.f32 %v792, %v793
      %795 = vmax.xlane.f32.xlu0 %v794
      %v796 = vpop.xlane.xlu0 %795
      %v797 = vmax.f32 %v424, %v425
      %v798 = vmax.f32 %v797, %v426
      %v799 = vsel %vm630, %v427, -inf
      %v800 = vmax.f32 %v798, %v799
      %801 = vmax.xlane.f32.xlu0 %v800
      %v802 = vpop.xlane.xlu0 %801
      %v803 = vmax.f32 %v428, %v429
      %v804 = vmax.f32 %v803, %v430
      %v805 = vsel %vm630, %v431, -inf
      %v806 = vmax.f32 %v804, %v805
      %807 = vmax.xlane.f32.xlu0 %v806
      %v808 = vpop.xlane.xlu0 %807
      %v809 = vmax.f32 %v432, %v433
      %v810 = vmax.f32 %v809, %v434
      %v811 = vsel %vm630, %v435, -inf
      %v812 = vmax.f32 %v810, %v811
      %813 = vmax.xlane.f32.xlu0 %v812
      %v814 = vpop.xlane.xlu0 %813
      %v815 = vmax.f32 %v436, %v437
      %v816 = vmax.f32 %v815, %v438
      %v817 = vsel %vm630, %v439, -inf
      %v818 = vmax.f32 %v816, %v817
      %819 = vmax.xlane.f32.xlu0 %v818
      %v820 = vpop.xlane.xlu0 %819
      %v821 = vmax.f32 %v440, %v441
      %v822 = vmax.f32 %v821, %v442
      %v823 = vsel %vm630, %v443, -inf
      %v824 = vmax.f32 %v822, %v823
      %825 = vmax.xlane.f32.xlu0 %v824
      %v826 = vpop.xlane.xlu0 %825
      %v827 = vmax.f32 %v444, %v445
      %v828 = vmax.f32 %v827, %v446
      %v829 = vsel %vm630, %v447, -inf
      %v830 = vmax.f32 %v828, %v829
      %831 = vmax.xlane.f32.xlu0 %v830
      %v832 = vpop.xlane.xlu0 %831
      %v833 = vmax.f32 %v448, %v449
      %v834 = vmax.f32 %v833, %v450
      %v835 = vsel %vm630, %v451, -inf
      %v836 = vmax.f32 %v834, %v835
      %837 = vmax.xlane.f32.xlu0 %v836
      %v838 = vpop.xlane.xlu0 %837
      %v839 = vmax.f32 %v452, %v453
      %v840 = vmax.f32 %v839, %v454
      %v841 = vsel %vm630, %v455, -inf
      %v842 = vmax.f32 %v840, %v841
      %843 = vmax.xlane.f32.xlu0 %v842
      %v844 = vpop.xlane.xlu0 %843
      %v845 = vmax.f32 %v456, %v457
      %v846 = vmax.f32 %v845, %v458
      %v847 = vsel %vm630, %v459, -inf
      %v848 = vmax.f32 %v846, %v847
      %849 = vmax.xlane.f32.xlu0 %v848
      %v850 = vpop.xlane.xlu0 %849
      %v851 = vmax.f32 %v460, %v461
      %v852 = vmax.f32 %v851, %v462
      %v853 = vsel %vm630, %v463, -inf
      %v854 = vmax.f32 %v852, %v853
      %855 = vmax.xlane.f32.xlu0 %v854
      %v856 = vpop.xlane.xlu0 %855
      %v857 = vmax.f32 %v464, %v465
      %v858 = vmax.f32 %v857, %v466
      %v859 = vsel %vm630, %v467, -inf
      %v860 = vmax.f32 %v858, %v859
      %861 = vmax.xlane.f32.xlu0 %v860
      %v862 = vpop.xlane.xlu0 %861
      %v863 = vmax.f32 %v468, %v469
      %v864 = vmax.f32 %v863, %v470
      %v865 = vsel %vm630, %v471, -inf
      %v866 = vmax.f32 %v864, %v865
      %867 = vmax.xlane.f32.xlu0 %v866
      %v868 = vpop.xlane.xlu0 %867
      %v869 = vmax.f32 %v472, %v473
      %v870 = vmax.f32 %v869, %v474
      %v871 = vsel %vm630, %v475, -inf
      %v872 = vmax.f32 %v870, %v871
      %873 = vmax.xlane.f32.xlu0 %v872
      %v874 = vpop.xlane.xlu0 %873
      %v875 = vmax.f32 %v476, %v477
      %v876 = vmax.f32 %v875, %v478
      %v877 = vsel %vm630, %v479, -inf
      %v878 = vmax.f32 %v876, %v877
      %879 = vmax.xlane.f32.xlu0 %v878
      %v880 = vpop.xlane.xlu0 %879
      %v881 = vmax.f32 %v480, %v481
      %v882 = vmax.f32 %v881, %v482
      %v883 = vsel %vm630, %v483, -inf
      %v884 = vmax.f32 %v882, %v883
      %885 = vmax.xlane.f32.xlu0 %v884
      %v886 = vpop.xlane.xlu0 %885
      %v887 = vmax.f32 %v484, %v485
      %v888 = vmax.f32 %v887, %v486
      %v889 = vsel %vm630, %v487, -inf
      %v890 = vmax.f32 %v888, %v889
      %891 = vmax.xlane.f32.xlu0 %v890
      %v892 = vpop.xlane.xlu0 %891
      %v893 = vmax.f32 %v488, %v489
      %v894 = vmax.f32 %v893, %v490
      %v895 = vsel %vm630, %v491, -inf
      %v896 = vmax.f32 %v894, %v895
      %897 = vmax.xlane.f32.xlu0 %v896
      %v898 = vpop.xlane.xlu0 %897
      %v899 = vmax.f32 %v492, %v493
      %v900 = vmax.f32 %v899, %v494
      %v901 = vsel %vm630, %v495, -inf
      %v902 = vmax.f32 %v900, %v901
      %903 = vmax.xlane.f32.xlu0 %v902
      %v904 = vpop.xlane.xlu0 %903
      %v905 = vmax.f32 %v496, %v497
      %v906 = vmax.f32 %v905, %v498
      %v907 = vsel %vm630, %v499, -inf
      %v908 = vmax.f32 %v906, %v907
      %909 = vmax.xlane.f32.xlu0 %v908
      %v910 = vpop.xlane.xlu0 %909
      %v911 = vmax.f32 %v500, %v501
      %v912 = vmax.f32 %v911, %v502
      %v913 = vsel %vm630, %v503, -inf
      %v914 = vmax.f32 %v912, %v913
      %915 = vmax.xlane.f32.xlu0 %v914
      %v916 = vpop.xlane.xlu0 %915
      %v917 = vmax.f32 %v504, %v505
      %v918 = vmax.f32 %v917, %v506
      %v919 = vsel %vm630, %v507, -inf
      %v920 = vmax.f32 %v918, %v919
      %921 = vmax.xlane.f32.xlu0 %v920
      %v922 = vpop.xlane.xlu0 %921
      %v923 = vmax.f32 %v508, %v509
      %v924 = vmax.f32 %v923, %v510
      %v925 = vsel %vm630, %v511, -inf
      %v926 = vmax.f32 %v924, %v925
      %927 = vmax.xlane.f32.xlu0 %v926
      %v928 = vpop.xlane.xlu0 %927
      %v929 = vmax.f32 %v512, %v513
      %v930 = vmax.f32 %v929, %v514
      %v931 = vsel %vm630, %v515, -inf
      %v932 = vmax.f32 %v930, %v931
      %933 = vmax.xlane.f32.xlu0 %v932
      %v934 = vpop.xlane.xlu0 %933
      %v935 = vmax.f32 %v516, %v517
      %v936 = vmax.f32 %v935, %v518
      %v937 = vsel %vm630, %v519, -inf
      %v938 = vmax.f32 %v936, %v937
      %939 = vmax.xlane.f32.xlu0 %v938
      %v940 = vpop.xlane.xlu0 %939
      %v941 = vmax.f32 %v520, %v521
      %v942 = vmax.f32 %v941, %v522
      %v943 = vsel %vm630, %v523, -inf
      %v944 = vmax.f32 %v942, %v943
      %945 = vmax.xlane.f32.xlu0 %v944
      %v946 = vpop.xlane.xlu0 %945
      %v947 = vmax.f32 %v524, %v525
      %v948 = vmax.f32 %v947, %v526
      %v949 = vsel %vm630, %v527, -inf
      %v950 = vmax.f32 %v948, %v949
      %951 = vmax.xlane.f32.xlu0 %v950
      %v952 = vpop.xlane.xlu0 %951
      %v953 = vmax.f32 %v528, %v529
      %v954 = vmax.f32 %v953, %v530
      %v955 = vsel %vm630, %v531, -inf
      %v956 = vmax.f32 %v954, %v955
      %957 = vmax.xlane.f32.xlu0 %v956
      %v958 = vpop.xlane.xlu0 %957
      %v959 = vmax.f32 %v532, %v533
      %v960 = vmax.f32 %v959, %v534
      %v961 = vsel %vm630, %v535, -inf
      %v962 = vmax.f32 %v960, %v961
      %963 = vmax.xlane.f32.xlu0 %v962
      %v964 = vpop.xlane.xlu0 %963
      %v965 = vmax.f32 %v536, %v537
      %v966 = vmax.f32 %v965, %v538
      %v967 = vsel %vm630, %v539, -inf
      %v968 = vmax.f32 %v966, %v967
      %969 = vmax.xlane.f32.xlu0 %v968
      %v970 = vpop.xlane.xlu0 %969
      %v971 = vmax.f32 %v540, %v541
      %v972 = vmax.f32 %v971, %v542
      %v973 = vsel %vm630, %v543, -inf
      %v974 = vmax.f32 %v972, %v973
      %975 = vmax.xlane.f32.xlu0 %v974
      %v976 = vpop.xlane.xlu0 %975
      %v977 = vmax.f32 %v544, %v545
      %v978 = vmax.f32 %v977, %v546
      %v979 = vsel %vm630, %v547, -inf
      %v980 = vmax.f32 %v978, %v979
      %981 = vmax.xlane.f32.xlu0 %v980
      %v982 = vpop.xlane.xlu0 %981
      %v983 = vmax.f32 %v548, %v549
      %v984 = vmax.f32 %v983, %v550
      %v985 = vsel %vm630, %v551, -inf
      %v986 = vmax.f32 %v984, %v985
      %987 = vmax.xlane.f32.xlu0 %v986
      %v988 = vpop.xlane.xlu0 %987
      %v989 = vmax.f32 %v552, %v553
      %v990 = vmax.f32 %v989, %v554
      %v991 = vsel %vm630, %v555, -inf
      %v992 = vmax.f32 %v990, %v991
      %993 = vmax.xlane.f32.xlu0 %v992
      %v994 = vpop.xlane.xlu0 %993
      %v995 = vmax.f32 %v556, %v557
      %v996 = vmax.f32 %v995, %v558
      %v997 = vsel %vm630, %v559, -inf
      %v998 = vmax.f32 %v996, %v997
      %999 = vmax.xlane.f32.xlu0 %v998
      %v1000 = vpop.xlane.xlu0 %999
      %v1001 = vmax.f32 %v560, %v561
      %v1002 = vmax.f32 %v1001, %v562
      %v1003 = vsel %vm630, %v563, -inf
      %v1004 = vmax.f32 %v1002, %v1003
      %1005 = vmax.xlane.f32.xlu0 %v1004
      %v1006 = vpop.xlane.xlu0 %1005
      %v1007 = vmax.f32 %v564, %v565
      %v1008 = vmax.f32 %v1007, %v566
      %v1009 = vsel %vm630, %v567, -inf
      %v1010 = vmax.f32 %v1008, %v1009
      %1011 = vmax.xlane.f32.xlu0 %v1010
      %v1012 = vpop.xlane.xlu0 %1011
      %v1013 = vmax.f32 %v568, %v569
      %v1014 = vmax.f32 %v1013, %v570
      %v1015 = vsel %vm630, %v571, -inf
      %v1016 = vmax.f32 %v1014, %v1015
      %1017 = vmax.xlane.f32.xlu0 %v1016
      %v1018 = vpop.xlane.xlu0 %1017
      %v1019 = vmax.f32 %v572, %v573
      %v1020 = vmax.f32 %v1019, %v574
      %v1021 = vsel %vm630, %v575, -inf
      %v1022 = vmax.f32 %v1020, %v1021
      %1023 = vmax.xlane.f32.xlu0 %v1022
      %v1024 = vpop.xlane.xlu0 %1023
      %v1025 = vmax.f32 %v576, %v577
      %v1026 = vmax.f32 %v1025, %v578
      %v1027 = vsel %vm630, %v579, -inf
      %v1028 = vmax.f32 %v1026, %v1027
      %1029 = vmax.xlane.f32.xlu0 %v1028
      %v1030 = vpop.xlane.xlu0 %1029
      %v1031 = vmax.f32 %v580, %v581
      %v1032 = vmax.f32 %v1031, %v582
      %v1033 = vsel %vm630, %v583, -inf
      %v1034 = vmax.f32 %v1032, %v1033
      %1035 = vmax.xlane.f32.xlu0 %v1034
      %v1036 = vpop.xlane.xlu0 %1035
      %v1037 = vmax.f32 %v584, %v585
      %v1038 = vmax.f32 %v1037, %v586
      %v1039 = vsel %vm630, %v587, -inf
      %v1040 = vmax.f32 %v1038, %v1039
      %1041 = vmax.xlane.f32.xlu0 %v1040
      %v1042 = vpop.xlane.xlu0 %1041
      %v1043 = vmax.f32 %v588, %v589
      %v1044 = vmax.f32 %v1043, %v590
      %v1045 = vsel %vm630, %v591, -inf
      %v1046 = vmax.f32 %v1044, %v1045
      %1047 = vmax.xlane.f32.xlu0 %v1046
      %v1048 = vpop.xlane.xlu0 %1047
      %v1049 = vmax.f32 %v592, %v593
      %v1050 = vmax.f32 %v1049, %v594
      %v1051 = vsel %vm630, %v595, -inf
      %v1052 = vmax.f32 %v1050, %v1051
      %1053 = vmax.xlane.f32.xlu0 %v1052
      %v1054 = vpop.xlane.xlu0 %1053
      %v1055 = vmax.f32 %v596, %v597
      %v1056 = vmax.f32 %v1055, %v598
      %v1057 = vsel %vm630, %v599, -inf
      %v1058 = vmax.f32 %v1056, %v1057
      %1059 = vmax.xlane.f32.xlu0 %v1058
      %v1060 = vpop.xlane.xlu0 %1059
      %v1061 = vmax.f32 %v600, %v601
      %v1062 = vmax.f32 %v1061, %v602
      %v1063 = vsel %vm630, %v603, -inf
      %v1064 = vmax.f32 %v1062, %v1063
      %1065 = vmax.xlane.f32.xlu0 %v1064
      %v1066 = vpop.xlane.xlu0 %1065
      %v1067 = vmax.f32 %v604, %v605
      %v1068 = vmax.f32 %v1067, %v606
      %v1069 = vsel %vm630, %v607, -inf
      %v1070 = vmax.f32 %v1068, %v1069
      %1071 = vmax.xlane.f32.xlu0 %v1070
      %v1072 = vpop.xlane.xlu0 %1071
      %v1073 = vmax.f32 %v608, %v609
      %v1074 = vmax.f32 %v1073, %v610
      %v1075 = vsel %vm630, %v611, -inf
      %v1076 = vmax.f32 %v1074, %v1075
      %1077 = vmax.xlane.f32.xlu0 %v1076
      %v1078 = vpop.xlane.xlu0 %1077
      %v1079 = vmax.f32 %v612, %v613
      %v1080 = vmax.f32 %v1079, %v614
      %v1081 = vsel %vm630, %v615, -inf
      %v1082 = vmax.f32 %v1080, %v1081
      %1083 = vmax.xlane.f32.xlu0 %v1082
      %v1084 = vpop.xlane.xlu0 %1083
      %v1085 = vmax.f32 %v616, %v617
      %v1086 = vmax.f32 %v1085, %v618
      %v1087 = vsel %vm630, %v619, -inf
      %v1088 = vmax.f32 %v1086, %v1087
      %1089 = vmax.xlane.f32.xlu0 %v1088
      %v1090 = vpop.xlane.xlu0 %1089
      %v1091 = vmax.f32 %v620, %v621
      %v1092 = vmax.f32 %v1091, %v622
      %v1093 = vsel %vm630, %v623, -inf
      %v1094 = vmax.f32 %v1092, %v1093
      %1095 = vmax.xlane.f32.xlu0 %v1094
      %v1096 = vpop.xlane.xlu0 %1095
      %v1097 = vmax.f32 %v624, %v625
      %v1098 = vmax.f32 %v1097, %v626
      %v1099 = vsel %vm630, %v627, -inf
      %v1100 = vmax.f32 %v1098, %v1099
      %1101 = vmax.xlane.f32.xlu0 %v1100
      %v1102 = vpop.xlane.xlu0 %1101
      %v1103 = vsub.f32 %v312, %v634
      %v1104 = vsub.f32 %v313, %v634
      %v1105 = vsub.f32 %v314, %v634
      %v1106 = vsub.f32 %v315, %v634
      %v1107 = vsub.f32 %v316, %v640
      %v1108 = vsub.f32 %v317, %v640
      %v1109 = vsub.f32 %v318, %v640
      %v1110 = vsub.f32 %v319, %v640
      %v1111 = vsub.f32 %v320, %v646
      %v1112 = vsub.f32 %v321, %v646
      %v1113 = vsub.f32 %v322, %v646
      %v1114 = vsub.f32 %v323, %v646
      %v1115 = vsub.f32 %v324, %v652
      %v1116 = vsub.f32 %v325, %v652
      %v1117 = vsub.f32 %v326, %v652
      %v1118 = vsub.f32 %v327, %v652
      %v1119 = vsub.f32 %v328, %v658
      %v1120 = vsub.f32 %v329, %v658
      %v1121 = vsub.f32 %v330, %v658
      %v1122 = vsub.f32 %v331, %v658
      %v1123 = vsub.f32 %v332, %v664
      %v1124 = vsub.f32 %v333, %v664
      %v1125 = vsub.f32 %v334, %v664
      %v1126 = vsub.f32 %v335, %v664
      %v1127 = vsub.f32 %v336, %v670
      %v1128 = vsub.f32 %v337, %v670
      %v1129 = vsub.f32 %v338, %v670
      %v1130 = vsub.f32 %v339, %v670
      %v1131 = vsub.f32 %v340, %v676
      %v1132 = vsub.f32 %v341, %v676
      %v1133 = vsub.f32 %v342, %v676
      %v1134 = vsub.f32 %v343, %v676
      %v1135 = vsub.f32 %v344, %v682
      %v1136 = vsub.f32 %v345, %v682
      %v1137 = vsub.f32 %v346, %v682
      %v1138 = vsub.f32 %v347, %v682
      %v1139 = vsub.f32 %v348, %v688
      %v1140 = vsub.f32 %v349, %v688
      %v1141 = vsub.f32 %v350, %v688
      %v1142 = vsub.f32 %v351, %v688
      %v1143 = vsub.f32 %v352, %v694
      %v1144 = vsub.f32 %v353, %v694
      %v1145 = vsub.f32 %v354, %v694
      %v1146 = vsub.f32 %v355, %v694
      %v1147 = vsub.f32 %v356, %v700
      %v1148 = vsub.f32 %v357, %v700
      %v1149 = vsub.f32 %v358, %v700
      %v1150 = vsub.f32 %v359, %v700
      %v1151 = vsub.f32 %v360, %v706
      %v1152 = vsub.f32 %v361, %v706
      %v1153 = vsub.f32 %v362, %v706
      %v1154 = vsub.f32 %v363, %v706
      %v1155 = vsub.f32 %v364, %v712
      %v1156 = vsub.f32 %v365, %v712
      %v1157 = vsub.f32 %v366, %v712
      %v1158 = vsub.f32 %v367, %v712
      %v1159 = vsub.f32 %v368, %v718
      %v1160 = vsub.f32 %v369, %v718
      %v1161 = vsub.f32 %v370, %v718
      %v1162 = vsub.f32 %v371, %v718
      %v1163 = vsub.f32 %v372, %v724
      %v1164 = vsub.f32 %v373, %v724
      %v1165 = vsub.f32 %v374, %v724
      %v1166 = vsub.f32 %v375, %v724
      %v1167 = vsub.f32 %v376, %v730
      %v1168 = vsub.f32 %v377, %v730
      %v1169 = vsub.f32 %v378, %v730
      %v1170 = vsub.f32 %v379, %v730
      %v1171 = vsub.f32 %v380, %v736
      %v1172 = vsub.f32 %v381, %v736
      %v1173 = vsub.f32 %v382, %v736
      %v1174 = vsub.f32 %v383, %v736
      %v1175 = vsub.f32 %v384, %v742
      %v1176 = vsub.f32 %v385, %v742
      %v1177 = vsub.f32 %v386, %v742
      %v1178 = vsub.f32 %v387, %v742
      %v1179 = vsub.f32 %v388, %v748
      %v1180 = vsub.f32 %v389, %v748
      %v1181 = vsub.f32 %v390, %v748
      %v1182 = vsub.f32 %v391, %v748
      %v1183 = vsub.f32 %v392, %v754
      %v1184 = vsub.f32 %v393, %v754
      %v1185 = vsub.f32 %v394, %v754
      %v1186 = vsub.f32 %v395, %v754
      %v1187 = vsub.f32 %v396, %v760
      %v1188 = vsub.f32 %v397, %v760
      %v1189 = vsub.f32 %v398, %v760
      %v1190 = vsub.f32 %v399, %v760
      %v1191 = vsub.f32 %v400, %v766
      %v1192 = vsub.f32 %v401, %v766
      %v1193 = vsub.f32 %v402, %v766
      %v1194 = vsub.f32 %v403, %v766
      %v1195 = vsub.f32 %v404, %v772
      %v1196 = vsub.f32 %v405, %v772
      %v1197 = vsub.f32 %v406, %v772
      %v1198 = vsub.f32 %v407, %v772
      %v1199 = vsub.f32 %v408, %v778
      %v1200 = vsub.f32 %v409, %v778
      %v1201 = vsub.f32 %v410, %v778
      %v1202 = vsub.f32 %v411, %v778
      %v1203 = vsub.f32 %v412, %v784
      %v1204 = vsub.f32 %v413, %v784
      %v1205 = vsub.f32 %v414, %v784
      %v1206 = vsub.f32 %v415, %v784
      %v1207 = vsub.f32 %v416, %v790
      %v1208 = vsub.f32 %v417, %v790
      %v1209 = vsub.f32 %v418, %v790
      %v1210 = vsub.f32 %v419, %v790
      %v1211 = vsub.f32 %v420, %v796
      %v1212 = vsub.f32 %v421, %v796
      %v1213 = vsub.f32 %v422, %v796
      %v1214 = vsub.f32 %v423, %v796
      %v1215 = vsub.f32 %v424, %v802
      %v1216 = vsub.f32 %v425, %v802
      %v1217 = vsub.f32 %v426, %v802
      %v1218 = vsub.f32 %v427, %v802
      %v1219 = vsub.f32 %v428, %v808
      %v1220 = vsub.f32 %v429, %v808
      %v1221 = vsub.f32 %v430, %v808
      %v1222 = vsub.f32 %v431, %v808
      %v1223 = vsub.f32 %v432, %v814
      %v1224 = vsub.f32 %v433, %v814
      %v1225 = vsub.f32 %v434, %v814
      %v1226 = vsub.f32 %v435, %v814
      %v1227 = vsub.f32 %v436, %v820
      %v1228 = vsub.f32 %v437, %v820
      %v1229 = vsub.f32 %v438, %v820
      %v1230 = vsub.f32 %v439, %v820
      %v1231 = vsub.f32 %v440, %v826
      %v1232 = vsub.f32 %v441, %v826
      %v1233 = vsub.f32 %v442, %v826
      %v1234 = vsub.f32 %v443, %v826
      %v1235 = vsub.f32 %v444, %v832
      %v1236 = vsub.f32 %v445, %v832
      %v1237 = vsub.f32 %v446, %v832
      %v1238 = vsub.f32 %v447, %v832
      %v1239 = vsub.f32 %v448, %v838
      %v1240 = vsub.f32 %v449, %v838
      %v1241 = vsub.f32 %v450, %v838
      %v1242 = vsub.f32 %v451, %v838
      %v1243 = vsub.f32 %v452, %v844
      %v1244 = vsub.f32 %v453, %v844
      %v1245 = vsub.f32 %v454, %v844
      %v1246 = vsub.f32 %v455, %v844
      %v1247 = vsub.f32 %v456, %v850
      %v1248 = vsub.f32 %v457, %v850
      %v1249 = vsub.f32 %v458, %v850
      %v1250 = vsub.f32 %v459, %v850
      %v1251 = vsub.f32 %v460, %v856
      %v1252 = vsub.f32 %v461, %v856
      %v1253 = vsub.f32 %v462, %v856
      %v1254 = vsub.f32 %v463, %v856
      %v1255 = vsub.f32 %v464, %v862
      %v1256 = vsub.f32 %v465, %v862
      %v1257 = vsub.f32 %v466, %v862
      %v1258 = vsub.f32 %v467, %v862
      %v1259 = vsub.f32 %v468, %v868
      %v1260 = vsub.f32 %v469, %v868
      %v1261 = vsub.f32 %v470, %v868
      %v1262 = vsub.f32 %v471, %v868
      %v1263 = vsub.f32 %v472, %v874
      %v1264 = vsub.f32 %v473, %v874
      %v1265 = vsub.f32 %v474, %v874
      %v1266 = vsub.f32 %v475, %v874
      %v1267 = vsub.f32 %v476, %v880
      %v1268 = vsub.f32 %v477, %v880
      %v1269 = vsub.f32 %v478, %v880
      %v1270 = vsub.f32 %v479, %v880
      %v1271 = vsub.f32 %v480, %v886
      %v1272 = vsub.f32 %v481, %v886
      %v1273 = vsub.f32 %v482, %v886
      %v1274 = vsub.f32 %v483, %v886
      %v1275 = vsub.f32 %v484, %v892
      %v1276 = vsub.f32 %v485, %v892
      %v1277 = vsub.f32 %v486, %v892
      %v1278 = vsub.f32 %v487, %v892
      %v1279 = vsub.f32 %v488, %v898
      %v1280 = vsub.f32 %v489, %v898
      %v1281 = vsub.f32 %v490, %v898
      %v1282 = vsub.f32 %v491, %v898
      %v1283 = vsub.f32 %v492, %v904
      %v1284 = vsub.f32 %v493, %v904
      %v1285 = vsub.f32 %v494, %v904
      %v1286 = vsub.f32 %v495, %v904
      %v1287 = vsub.f32 %v496, %v910
      %v1288 = vsub.f32 %v497, %v910
      %v1289 = vsub.f32 %v498, %v910
      %v1290 = vsub.f32 %v499, %v910
      %v1291 = vsub.f32 %v500, %v916
      %v1292 = vsub.f32 %v501, %v916
      %v1293 = vsub.f32 %v502, %v916
      %v1294 = vsub.f32 %v503, %v916
      %v1295 = vsub.f32 %v504, %v922
      %v1296 = vsub.f32 %v505, %v922
      %v1297 = vsub.f32 %v506, %v922
      %v1298 = vsub.f32 %v507, %v922
      %v1299 = vsub.f32 %v508, %v928
      %v1300 = vsub.f32 %v509, %v928
      %v1301 = vsub.f32 %v510, %v928
      %v1302 = vsub.f32 %v511, %v928
      %v1303 = vsub.f32 %v512, %v934
      %v1304 = vsub.f32 %v513, %v934
      %v1305 = vsub.f32 %v514, %v934
      %v1306 = vsub.f32 %v515, %v934
      %v1307 = vsub.f32 %v516, %v940
      %v1308 = vsub.f32 %v517, %v940
      %v1309 = vsub.f32 %v518, %v940
      %v1310 = vsub.f32 %v519, %v940
      %v1311 = vsub.f32 %v520, %v946
      %v1312 = vsub.f32 %v521, %v946
      %v1313 = vsub.f32 %v522, %v946
      %v1314 = vsub.f32 %v523, %v946
      %v1315 = vsub.f32 %v524, %v952
      %v1316 = vsub.f32 %v525, %v952
      %v1317 = vsub.f32 %v526, %v952
      %v1318 = vsub.f32 %v527, %v952
      %v1319 = vsub.f32 %v528, %v958
      %v1320 = vsub.f32 %v529, %v958
      %v1321 = vsub.f32 %v530, %v958
      %v1322 = vsub.f32 %v531, %v958
      %v1323 = vsub.f32 %v532, %v964
      %v1324 = vsub.f32 %v533, %v964
      %v1325 = vsub.f32 %v534, %v964
      %v1326 = vsub.f32 %v535, %v964
      %v1327 = vsub.f32 %v536, %v970
      %v1328 = vsub.f32 %v537, %v970
      %v1329 = vsub.f32 %v538, %v970
      %v1330 = vsub.f32 %v539, %v970
      %v1331 = vsub.f32 %v540, %v976
      %v1332 = vsub.f32 %v541, %v976
      %v1333 = vsub.f32 %v542, %v976
      %v1334 = vsub.f32 %v543, %v976
      %v1335 = vsub.f32 %v544, %v982
      %v1336 = vsub.f32 %v545, %v982
      %v1337 = vsub.f32 %v546, %v982
      %v1338 = vsub.f32 %v547, %v982
      %v1339 = vsub.f32 %v548, %v988
      %v1340 = vsub.f32 %v549, %v988
      %v1341 = vsub.f32 %v550, %v988
      %v1342 = vsub.f32 %v551, %v988
      %v1343 = vsub.f32 %v552, %v994
      %v1344 = vsub.f32 %v553, %v994
      %v1345 = vsub.f32 %v554, %v994
      %v1346 = vsub.f32 %v555, %v994
      %v1347 = vsub.f32 %v556, %v1000
      %v1348 = vsub.f32 %v557, %v1000
      %v1349 = vsub.f32 %v558, %v1000
      %v1350 = vsub.f32 %v559, %v1000
      %v1351 = vsub.f32 %v560, %v1006
      %v1352 = vsub.f32 %v561, %v1006
      %v1353 = vsub.f32 %v562, %v1006
      %v1354 = vsub.f32 %v563, %v1006
      %v1355 = vsub.f32 %v564, %v1012
      %v1356 = vsub.f32 %v565, %v1012
      %v1357 = vsub.f32 %v566, %v1012
      %v1358 = vsub.f32 %v567, %v1012
      %v1359 = vsub.f32 %v568, %v1018
      %v1360 = vsub.f32 %v569, %v1018
      %v1361 = vsub.f32 %v570, %v1018
      %v1362 = vsub.f32 %v571, %v1018
      %v1363 = vsub.f32 %v572, %v1024
      %v1364 = vsub.f32 %v573, %v1024
      %v1365 = vsub.f32 %v574, %v1024
      %v1366 = vsub.f32 %v575, %v1024
      %v1367 = vsub.f32 %v576, %v1030
      %v1368 = vsub.f32 %v577, %v1030
      %v1369 = vsub.f32 %v578, %v1030
      %v1370 = vsub.f32 %v579, %v1030
      %v1371 = vsub.f32 %v580, %v1036
      %v1372 = vsub.f32 %v581, %v1036
      %v1373 = vsub.f32 %v582, %v1036
      %v1374 = vsub.f32 %v583, %v1036
      %v1375 = vsub.f32 %v584, %v1042
      %v1376 = vsub.f32 %v585, %v1042
      %v1377 = vsub.f32 %v586, %v1042
      %v1378 = vsub.f32 %v587, %v1042
      %v1379 = vsub.f32 %v588, %v1048
      %v1380 = vsub.f32 %v589, %v1048
      %v1381 = vsub.f32 %v590, %v1048
      %v1382 = vsub.f32 %v591, %v1048
      %v1383 = vsub.f32 %v592, %v1054
      %v1384 = vsub.f32 %v593, %v1054
      %v1385 = vsub.f32 %v594, %v1054
      %v1386 = vsub.f32 %v595, %v1054
      %v1387 = vsub.f32 %v596, %v1060
      %v1388 = vsub.f32 %v597, %v1060
      %v1389 = vsub.f32 %v598, %v1060
      %v1390 = vsub.f32 %v599, %v1060
      %v1391 = vsub.f32 %v600, %v1066
      %v1392 = vsub.f32 %v601, %v1066
      %v1393 = vsub.f32 %v602, %v1066
      %v1394 = vsub.f32 %v603, %v1066
      %v1395 = vsub.f32 %v604, %v1072
      %v1396 = vsub.f32 %v605, %v1072
      %v1397 = vsub.f32 %v606, %v1072
      %v1398 = vsub.f32 %v607, %v1072
      %v1399 = vsub.f32 %v608, %v1078
      %v1400 = vsub.f32 %v609, %v1078
      %v1401 = vsub.f32 %v610, %v1078
      %v1402 = vsub.f32 %v611, %v1078
      %v1403 = vsub.f32 %v612, %v1084
      %v1404 = vsub.f32 %v613, %v1084
      %v1405 = vsub.f32 %v614, %v1084
      %v1406 = vsub.f32 %v615, %v1084
      %v1407 = vsub.f32 %v616, %v1090
      %v1408 = vsub.f32 %v617, %v1090
      %v1409 = vsub.f32 %v618, %v1090
      %v1410 = vsub.f32 %v619, %v1090
      %v1411 = vsub.f32 %v620, %v1096
      %v1412 = vsub.f32 %v621, %v1096
      %v1413 = vsub.f32 %v622, %v1096
      %v1414 = vsub.f32 %v623, %v1096
      %v1415 = vsub.f32 %v624, %v1102
      %v1416 = vsub.f32 %v625, %v1102
      %v1417 = vsub.f32 %v626, %v1102
      %v1418 = vsub.f32 %v627, %v1102
      %v1419 = vmul.f32 %v1103, 1.442695
      %v1420 = vpow.pop %v1419
      %v1421 = vmul.f32 %v1104, 1.442695
      %v1422 = vpow.pop %v1421
      %v1423 = vmul.f32 %v1105, 1.442695
      %v1424 = vpow.pop %v1423
      %v1425 = vmul.f32 %v1106, 1.442695
      %v1426 = vpow.pop %v1425
      %v1427 = vmul.f32 %v1107, 1.442695
      %v1428 = vpow.pop %v1427
      %v1429 = vmul.f32 %v1108, 1.442695
      %v1430 = vpow.pop %v1429
      %v1431 = vmul.f32 %v1109, 1.442695
      %v1432 = vpow.pop %v1431
      %v1433 = vmul.f32 %v1110, 1.442695
      %v1434 = vpow.pop %v1433
      %v1435 = vmul.f32 %v1111, 1.442695
      %v1436 = vpow.pop %v1435
      %v1437 = vmul.f32 %v1112, 1.442695
      %v1438 = vpow.pop %v1437
      %v1439 = vmul.f32 %v1113, 1.442695
      %v1440 = vpow.pop %v1439
      %v1441 = vmul.f32 %v1114, 1.442695
      %v1442 = vpow.pop %v1441
      %v1443 = vmul.f32 %v1115, 1.442695
      %v1444 = vpow.pop %v1443
      %v1445 = vmul.f32 %v1116, 1.442695
      %v1446 = vpow.pop %v1445
      %v1447 = vmul.f32 %v1117, 1.442695
      %v1448 = vpow.pop %v1447
      %v1449 = vmul.f32 %v1118, 1.442695
      %v1450 = vpow.pop %v1449
      %v1451 = vmul.f32 %v1119, 1.442695
      %v1452 = vpow.pop %v1451
      %v1453 = vmul.f32 %v1120, 1.442695
      %v1454 = vpow.pop %v1453
      %v1455 = vmul.f32 %v1121, 1.442695
      %v1456 = vpow.pop %v1455
      %v1457 = vmul.f32 %v1122, 1.442695
      %v1458 = vpow.pop %v1457
      %v1459 = vmul.f32 %v1123, 1.442695
      %v1460 = vpow.pop %v1459
      %v1461 = vmul.f32 %v1124, 1.442695
      %v1462 = vpow.pop %v1461
      %v1463 = vmul.f32 %v1125, 1.442695
      %v1464 = vpow.pop %v1463
      %v1465 = vmul.f32 %v1126, 1.442695
      %v1466 = vpow.pop %v1465
      %v1467 = vmul.f32 %v1127, 1.442695
      %v1468 = vpow.pop %v1467
      %v1469 = vmul.f32 %v1128, 1.442695
      %v1470 = vpow.pop %v1469
      %v1471 = vmul.f32 %v1129, 1.442695
      %v1472 = vpow.pop %v1471
      %v1473 = vmul.f32 %v1130, 1.442695
      %v1474 = vpow.pop %v1473
      %v1475 = vmul.f32 %v1131, 1.442695
      %v1476 = vpow.pop %v1475
      %v1477 = vmul.f32 %v1132, 1.442695
      %v1478 = vpow.pop %v1477
      %v1479 = vmul.f32 %v1133, 1.442695
      %v1480 = vpow.pop %v1479
      %v1481 = vmul.f32 %v1134, 1.442695
      %v1482 = vpow.pop %v1481
      %v1483 = vmul.f32 %v1135, 1.442695
      %v1484 = vpow.pop %v1483
      %v1485 = vmul.f32 %v1136, 1.442695
      %v1486 = vpow.pop %v1485
      %v1487 = vmul.f32 %v1137, 1.442695
      %v1488 = vpow.pop %v1487
      %v1489 = vmul.f32 %v1138, 1.442695
      %v1490 = vpow.pop %v1489
      %v1491 = vmul.f32 %v1139, 1.442695
      %v1492 = vpow.pop %v1491
      %v1493 = vmul.f32 %v1140, 1.442695
      %v1494 = vpow.pop %v1493
      %v1495 = vmul.f32 %v1141, 1.442695
      %v1496 = vpow.pop %v1495
      %v1497 = vmul.f32 %v1142, 1.442695
      %v1498 = vpow.pop %v1497
      %v1499 = vmul.f32 %v1143, 1.442695
      %v1500 = vpow.pop %v1499
      %v1501 = vmul.f32 %v1144, 1.442695
      %v1502 = vpow.pop %v1501
      %v1503 = vmul.f32 %v1145, 1.442695
      %v1504 = vpow.pop %v1503
      %v1505 = vmul.f32 %v1146, 1.442695
      %v1506 = vpow.pop %v1505
      %v1507 = vmul.f32 %v1147, 1.442695
      %v1508 = vpow.pop %v1507
      %v1509 = vmul.f32 %v1148, 1.442695
      %v1510 = vpow.pop %v1509
      %v1511 = vmul.f32 %v1149, 1.442695
      %v1512 = vpow.pop %v1511
      %v1513 = vmul.f32 %v1150, 1.442695
      %v1514 = vpow.pop %v1513
      %v1515 = vmul.f32 %v1151, 1.442695
      %v1516 = vpow.pop %v1515
      %v1517 = vmul.f32 %v1152, 1.442695
      %v1518 = vpow.pop %v1517
      %v1519 = vmul.f32 %v1153, 1.442695
      %v1520 = vpow.pop %v1519
      %v1521 = vmul.f32 %v1154, 1.442695
      %v1522 = vpow.pop %v1521
      %v1523 = vmul.f32 %v1155, 1.442695
      %v1524 = vpow.pop %v1523
      %v1525 = vmul.f32 %v1156, 1.442695
      %v1526 = vpow.pop %v1525
      %v1527 = vmul.f32 %v1157, 1.442695
      %v1528 = vpow.pop %v1527
      %v1529 = vmul.f32 %v1158, 1.442695
      %v1530 = vpow.pop %v1529
      %v1531 = vmul.f32 %v1159, 1.442695
      %v1532 = vpow.pop %v1531
      %v1533 = vmul.f32 %v1160, 1.442695
      %v1534 = vpow.pop %v1533
      %v1535 = vmul.f32 %v1161, 1.442695
      %v1536 = vpow.pop %v1535
      %v1537 = vmul.f32 %v1162, 1.442695
      %v1538 = vpow.pop %v1537
      %v1539 = vmul.f32 %v1163, 1.442695
      %v1540 = vpow.pop %v1539
      %v1541 = vmul.f32 %v1164, 1.442695
      %v1542 = vpow.pop %v1541
      %v1543 = vmul.f32 %v1165, 1.442695
      %v1544 = vpow.pop %v1543
      %v1545 = vmul.f32 %v1166, 1.442695
      %v1546 = vpow.pop %v1545
      %v1547 = vmul.f32 %v1167, 1.442695
      %v1548 = vpow.pop %v1547
      %v1549 = vmul.f32 %v1168, 1.442695
      %v1550 = vpow.pop %v1549
      %v1551 = vmul.f32 %v1169, 1.442695
      %v1552 = vpow.pop %v1551
      %v1553 = vmul.f32 %v1170, 1.442695
      %v1554 = vpow.pop %v1553
      %v1555 = vmul.f32 %v1171, 1.442695
      %v1556 = vpow.pop %v1555
      %v1557 = vmul.f32 %v1172, 1.442695
      %v1558 = vpow.pop %v1557
      %v1559 = vmul.f32 %v1173, 1.442695
      %v1560 = vpow.pop %v1559
      %v1561 = vmul.f32 %v1174, 1.442695
      %v1562 = vpow.pop %v1561
      %v1563 = vmul.f32 %v1175, 1.442695
      %v1564 = vpow.pop %v1563
      %v1565 = vmul.f32 %v1176, 1.442695
      %v1566 = vpow.pop %v1565
      %v1567 = vmul.f32 %v1177, 1.442695
      %v1568 = vpow.pop %v1567
      %v1569 = vmul.f32 %v1178, 1.442695
      %v1570 = vpow.pop %v1569
      %v1571 = vmul.f32 %v1179, 1.442695
      %v1572 = vpow.pop %v1571
      %v1573 = vmul.f32 %v1180, 1.442695
      %v1574 = vpow.pop %v1573
      %v1575 = vmul.f32 %v1181, 1.442695
      %v1576 = vpow.pop %v1575
      %v1577 = vmul.f32 %v1182, 1.442695
      %v1578 = vpow.pop %v1577
      %v1579 = vmul.f32 %v1183, 1.442695
      %v1580 = vpow.pop %v1579
      %v1581 = vmul.f32 %v1184, 1.442695
      %v1582 = vpow.pop %v1581
      %v1583 = vmul.f32 %v1185, 1.442695
      %v1584 = vpow.pop %v1583
      %v1585 = vmul.f32 %v1186, 1.442695
      %v1586 = vpow.pop %v1585
      %v1587 = vmul.f32 %v1187, 1.442695
      %v1588 = vpow.pop %v1587
      %v1589 = vmul.f32 %v1188, 1.442695
      %v1590 = vpow.pop %v1589
      %v1591 = vmul.f32 %v1189, 1.442695
      %v1592 = vpow.pop %v1591
      %v1593 = vmul.f32 %v1190, 1.442695
      %v1594 = vpow.pop %v1593
      %v1595 = vmul.f32 %v1191, 1.442695
      %v1596 = vpow.pop %v1595
      %v1597 = vmul.f32 %v1192, 1.442695
      %v1598 = vpow.pop %v1597
      %v1599 = vmul.f32 %v1193, 1.442695
      %v1600 = vpow.pop %v1599
      %v1601 = vmul.f32 %v1194, 1.442695
      %v1602 = vpow.pop %v1601
      %v1603 = vmul.f32 %v1195, 1.442695
      %v1604 = vpow.pop %v1603
      %v1605 = vmul.f32 %v1196, 1.442695
      %v1606 = vpow.pop %v1605
      %v1607 = vmul.f32 %v1197, 1.442695
      %v1608 = vpow.pop %v1607
      %v1609 = vmul.f32 %v1198, 1.442695
      %v1610 = vpow.pop %v1609
      %v1611 = vmul.f32 %v1199, 1.442695
      %v1612 = vpow.pop %v1611
      %v1613 = vmul.f32 %v1200, 1.442695
      %v1614 = vpow.pop %v1613
      %v1615 = vmul.f32 %v1201, 1.442695
      %v1616 = vpow.pop %v1615
      %v1617 = vmul.f32 %v1202, 1.442695
      %v1618 = vpow.pop %v1617
      %v1619 = vmul.f32 %v1203, 1.442695
      %v1620 = vpow.pop %v1619
      %v1621 = vmul.f32 %v1204, 1.442695
      %v1622 = vpow.pop %v1621
      %v1623 = vmul.f32 %v1205, 1.442695
      %v1624 = vpow.pop %v1623
      %v1625 = vmul.f32 %v1206, 1.442695
      %v1626 = vpow.pop %v1625
      %v1627 = vmul.f32 %v1207, 1.442695
      %v1628 = vpow.pop %v1627
      %v1629 = vmul.f32 %v1208, 1.442695
      %v1630 = vpow.pop %v1629
      %v1631 = vmul.f32 %v1209, 1.442695
      %v1632 = vpow.pop %v1631
      %v1633 = vmul.f32 %v1210, 1.442695
      %v1634 = vpow.pop %v1633
      %v1635 = vmul.f32 %v1211, 1.442695
      %v1636 = vpow.pop %v1635
      %v1637 = vmul.f32 %v1212, 1.442695
      %v1638 = vpow.pop %v1637
      %v1639 = vmul.f32 %v1213, 1.442695
      %v1640 = vpow.pop %v1639
      %v1641 = vmul.f32 %v1214, 1.442695
      %v1642 = vpow.pop %v1641
      %v1643 = vmul.f32 %v1215, 1.442695
      %v1644 = vpow.pop %v1643
      %v1645 = vmul.f32 %v1216, 1.442695
      %v1646 = vpow.pop %v1645
      %v1647 = vmul.f32 %v1217, 1.442695
      %v1648 = vpow.pop %v1647
      %v1649 = vmul.f32 %v1218, 1.442695
      %v1650 = vpow.pop %v1649
      %v1651 = vmul.f32 %v1219, 1.442695
      %v1652 = vpow.pop %v1651
      %v1653 = vmul.f32 %v1220, 1.442695
      %v1654 = vpow.pop %v1653
      %v1655 = vmul.f32 %v1221, 1.442695
      %v1656 = vpow.pop %v1655
      %v1657 = vmul.f32 %v1222, 1.442695
      %v1658 = vpow.pop %v1657
      %v1659 = vmul.f32 %v1223, 1.442695
      %v1660 = vpow.pop %v1659
      %v1661 = vmul.f32 %v1224, 1.442695
      %v1662 = vpow.pop %v1661
      %v1663 = vmul.f32 %v1225, 1.442695
      %v1664 = vpow.pop %v1663
      %v1665 = vmul.f32 %v1226, 1.442695
      %v1666 = vpow.pop %v1665
      %v1667 = vmul.f32 %v1227, 1.442695
      %v1668 = vpow.pop %v1667
      %v1669 = vmul.f32 %v1228, 1.442695
      %v1670 = vpow.pop %v1669
      %v1671 = vmul.f32 %v1229, 1.442695
      %v1672 = vpow.pop %v1671
      %v1673 = vmul.f32 %v1230, 1.442695
      %v1674 = vpow.pop %v1673
      %v1675 = vmul.f32 %v1231, 1.442695
      %v1676 = vpow.pop %v1675
      %v1677 = vmul.f32 %v1232, 1.442695
      %v1678 = vpow.pop %v1677
      %v1679 = vmul.f32 %v1233, 1.442695
      %v1680 = vpow.pop %v1679
      %v1681 = vmul.f32 %v1234, 1.442695
      %v1682 = vpow.pop %v1681
      %v1683 = vmul.f32 %v1235, 1.442695
      %v1684 = vpow.pop %v1683
      %v1685 = vmul.f32 %v1236, 1.442695
      %v1686 = vpow.pop %v1685
      %v1687 = vmul.f32 %v1237, 1.442695
      %v1688 = vpow.pop %v1687
      %v1689 = vmul.f32 %v1238, 1.442695
      %v1690 = vpow.pop %v1689
      %v1691 = vmul.f32 %v1239, 1.442695
      %v1692 = vpow.pop %v1691
      %v1693 = vmul.f32 %v1240, 1.442695
      %v1694 = vpow.pop %v1693
      %v1695 = vmul.f32 %v1241, 1.442695
      %v1696 = vpow.pop %v1695
      %v1697 = vmul.f32 %v1242, 1.442695
      %v1698 = vpow.pop %v1697
      %v1699 = vmul.f32 %v1243, 1.442695
      %v1700 = vpow.pop %v1699
      %v1701 = vmul.f32 %v1244, 1.442695
      %v1702 = vpow.pop %v1701
      %v1703 = vmul.f32 %v1245, 1.442695
      %v1704 = vpow.pop %v1703
      %v1705 = vmul.f32 %v1246, 1.442695
      %v1706 = vpow.pop %v1705
      %v1707 = vmul.f32 %v1247, 1.442695
      %v1708 = vpow.pop %v1707
      %v1709 = vmul.f32 %v1248, 1.442695
      %v1710 = vpow.pop %v1709
      %v1711 = vmul.f32 %v1249, 1.442695
      %v1712 = vpow.pop %v1711
      %v1713 = vmul.f32 %v1250, 1.442695
      %v1714 = vpow.pop %v1713
      %v1715 = vmul.f32 %v1251, 1.442695
      %v1716 = vpow.pop %v1715
      %v1717 = vmul.f32 %v1252, 1.442695
      %v1718 = vpow.pop %v1717
      %v1719 = vmul.f32 %v1253, 1.442695
      %v1720 = vpow.pop %v1719
      %v1721 = vmul.f32 %v1254, 1.442695
      %v1722 = vpow.pop %v1721
      %v1723 = vmul.f32 %v1255, 1.442695
      %v1724 = vpow.pop %v1723
      %v1725 = vmul.f32 %v1256, 1.442695
      %v1726 = vpow.pop %v1725
      %v1727 = vmul.f32 %v1257, 1.442695
      %v1728 = vpow.pop %v1727
      %v1729 = vmul.f32 %v1258, 1.442695
      %v1730 = vpow.pop %v1729
      %v1731 = vmul.f32 %v1259, 1.442695
      %v1732 = vpow.pop %v1731
      %v1733 = vmul.f32 %v1260, 1.442695
      %v1734 = vpow.pop %v1733
      %v1735 = vmul.f32 %v1261, 1.442695
      %v1736 = vpow.pop %v1735
      %v1737 = vmul.f32 %v1262, 1.442695
      %v1738 = vpow.pop %v1737
      %v1739 = vmul.f32 %v1263, 1.442695
      %v1740 = vpow.pop %v1739
      %v1741 = vmul.f32 %v1264, 1.442695
      %v1742 = vpow.pop %v1741
      %v1743 = vmul.f32 %v1265, 1.442695
      %v1744 = vpow.pop %v1743
      %v1745 = vmul.f32 %v1266, 1.442695
      %v1746 = vpow.pop %v1745
      %v1747 = vmul.f32 %v1267, 1.442695
      %v1748 = vpow.pop %v1747
      %v1749 = vmul.f32 %v1268, 1.442695
      %v1750 = vpow.pop %v1749
      %v1751 = vmul.f32 %v1269, 1.442695
      %v1752 = vpow.pop %v1751
      %v1753 = vmul.f32 %v1270, 1.442695
      %v1754 = vpow.pop %v1753
      %v1755 = vmul.f32 %v1271, 1.442695
      %v1756 = vpow.pop %v1755
      %v1757 = vmul.f32 %v1272, 1.442695
      %v1758 = vpow.pop %v1757
      %v1759 = vmul.f32 %v1273, 1.442695
      %v1760 = vpow.pop %v1759
      %v1761 = vmul.f32 %v1274, 1.442695
      %v1762 = vpow.pop %v1761
      %v1763 = vmul.f32 %v1275, 1.442695
      %v1764 = vpow.pop %v1763
      %v1765 = vmul.f32 %v1276, 1.442695
      %v1766 = vpow.pop %v1765
      %v1767 = vmul.f32 %v1277, 1.442695
      %v1768 = vpow.pop %v1767
      %v1769 = vmul.f32 %v1278, 1.442695
      %v1770 = vpow.pop %v1769
      %v1771 = vmul.f32 %v1279, 1.442695
      %v1772 = vpow.pop %v1771
      %v1773 = vmul.f32 %v1280, 1.442695
      %v1774 = vpow.pop %v1773
      %v1775 = vmul.f32 %v1281, 1.442695
      %v1776 = vpow.pop %v1775
      %v1777 = vmul.f32 %v1282, 1.442695
      %v1778 = vpow.pop %v1777
      %v1779 = vmul.f32 %v1283, 1.442695
      %v1780 = vpow.pop %v1779
      %v1781 = vmul.f32 %v1284, 1.442695
      %v1782 = vpow.pop %v1781
      %v1783 = vmul.f32 %v1285, 1.442695
      %v1784 = vpow.pop %v1783
      %v1785 = vmul.f32 %v1286, 1.442695
      %v1786 = vpow.pop %v1785
      %v1787 = vmul.f32 %v1287, 1.442695
      %v1788 = vpow.pop %v1787
      %v1789 = vmul.f32 %v1288, 1.442695
      %v1790 = vpow.pop %v1789
      %v1791 = vmul.f32 %v1289, 1.442695
      %v1792 = vpow.pop %v1791
      %v1793 = vmul.f32 %v1290, 1.442695
      %v1794 = vpow.pop %v1793
      %v1795 = vmul.f32 %v1291, 1.442695
      %v1796 = vpow.pop %v1795
      %v1797 = vmul.f32 %v1292, 1.442695
      %v1798 = vpow.pop %v1797
      %v1799 = vmul.f32 %v1293, 1.442695
      %v1800 = vpow.pop %v1799
      %v1801 = vmul.f32 %v1294, 1.442695
      %v1802 = vpow.pop %v1801
      %v1803 = vmul.f32 %v1295, 1.442695
      %v1804 = vpow.pop %v1803
      %v1805 = vmul.f32 %v1296, 1.442695
      %v1806 = vpow.pop %v1805
      %v1807 = vmul.f32 %v1297, 1.442695
      %v1808 = vpow.pop %v1807
      %v1809 = vmul.f32 %v1298, 1.442695
      %v1810 = vpow.pop %v1809
      %v1811 = vmul.f32 %v1299, 1.442695
      %v1812 = vpow.pop %v1811
      %v1813 = vmul.f32 %v1300, 1.442695
      %v1814 = vpow.pop %v1813
      %v1815 = vmul.f32 %v1301, 1.442695
      %v1816 = vpow.pop %v1815
      %v1817 = vmul.f32 %v1302, 1.442695
      %v1818 = vpow.pop %v1817
      %v1819 = vmul.f32 %v1303, 1.442695
      %v1820 = vpow.pop %v1819
      %v1821 = vmul.f32 %v1304, 1.442695
      %v1822 = vpow.pop %v1821
      %v1823 = vmul.f32 %v1305, 1.442695
      %v1824 = vpow.pop %v1823
      %v1825 = vmul.f32 %v1306, 1.442695
      %v1826 = vpow.pop %v1825
      %v1827 = vmul.f32 %v1307, 1.442695
      %v1828 = vpow.pop %v1827
      %v1829 = vmul.f32 %v1308, 1.442695
      %v1830 = vpow.pop %v1829
      %v1831 = vmul.f32 %v1309, 1.442695
      %v1832 = vpow.pop %v1831
      %v1833 = vmul.f32 %v1310, 1.442695
      %v1834 = vpow.pop %v1833
      %v1835 = vmul.f32 %v1311, 1.442695
      %v1836 = vpow.pop %v1835
      %v1837 = vmul.f32 %v1312, 1.442695
      %v1838 = vpow.pop %v1837
      %v1839 = vmul.f32 %v1313, 1.442695
      %v1840 = vpow.pop %v1839
      %v1841 = vmul.f32 %v1314, 1.442695
      %v1842 = vpow.pop %v1841
      %v1843 = vmul.f32 %v1315, 1.442695
      %v1844 = vpow.pop %v1843
      %v1845 = vmul.f32 %v1316, 1.442695
      %v1846 = vpow.pop %v1845
      %v1847 = vmul.f32 %v1317, 1.442695
      %v1848 = vpow.pop %v1847
      %v1849 = vmul.f32 %v1318, 1.442695
      %v1850 = vpow.pop %v1849
      %v1851 = vmul.f32 %v1319, 1.442695
      %v1852 = vpow.pop %v1851
      %v1853 = vmul.f32 %v1320, 1.442695
      %v1854 = vpow.pop %v1853
      %v1855 = vmul.f32 %v1321, 1.442695
      %v1856 = vpow.pop %v1855
      %v1857 = vmul.f32 %v1322, 1.442695
      %v1858 = vpow.pop %v1857
      %v1859 = vmul.f32 %v1323, 1.442695
      %v1860 = vpow.pop %v1859
      %v1861 = vmul.f32 %v1324, 1.442695
      %v1862 = vpow.pop %v1861
      %v1863 = vmul.f32 %v1325, 1.442695
      %v1864 = vpow.pop %v1863
      %v1865 = vmul.f32 %v1326, 1.442695
      %v1866 = vpow.pop %v1865
      %v1867 = vmul.f32 %v1327, 1.442695
      %v1868 = vpow.pop %v1867
      %v1869 = vmul.f32 %v1328, 1.442695
      %v1870 = vpow.pop %v1869
      %v1871 = vmul.f32 %v1329, 1.442695
      %v1872 = vpow.pop %v1871
      %v1873 = vmul.f32 %v1330, 1.442695
      %v1874 = vpow.pop %v1873
      %v1875 = vmul.f32 %v1331, 1.442695
      %v1876 = vpow.pop %v1875
      %v1877 = vmul.f32 %v1332, 1.442695
      %v1878 = vpow.pop %v1877
      %v1879 = vmul.f32 %v1333, 1.442695
      %v1880 = vpow.pop %v1879
      %v1881 = vmul.f32 %v1334, 1.442695
      %v1882 = vpow.pop %v1881
      %v1883 = vmul.f32 %v1335, 1.442695
      %v1884 = vpow.pop %v1883
      %v1885 = vmul.f32 %v1336, 1.442695
      %v1886 = vpow.pop %v1885
      %v1887 = vmul.f32 %v1337, 1.442695
      %v1888 = vpow.pop %v1887
      %v1889 = vmul.f32 %v1338, 1.442695
      %v1890 = vpow.pop %v1889
      %v1891 = vmul.f32 %v1339, 1.442695
      %v1892 = vpow.pop %v1891
      %v1893 = vmul.f32 %v1340, 1.442695
      %v1894 = vpow.pop %v1893
      %v1895 = vmul.f32 %v1341, 1.442695
      %v1896 = vpow.pop %v1895
      %v1897 = vmul.f32 %v1342, 1.442695
      %v1898 = vpow.pop %v1897
      %v1899 = vmul.f32 %v1343, 1.442695
      %v1900 = vpow.pop %v1899
      %v1901 = vmul.f32 %v1344, 1.442695
      %v1902 = vpow.pop %v1901
      %v1903 = vmul.f32 %v1345, 1.442695
      %v1904 = vpow.pop %v1903
      %v1905 = vmul.f32 %v1346, 1.442695
      %v1906 = vpow.pop %v1905
      %v1907 = vmul.f32 %v1347, 1.442695
      %v1908 = vpow.pop %v1907
      %v1909 = vmul.f32 %v1348, 1.442695
      %v1910 = vpow.pop %v1909
      %v1911 = vmul.f32 %v1349, 1.442695
      %v1912 = vpow.pop %v1911
      %v1913 = vmul.f32 %v1350, 1.442695
      %v1914 = vpow.pop %v1913
      %v1915 = vmul.f32 %v1351, 1.442695
      %v1916 = vpow.pop %v1915
      %v1917 = vmul.f32 %v1352, 1.442695
      %v1918 = vpow.pop %v1917
      %v1919 = vmul.f32 %v1353, 1.442695
      %v1920 = vpow.pop %v1919
      %v1921 = vmul.f32 %v1354, 1.442695
      %v1922 = vpow.pop %v1921
      %v1923 = vmul.f32 %v1355, 1.442695
      %v1924 = vpow.pop %v1923
      %v1925 = vmul.f32 %v1356, 1.442695
      %v1926 = vpow.pop %v1925
      %v1927 = vmul.f32 %v1357, 1.442695
      %v1928 = vpow.pop %v1927
      %v1929 = vmul.f32 %v1358, 1.442695
      %v1930 = vpow.pop %v1929
      %v1931 = vmul.f32 %v1359, 1.442695
      %v1932 = vpow.pop %v1931
      %v1933 = vmul.f32 %v1360, 1.442695
      %v1934 = vpow.pop %v1933
      %v1935 = vmul.f32 %v1361, 1.442695
      %v1936 = vpow.pop %v1935
      %v1937 = vmul.f32 %v1362, 1.442695
      %v1938 = vpow.pop %v1937
      %v1939 = vmul.f32 %v1363, 1.442695
      %v1940 = vpow.pop %v1939
      %v1941 = vmul.f32 %v1364, 1.442695
      %v1942 = vpow.pop %v1941
      %v1943 = vmul.f32 %v1365, 1.442695
      %v1944 = vpow.pop %v1943
      %v1945 = vmul.f32 %v1366, 1.442695
      %v1946 = vpow.pop %v1945
      %v1947 = vmul.f32 %v1367, 1.442695
      %v1948 = vpow.pop %v1947
      %v1949 = vmul.f32 %v1368, 1.442695
      %v1950 = vpow.pop %v1949
      %v1951 = vmul.f32 %v1369, 1.442695
      %v1952 = vpow.pop %v1951
      %v1953 = vmul.f32 %v1370, 1.442695
      %v1954 = vpow.pop %v1953
      %v1955 = vmul.f32 %v1371, 1.442695
      %v1956 = vpow.pop %v1955
      %v1957 = vmul.f32 %v1372, 1.442695
      %v1958 = vpow.pop %v1957
      %v1959 = vmul.f32 %v1373, 1.442695
      %v1960 = vpow.pop %v1959
      %v1961 = vmul.f32 %v1374, 1.442695
      %v1962 = vpow.pop %v1961
      %v1963 = vmul.f32 %v1375, 1.442695
      %v1964 = vpow.pop %v1963
      %v1965 = vmul.f32 %v1376, 1.442695
      %v1966 = vpow.pop %v1965
      %v1967 = vmul.f32 %v1377, 1.442695
      %v1968 = vpow.pop %v1967
      %v1969 = vmul.f32 %v1378, 1.442695
      %v1970 = vpow.pop %v1969
      %v1971 = vmul.f32 %v1379, 1.442695
      %v1972 = vpow.pop %v1971
      %v1973 = vmul.f32 %v1380, 1.442695
      %v1974 = vpow.pop %v1973
      %v1975 = vmul.f32 %v1381, 1.442695
      %v1976 = vpow.pop %v1975
      %v1977 = vmul.f32 %v1382, 1.442695
      %v1978 = vpow.pop %v1977
      %v1979 = vmul.f32 %v1383, 1.442695
      %v1980 = vpow.pop %v1979
      %v1981 = vmul.f32 %v1384, 1.442695
      %v1982 = vpow.pop %v1981
      %v1983 = vmul.f32 %v1385, 1.442695
      %v1984 = vpow.pop %v1983
      %v1985 = vmul.f32 %v1386, 1.442695
      %v1986 = vpow.pop %v1985
      %v1987 = vmul.f32 %v1387, 1.442695
      %v1988 = vpow.pop %v1987
      %v1989 = vmul.f32 %v1388, 1.442695
      %v1990 = vpow.pop %v1989
      %v1991 = vmul.f32 %v1389, 1.442695
      %v1992 = vpow.pop %v1991
      %v1993 = vmul.f32 %v1390, 1.442695
      %v1994 = vpow.pop %v1993
      %v1995 = vmul.f32 %v1391, 1.442695
      %v1996 = vpow.pop %v1995
      %v1997 = vmul.f32 %v1392, 1.442695
      %v1998 = vpow.pop %v1997
      %v1999 = vmul.f32 %v1393, 1.442695
      %v2000 = vpow.pop %v1999
      %v2001 = vmul.f32 %v1394, 1.442695
      %v2002 = vpow.pop %v2001
      %v2003 = vmul.f32 %v1395, 1.442695
      %v2004 = vpow.pop %v2003
      %v2005 = vmul.f32 %v1396, 1.442695
      %v2006 = vpow.pop %v2005
      %v2007 = vmul.f32 %v1397, 1.442695
      %v2008 = vpow.pop %v2007
      %v2009 = vmul.f32 %v1398, 1.442695
      %v2010 = vpow.pop %v2009
      %v2011 = vmul.f32 %v1399, 1.442695
      %v2012 = vpow.pop %v2011
      %v2013 = vmul.f32 %v1400, 1.442695
      %v2014 = vpow.pop %v2013
      %v2015 = vmul.f32 %v1401, 1.442695
      %v2016 = vpow.pop %v2015
      %v2017 = vmul.f32 %v1402, 1.442695
      %v2018 = vpow.pop %v2017
      %v2019 = vmul.f32 %v1403, 1.442695
      %v2020 = vpow.pop %v2019
      %v2021 = vmul.f32 %v1404, 1.442695
      %v2022 = vpow.pop %v2021
      %v2023 = vmul.f32 %v1405, 1.442695
      %v2024 = vpow.pop %v2023
      %v2025 = vmul.f32 %v1406, 1.442695
      %v2026 = vpow.pop %v2025
      %v2027 = vmul.f32 %v1407, 1.442695
      %v2028 = vpow.pop %v2027
      %v2029 = vmul.f32 %v1408, 1.442695
      %v2030 = vpow.pop %v2029
      %v2031 = vmul.f32 %v1409, 1.442695
      %v2032 = vpow.pop %v2031
      %v2033 = vmul.f32 %v1410, 1.442695
      %v2034 = vpow.pop %v2033
      %v2035 = vmul.f32 %v1411, 1.442695
      %v2036 = vpow.pop %v2035
      %v2037 = vmul.f32 %v1412, 1.442695
      %v2038 = vpow.pop %v2037
      %v2039 = vmul.f32 %v1413, 1.442695
      %v2040 = vpow.pop %v2039
      %v2041 = vmul.f32 %v1414, 1.442695
      %v2042 = vpow.pop %v2041
      %v2043 = vmul.f32 %v1415, 1.442695
      %v2044 = vpow.pop %v2043
      %v2045 = vmul.f32 %v1416, 1.442695
      %v2046 = vpow.pop %v2045
      %v2047 = vmul.f32 %v1417, 1.442695
      %v2048 = vpow.pop %v2047
      %v2049 = vmul.f32 %v1418, 1.442695
      %v2050 = vpow.pop %v2049
      %v2051 = vpack.c.bf16 %v1428, %v1420
      %v2052 = vpack.c.bf16 %v1430, %v1422
      %v2053 = vpack.c.bf16 %v1432, %v1424
      %v2054 = vpack.c.bf16 %v1434, %v1426
      %v2055 = vpack.c.bf16 %v1444, %v1436
      %v2056 = vpack.c.bf16 %v1446, %v1438
      %v2057 = vpack.c.bf16 %v1448, %v1440
      %v2058 = vpack.c.bf16 %v1450, %v1442
      %v2059 = vpack.c.bf16 %v1460, %v1452
      %v2060 = vpack.c.bf16 %v1462, %v1454
      %v2061 = vpack.c.bf16 %v1464, %v1456
      %v2062 = vpack.c.bf16 %v1466, %v1458
      %v2063 = vpack.c.bf16 %v1476, %v1468
      %v2064 = vpack.c.bf16 %v1478, %v1470
      %v2065 = vpack.c.bf16 %v1480, %v1472
      %v2066 = vpack.c.bf16 %v1482, %v1474
      %v2067 = vpack.c.bf16 %v1492, %v1484
      %v2068 = vpack.c.bf16 %v1494, %v1486
      %v2069 = vpack.c.bf16 %v1496, %v1488
      %v2070 = vpack.c.bf16 %v1498, %v1490
      %v2071 = vpack.c.bf16 %v1508, %v1500
      %v2072 = vpack.c.bf16 %v1510, %v1502
      %v2073 = vpack.c.bf16 %v1512, %v1504
      %v2074 = vpack.c.bf16 %v1514, %v1506
      %v2075 = vpack.c.bf16 %v1524, %v1516
      %v2076 = vpack.c.bf16 %v1526, %v1518
      %v2077 = vpack.c.bf16 %v1528, %v1520
      %v2078 = vpack.c.bf16 %v1530, %v1522
      %v2079 = vpack.c.bf16 %v1540, %v1532
      %v2080 = vpack.c.bf16 %v1542, %v1534
      %v2081 = vpack.c.bf16 %v1544, %v1536
      %v2082 = vpack.c.bf16 %v1546, %v1538
      %v2083 = vpack.c.bf16 %v1556, %v1548
      %v2084 = vpack.c.bf16 %v1558, %v1550
      %v2085 = vpack.c.bf16 %v1560, %v1552
      %v2086 = vpack.c.bf16 %v1562, %v1554
      %v2087 = vpack.c.bf16 %v1572, %v1564
      %v2088 = vpack.c.bf16 %v1574, %v1566
      %v2089 = vpack.c.bf16 %v1576, %v1568
      %v2090 = vpack.c.bf16 %v1578, %v1570
      %v2091 = vpack.c.bf16 %v1588, %v1580
      %v2092 = vpack.c.bf16 %v1590, %v1582
      %v2093 = vpack.c.bf16 %v1592, %v1584
      %v2094 = vpack.c.bf16 %v1594, %v1586
      %v2095 = vpack.c.bf16 %v1604, %v1596
      %v2096 = vpack.c.bf16 %v1606, %v1598
      %v2097 = vpack.c.bf16 %v1608, %v1600
      %v2098 = vpack.c.bf16 %v1610, %v1602
      %v2099 = vpack.c.bf16 %v1620, %v1612
      %v2100 = vpack.c.bf16 %v1622, %v1614
      %v2101 = vpack.c.bf16 %v1624, %v1616
      %v2102 = vpack.c.bf16 %v1626, %v1618
      %v2103 = vpack.c.bf16 %v1636, %v1628
      %v2104 = vpack.c.bf16 %v1638, %v1630
      %v2105 = vpack.c.bf16 %v1640, %v1632
      %v2106 = vpack.c.bf16 %v1642, %v1634
      %v2107 = vpack.c.bf16 %v1652, %v1644
      %v2108 = vpack.c.bf16 %v1654, %v1646
      %v2109 = vpack.c.bf16 %v1656, %v1648
      %v2110 = vpack.c.bf16 %v1658, %v1650
      %v2111 = vpack.c.bf16 %v1668, %v1660
      %v2112 = vpack.c.bf16 %v1670, %v1662
      %v2113 = vpack.c.bf16 %v1672, %v1664
      %v2114 = vpack.c.bf16 %v1674, %v1666
      %v2115 = vpack.c.bf16 %v1684, %v1676
      %v2116 = vpack.c.bf16 %v1686, %v1678
      %v2117 = vpack.c.bf16 %v1688, %v1680
      %v2118 = vpack.c.bf16 %v1690, %v1682
      %v2119 = vpack.c.bf16 %v1700, %v1692
      %v2120 = vpack.c.bf16 %v1702, %v1694
      %v2121 = vpack.c.bf16 %v1704, %v1696
      %v2122 = vpack.c.bf16 %v1706, %v1698
      %v2123 = vpack.c.bf16 %v1716, %v1708
      %v2124 = vpack.c.bf16 %v1718, %v1710
      %v2125 = vpack.c.bf16 %v1720, %v1712
      %v2126 = vpack.c.bf16 %v1722, %v1714
      %v2127 = vpack.c.bf16 %v1732, %v1724
      %v2128 = vpack.c.bf16 %v1734, %v1726
      %v2129 = vpack.c.bf16 %v1736, %v1728
      %v2130 = vpack.c.bf16 %v1738, %v1730
      %v2131 = vpack.c.bf16 %v1748, %v1740
      %v2132 = vpack.c.bf16 %v1750, %v1742
      %v2133 = vpack.c.bf16 %v1752, %v1744
      %v2134 = vpack.c.bf16 %v1754, %v1746
      %v2135 = vpack.c.bf16 %v1764, %v1756
      %v2136 = vpack.c.bf16 %v1766, %v1758
      %v2137 = vpack.c.bf16 %v1768, %v1760
      %v2138 = vpack.c.bf16 %v1770, %v1762
      %v2139 = vpack.c.bf16 %v1780, %v1772
      %v2140 = vpack.c.bf16 %v1782, %v1774
      %v2141 = vpack.c.bf16 %v1784, %v1776
      %v2142 = vpack.c.bf16 %v1786, %v1778
      %v2143 = vpack.c.bf16 %v1796, %v1788
      %v2144 = vpack.c.bf16 %v1798, %v1790
      %v2145 = vpack.c.bf16 %v1800, %v1792
      %v2146 = vpack.c.bf16 %v1802, %v1794
      %v2147 = vpack.c.bf16 %v1812, %v1804
      %v2148 = vpack.c.bf16 %v1814, %v1806
      %v2149 = vpack.c.bf16 %v1816, %v1808
      %v2150 = vpack.c.bf16 %v1818, %v1810
      %v2151 = vpack.c.bf16 %v1828, %v1820
      %v2152 = vpack.c.bf16 %v1830, %v1822
      %v2153 = vpack.c.bf16 %v1832, %v1824
      %v2154 = vpack.c.bf16 %v1834, %v1826
      %v2155 = vpack.c.bf16 %v1844, %v1836
      %v2156 = vpack.c.bf16 %v1846, %v1838
      %v2157 = vpack.c.bf16 %v1848, %v1840
      %v2158 = vpack.c.bf16 %v1850, %v1842
      %v2159 = vpack.c.bf16 %v1860, %v1852
      %v2160 = vpack.c.bf16 %v1862, %v1854
      %v2161 = vpack.c.bf16 %v1864, %v1856
      %v2162 = vpack.c.bf16 %v1866, %v1858
      %v2163 = vpack.c.bf16 %v1876, %v1868
      %v2164 = vpack.c.bf16 %v1878, %v1870
      %v2165 = vpack.c.bf16 %v1880, %v1872
      %v2166 = vpack.c.bf16 %v1882, %v1874
      %v2167 = vpack.c.bf16 %v1892, %v1884
      %v2168 = vpack.c.bf16 %v1894, %v1886
      %v2169 = vpack.c.bf16 %v1896, %v1888
      %v2170 = vpack.c.bf16 %v1898, %v1890
      %v2171 = vpack.c.bf16 %v1908, %v1900
      %v2172 = vpack.c.bf16 %v1910, %v1902
      %v2173 = vpack.c.bf16 %v1912, %v1904
      %v2174 = vpack.c.bf16 %v1914, %v1906
      %v2175 = vpack.c.bf16 %v1924, %v1916
      %v2176 = vpack.c.bf16 %v1926, %v1918
      %v2177 = vpack.c.bf16 %v1928, %v1920
      %v2178 = vpack.c.bf16 %v1930, %v1922
      %v2179 = vpack.c.bf16 %v1940, %v1932
      %v2180 = vpack.c.bf16 %v1942, %v1934
      %v2181 = vpack.c.bf16 %v1944, %v1936
      %v2182 = vpack.c.bf16 %v1946, %v1938
      %v2183 = vpack.c.bf16 %v1956, %v1948
      %v2184 = vpack.c.bf16 %v1958, %v1950
      %v2185 = vpack.c.bf16 %v1960, %v1952
      %v2186 = vpack.c.bf16 %v1962, %v1954
      %v2187 = vpack.c.bf16 %v1972, %v1964
      %v2188 = vpack.c.bf16 %v1974, %v1966
      %v2189 = vpack.c.bf16 %v1976, %v1968
      %v2190 = vpack.c.bf16 %v1978, %v1970
      %v2191 = vpack.c.bf16 %v1988, %v1980
      %v2192 = vpack.c.bf16 %v1990, %v1982
      %v2193 = vpack.c.bf16 %v1992, %v1984
      %v2194 = vpack.c.bf16 %v1994, %v1986
      %v2195 = vpack.c.bf16 %v2004, %v1996
      %v2196 = vpack.c.bf16 %v2006, %v1998
      %v2197 = vpack.c.bf16 %v2008, %v2000
      %v2198 = vpack.c.bf16 %v2010, %v2002
      %v2199 = vpack.c.bf16 %v2020, %v2012
      %v2200 = vpack.c.bf16 %v2022, %v2014
      %v2201 = vpack.c.bf16 %v2024, %v2016
      %v2202 = vpack.c.bf16 %v2026, %v2018
      %v2203 = vpack.c.bf16 %v2036, %v2028
      %v2204 = vpack.c.bf16 %v2038, %v2030
      %v2205 = vpack.c.bf16 %v2040, %v2032
      %v2206 = vpack.c.bf16 %v2042, %v2034
      %v2207 = vpack.c.bf16 %v2044, %v2044
      %v2208 = vpack.c.bf16 %v2046, %v2046
      %v2209 = vpack.c.bf16 %v2048, %v2048
      %v2210 = vpack.c.bf16 %v2050, %v2050
      %v2211 = vld [vmem:[%s1] sm:$0xf]
      %v2212 = vld [vmem:[%s1 + $0x4] sm:$0xf]
      %v2213 = vld [vmem:[%s1 + $0x8] sm:$0xf]
      %v2214 = vld [vmem:[%s1 + $0xc] sm:$0xf]
      %v2215 = vld [vmem:[%s1 + $0x10] sm:$0xf]
      %v2216 = vld [vmem:[%s1 + $0x14] sm:$0xf]
      %v2217 = vld [vmem:[%s1 + $0x18] sm:$0xf]
      %v2218 = vld [vmem:[%s1 + $0x1c] sm:$0xf]
      %v2219 = vld [vmem:[%s1 + $0x20] sm:$0xf]
      %v2220 = vld [vmem:[%s1 + $0x24] sm:$0xf]
      %v2221 = vld [vmem:[%s1 + $0x28] sm:$0xf]
      %v2222 = vld [vmem:[%s1 + $0x2c] sm:$0xf]
      %v2223 = vld [vmem:[%s1 + $0x30] sm:$0xf]
      %v2224 = vld [vmem:[%s1 + $0x34] sm:$0xf]
      %v2225 = vld [vmem:[%s1 + $0x38] sm:$0xf]
      %v2226 = vld [vmem:[%s1 + $0x3c] sm:$0xf]
      %v2227 = vld [vmem:[%s1 + $0x40] sm:$0xf]
      %v2228 = vld [vmem:[%s1 + $0x44] sm:$0xf]
      %v2229 = vld [vmem:[%s1 + $0x48] sm:$0xf]
      %v2230 = vld [vmem:[%s1 + $0x4c] sm:$0xf]
      %v2231 = vld [vmem:[%s1 + $0x50] sm:$0xf]
      %v2232 = vld [vmem:[%s1 + $0x54] sm:$0xf]
      %v2233 = vld [vmem:[%s1 + $0x58] sm:$0xf]
      %v2234 = vld [vmem:[%s1 + $0x5c] sm:$0xf]
      %v2235 = vld [vmem:[%s1 + $0x60] sm:$0xf]
      %v2236 = vld [vmem:[%s1 + $0x64] sm:$0xf]
      %v2237 = vld [vmem:[%s1 + $0x68] sm:$0xf]
      %v2238 = vld [vmem:[%s1 + $0x6c] sm:$0xf]
      %v2239 = vld [vmem:[%s1 + $0x70] sm:$0xf]
      %v2240 = vld [vmem:[%s1 + $0x74] sm:$0xf]
      %v2241 = vld [vmem:[%s1 + $0x78] sm:$0xf]
      %v2242 = vld [vmem:[%s1 + $0x7c] sm:$0xf]
      %v2243 = vld [vmem:[%s1 + $0x80] sm:$0xf]
      %v2244 = vld [vmem:[%s1 + $0x84] sm:$0xf]
      %v2245 = vld [vmem:[%s1 + $0x88] sm:$0xf]
      %v2246 = vld [vmem:[%s1 + $0x8c] sm:$0xf]
      %v2247 = vld [vmem:[%s1 + $0x90] sm:$0xf]
      %v2248 = vld [vmem:[%s1 + $0x94] sm:$0xf]
      %v2249 = vld [vmem:[%s1 + $0x98] sm:$0xf]
      %v2250 = vld [vmem:[%s1 + $0x9c] sm:$0xf]
      %v2251 = vld [vmem:[%s1 + $0xa0] sm:$0xf]
      %v2252 = vld [vmem:[%s1 + $0xa4] sm:$0xf]
      %v2253 = vld [vmem:[%s1 + $0xa8] sm:$0xf]
      %v2254 = vld [vmem:[%s1 + $0xac] sm:$0xf]
      %v2255 = vld [vmem:[%s1 + $0xb0] sm:$0xf]
      %v2256 = vld [vmem:[%s1 + $0xb4] sm:$0xf]
      %v2257 = vld [vmem:[%s1 + $0xb8] sm:$0xf]
      %v2258 = vld [vmem:[%s1 + $0xbc] sm:$0xf]
      %v2259 = vld [vmem:[%s1 + $0xc0] sm:$0xf]
      %v2260 = vld [vmem:[%s1 + $0xc4] sm:$0xf]
      %v2261 = vld [vmem:[%s1 + $0xc8] sm:$0xf]
      %v2262 = vld [vmem:[%s1 + $0xcc] sm:$0xf]
      %v2263 = vld [vmem:[%s1 + $0xd0] sm:$0xf]
      %v2264 = vld [vmem:[%s1 + $0xd4] sm:$0xf]
      %v2265 = vld [vmem:[%s1 + $0xd8] sm:$0xf]
      %v2266 = vld [vmem:[%s1 + $0xdc] sm:$0x1]
      %v2323 = vunpack.c.l.b16 %v2211
      %v2324 = vunpack.c.l.b16 %v2212
      %v2325 = vunpack.c.l.b16 %v2213
      %v2326 = vunpack.c.l.b16 %v2214
      %v2327 = vunpack.c.l.b16 %v2215
      %v2328 = vunpack.c.l.b16 %v2216
      %v2329 = vunpack.c.l.b16 %v2217
      %v2330 = vunpack.c.l.b16 %v2218
      %v2331 = vunpack.c.l.b16 %v2219
      %v2332 = vunpack.c.l.b16 %v2220
      %v2333 = vunpack.c.l.b16 %v2221
      %v2334 = vunpack.c.l.b16 %v2222
      %v2335 = vunpack.c.l.b16 %v2223
      %v2336 = vunpack.c.l.b16 %v2224
      %v2337 = vunpack.c.l.b16 %v2225
      %v2338 = vunpack.c.l.b16 %v2226
      %v2339 = vunpack.c.l.b16 %v2227
      %v2340 = vunpack.c.l.b16 %v2228
      %v2341 = vunpack.c.l.b16 %v2229
      %v2342 = vunpack.c.l.b16 %v2230
      %v2343 = vunpack.c.l.b16 %v2231
      %v2344 = vunpack.c.l.b16 %v2232
      %v2345 = vunpack.c.l.b16 %v2233
      %v2346 = vunpack.c.l.b16 %v2234
      %v2347 = vunpack.c.l.b16 %v2235
      %v2348 = vunpack.c.l.b16 %v2236
      %v2349 = vunpack.c.l.b16 %v2237
      %v2350 = vunpack.c.l.b16 %v2238
      %v2351 = vunpack.c.l.b16 %v2239
      %v2352 = vunpack.c.l.b16 %v2240
      %v2353 = vunpack.c.l.b16 %v2241
      %v2354 = vunpack.c.l.b16 %v2242
      %v2355 = vunpack.c.l.b16 %v2243
      %v2356 = vunpack.c.l.b16 %v2244
      %v2357 = vunpack.c.l.b16 %v2245
      %v2358 = vunpack.c.l.b16 %v2246
      %v2359 = vunpack.c.l.b16 %v2247
      %v2360 = vunpack.c.l.b16 %v2248
      %v2361 = vunpack.c.l.b16 %v2249
      %v2362 = vunpack.c.l.b16 %v2250
      %v2363 = vunpack.c.l.b16 %v2251
      %v2364 = vunpack.c.l.b16 %v2252
      %v2365 = vunpack.c.l.b16 %v2253
      %v2366 = vunpack.c.l.b16 %v2254
      %v2367 = vunpack.c.l.b16 %v2255
      %v2368 = vunpack.c.l.b16 %v2256
      %v2369 = vunpack.c.l.b16 %v2257
      %v2370 = vunpack.c.l.b16 %v2258
      %v2371 = vunpack.c.l.b16 %v2259
      %v2372 = vunpack.c.l.b16 %v2260
      %v2373 = vunpack.c.l.b16 %v2261
      %v2374 = vunpack.c.l.b16 %v2262
      %v2375 = vunpack.c.l.b16 %v2263
      %v2376 = vunpack.c.l.b16 %v2264
      %v2377 = vunpack.c.l.b16 %v2265
      %v2378 = vunpack.c.l.b16 %v2266
      %v2379 = vpack.c.b16 %v2324, %v2323
      %v2380 = vpack.c.b16 %v2326, %v2325
      %v2381 = vpack.c.b16 %v2328, %v2327
      %v2382 = vpack.c.b16 %v2330, %v2329
      %v2383 = vpack.c.b16 %v2332, %v2331
      %v2384 = vpack.c.b16 %v2334, %v2333
      %v2385 = vpack.c.b16 %v2336, %v2335
      %v2386 = vpack.c.b16 %v2338, %v2337
      %v2387 = vpack.c.b16 %v2340, %v2339
      %v2388 = vpack.c.b16 %v2342, %v2341
      %v2389 = vpack.c.b16 %v2344, %v2343
      %v2390 = vpack.c.b16 %v2346, %v2345
      %v2391 = vpack.c.b16 %v2348, %v2347
      %v2392 = vpack.c.b16 %v2350, %v2349
      %v2393 = vpack.c.b16 %v2352, %v2351
      %v2394 = vpack.c.b16 %v2354, %v2353
      %v2395 = vpack.c.b16 %v2356, %v2355
      %v2396 = vpack.c.b16 %v2358, %v2357
      %v2397 = vpack.c.b16 %v2360, %v2359
      %v2398 = vpack.c.b16 %v2362, %v2361
      %v2399 = vpack.c.b16 %v2364, %v2363
      %v2400 = vpack.c.b16 %v2366, %v2365
      %v2401 = vpack.c.b16 %v2368, %v2367
      %v2402 = vpack.c.b16 %v2370, %v2369
      %v2403 = vpack.c.b16 %v2372, %v2371
      %v2404 = vpack.c.b16 %v2374, %v2373
      %v2405 = vpack.c.b16 %v2376, %v2375
      %v2406 = vpack.c.b16 %v2378, %v2377
      %v2435 = vsel %vm630, %v2054, 0
      %v2438 = vsel %vm630, %v2058, 0
      %v2441 = vsel %vm630, %v2062, 0
      %v2444 = vsel %vm630, %v2066, 0
      %v2447 = vsel %vm630, %v2070, 0
      %v2450 = vsel %vm630, %v2074, 0
      %v2453 = vsel %vm630, %v2078, 0
      %v2456 = vsel %vm630, %v2082, 0
      %v2459 = vsel %vm630, %v2086, 0
      %v2462 = vsel %vm630, %v2090, 0
      %v2465 = vsel %vm630, %v2094, 0
      %v2468 = vsel %vm630, %v2098, 0
      %v2471 = vsel %vm630, %v2102, 0
      %v2474 = vsel %vm630, %v2106, 0
      %v2477 = vsel %vm630, %v2110, 0
      %v2480 = vsel %vm630, %v2114, 0
      %v2483 = vsel %vm630, %v2118, 0
      %v2486 = vsel %vm630, %v2122, 0
      %v2489 = vsel %vm630, %v2126, 0
      %v2492 = vsel %vm630, %v2130, 0
      %v2495 = vsel %vm630, %v2134, 0
      %v2498 = vsel %vm630, %v2138, 0
      %v2501 = vsel %vm630, %v2142, 0
      %v2504 = vsel %vm630, %v2146, 0
      %v2507 = vsel %vm630, %v2150, 0
      %v2510 = vsel %vm630, %v2154, 0
      %v2513 = vsel %vm630, %v2158, 0
      %v2516 = vsel %vm630, %v2162, 0
      %v2519 = vsel %vm630, %v2166, 0
      %v2522 = vsel %vm630, %v2170, 0
      %v2525 = vsel %vm630, %v2174, 0
      %v2528 = vsel %vm630, %v2178, 0
      %v2531 = vsel %vm630, %v2182, 0
      %v2534 = vsel %vm630, %v2186, 0
      %v2537 = vsel %vm630, %v2190, 0
      %v2540 = vsel %vm630, %v2194, 0
      %v2543 = vsel %vm630, %v2198, 0
      %v2546 = vsel %vm630, %v2202, 0
      %v2549 = vsel %vm630, %v2206, 0
      %v2552 = vsel %vm630, %v2210, 0
      %vm2554 = vcmask 1043456
      %vm2555 = vcmask 1044480
      %v2556 = vsel %vm2554, 4294967295, 65535
      %v2557 = vsel %vm2555, %v2556, 0
      %v2559 = vand.u32 %v2406, %v2557
      %2561 = vmatprep.subr.bf16.mxu0 0
      %2562 = vmatpush1.bf16.msra.mxu0 %v2379
      %2563 = vmatprep.subr.bf16.mxu0 0
      %2564 = vmatpush1.bf16.msra.mxu0 %v2380
      %2565 = vmatprep.subr.bf16.mxu0 0
      %2566 = vmatpush1.bf16.msra.mxu0 %v2381
      %2567 = vmatprep.subr.bf16.mxu0 0
      %2568 = vmatpush1.bf16.msra.mxu0 %v2382
      %2569 = vmatprep.subr.bf16.mxu0 0
      %2570 = vmatpush1.bf16.msra.mxu0 %v2383
      %2571 = vmatprep.subr.bf16.mxu0 0
      %2572 = vmatpush1.bf16.msra.mxu0 %v2384
      %2573 = vmatprep.subr.bf16.mxu0 0
      %2574 = vmatpush1.bf16.msra.mxu0 %v2385
      %2575 = vmatprep.subr.bf16.mxu0 0
      %2576 = vmatpush1.bf16.msra.mxu0 %v2386
      %2577 = vmatprep.subr.bf16.mxu0 0
      %2578 = vmatpush1.bf16.msra.mxu0 %v2387
      %2579 = vmatprep.subr.bf16.mxu0 0
      %2580 = vmatpush1.bf16.msra.mxu0 %v2388
      %2581 = vmatprep.subr.bf16.mxu0 0
      %2582 = vmatpush1.bf16.msra.mxu0 %v2389
      %2583 = vmatprep.subr.bf16.mxu0 0
      %2584 = vmatpush1.bf16.msra.mxu0 %v2390
      %2585 = vmatprep.subr.bf16.mxu0 0
      %2586 = vmatpush1.bf16.msra.mxu0 %v2391
      %2587 = vmatprep.subr.bf16.mxu0 0
      %2588 = vmatpush1.bf16.msra.mxu0 %v2392
      %2589 = vmatprep.subr.bf16.mxu0 0
      %2590 = vmatpush1.bf16.msra.mxu0 %v2393
      %2591 = vmatprep.subr.bf16.mxu0 0
      %2592 = vmatpush1.bf16.msra.mxu0 %v2394
      %2593 = vmatprep.mubr.bf16.mxu0 %v2052
      %2594 = vmatmul.mubr.bf16.gmra.mrb[0].mxu0 %v2051
      %v2595 = vpop.f32.mrb[0].mxu0
      %v2596 = vadd.f32 0.0, %v2595
      %v2597 = vpop.f32.mrb[0].mxu0
      %v2598 = vpop.f32.mrb[0].mxu0
      %v2599 = vadd.f32 0.0, %v2598
      %v2600 = vpop.f32.mrb[0].mxu0
      %2601 = vmatprep.mubr.bf16.mxu0 %v2056
      %2602 = vmatmul.mubr.bf16.gmra.mrb[0].mxu0 %v2055
      %v2603 = vpop.f32.mrb[0].mxu0
      %v2604 = vadd.f32 0.0, %v2603
      %v2605 = vpop.f32.mrb[0].mxu0
      %v2606 = vpop.f32.mrb[0].mxu0
      %v2607 = vadd.f32 0.0, %v2606
      %v2608 = vpop.f32.mrb[0].mxu0
      %2609 = vmatprep.mubr.bf16.mxu0 %v2060
      %2610 = vmatmul.mubr.bf16.gmra.mrb[0].mxu0 %v2059
      %v2611 = vpop.f32.mrb[0].mxu0
      %v2612 = vadd.f32 0.0, %v2611
      %v2613 = vpop.f32.mrb[0].mxu0
      %v2614 = vpop.f32.mrb[0].mxu0
      %v2615 = vadd.f32 0.0, %v2614
      %v2616 = vpop.f32.mrb[0].mxu0
      %2617 = vmatprep.mubr.bf16.mxu0 %v2064
      %2618 = vmatmul.mubr.bf16.gmra.mrb[0].mxu0 %v2063
      %v2619 = vpop.f32.mrb[0].mxu0
      %v2620 = vadd.f32 0.0, %v2619
      %v2621 = vpop.f32.mrb[0].mxu0
      %v2622 = vpop.f32.mrb[0].mxu0
      %v2623 = vadd.f32 0.0, %v2622
      %v2624 = vpop.f32.mrb[0].mxu0
      %2625 = vmatprep.mubr.bf16.mxu0 %v2068
      %2626 = vmatmul.mubr.bf16.gmra.mrb[0].mxu0 %v2067
      %v2627 = vpop.f32.mrb[0].mxu0
      %v2628 = vadd.f32 0.0, %v2627
      %v2629 = vpop.f32.mrb[0].mxu0
      %v2630 = vpop.f32.mrb[0].mxu0
      %v2631 = vadd.f32 0.0, %v2630
      %v2632 = vpop.f32.mrb[0].mxu0
      %2633 = vmatprep.mubr.bf16.mxu0 %v2072
      %2634 = vmatmul.mubr.bf16.gmra.mrb[0].mxu0 %v2071
      %v2635 = vpop.f32.mrb[0].mxu0
      %v2636 = vadd.f32 0.0, %v2635
      %v2637 = vpop.f32.mrb[0].mxu0
      %v2638 = vpop.f32.mrb[0].mxu0
      %v2639 = vadd.f32 0.0, %v2638
      %v2640 = vpop.f32.mrb[0].mxu0
      %2641 = vmatprep.mubr.bf16.mxu0 %v2076
      %2642 = vmatmul.mubr.bf16.gmra.mrb[0].mxu0 %v2075
      %v2643 = vpop.f32.mrb[0].mxu0
      %v2644 = vadd.f32 0.0, %v2643
      %v2645 = vpop.f32.mrb[0].mxu0
      %v2646 = vpop.f32.mrb[0].mxu0
      %v2647 = vadd.f32 0.0, %v2646
      %v2648 = vpop.f32.mrb[0].mxu0
      %2649 = vmatprep.mubr.bf16.mxu0 %v2080
      %2650 = vmatmul.mubr.bf16.gmra.mrb[0].mxu0 %v2079
      %v2651 = vpop.f32.mrb[0].mxu0
      %v2652 = vadd.f32 0.0, %v2651
      %v2653 = vpop.f32.mrb[0].mxu0
      %v2654 = vpop.f32.mrb[0].mxu0
      %v2655 = vadd.f32 0.0, %v2654
      %v2656 = vpop.f32.mrb[0].mxu0
      %2657 = vmatprep.mubr.bf16.mxu0 %v2084
      %2658 = vmatmul.mubr.bf16.gmra.mrb[0].mxu0 %v2083
      %v2659 = vpop.f32.mrb[0].mxu0
      %v2660 = vadd.f32 0.0, %v2659
      %v2661 = vpop.f32.mrb[0].mxu0
      %v2662 = vpop.f32.mrb[0].mxu0
      %v2663 = vadd.f32 0.0, %v2662
      %v2664 = vpop.f32.mrb[0].mxu0
      %2665 = vmatprep.mubr.bf16.mxu0 %v2088
      %2666 = vmatmul.mubr.bf16.gmra.mrb[0].mxu0 %v2087
      %v2667 = vpop.f32.mrb[0].mxu0
      %v2668 = vadd.f32 0.0, %v2667
      %v2669 = vpop.f32.mrb[0].mxu0
      %v2670 = vpop.f32.mrb[0].mxu0
      %v2671 = vadd.f32 0.0, %v2670
      %v2672 = vpop.f32.mrb[0].mxu0
      %2673 = vmatprep.mubr.bf16.mxu0 %v2092
      %2674 = vmatmul.mubr.bf16.gmra.mrb[0].mxu0 %v2091
      %v2675 = vpop.f32.mrb[0].mxu0
      %v2676 = vadd.f32 0.0, %v2675
      %v2677 = vpop.f32.mrb[0].mxu0
      %v2678 = vpop.f32.mrb[0].mxu0
      %v2679 = vadd.f32 0.0, %v2678
      %v2680 = vpop.f32.mrb[0].mxu0
      %2681 = vmatprep.mubr.bf16.mxu0 %v2096
      %2682 = vmatmul.mubr.bf16.gmra.mrb[0].mxu0 %v2095
      %v2683 = vpop.f32.mrb[0].mxu0
      %v2684 = vadd.f32 0.0, %v2683
      %v2685 = vpop.f32.mrb[0].mxu0
      %v2686 = vpop.f32.mrb[0].mxu0
      %v2687 = vadd.f32 0.0, %v2686
      %v2688 = vpop.f32.mrb[0].mxu0
      %2689 = vmatprep.mubr.bf16.mxu0 %v2100
      %2690 = vmatmul.mubr.bf16.gmra.mrb[0].mxu0 %v2099
      %v2691 = vpop.f32.mrb[0].mxu0
      %v2692 = vadd.f32 0.0, %v2691
      %v2693 = vpop.f32.mrb[0].mxu0
      %v2694 = vpop.f32.mrb[0].mxu0
      %v2695 = vadd.f32 0.0, %v2694
      %v2696 = vpop.f32.mrb[0].mxu0
      %2697 = vmatprep.mubr.bf16.mxu0 %v2104
      %2698 = vmatmul.mubr.bf16.gmra.mrb[0].mxu0 %v2103
      %v2699 = vpop.f32.mrb[0].mxu0
      %v2700 = vadd.f32 0.0, %v2699
      %v2701 = vpop.f32.mrb[0].mxu0
      %v2702 = vpop.f32.mrb[0].mxu0
      %v2703 = vadd.f32 0.0, %v2702
      %v2704 = vpop.f32.mrb[0].mxu0
      %2705 = vmatprep.mubr.bf16.mxu0 %v2108
      %2706 = vmatmul.mubr.bf16.gmra.mrb[0].mxu0 %v2107
      %v2707 = vpop.f32.mrb[0].mxu0
      %v2708 = vadd.f32 0.0, %v2707
      %v2709 = vpop.f32.mrb[0].mxu0
      %v2710 = vpop.f32.mrb[0].mxu0
      %v2711 = vadd.f32 0.0, %v2710
      %v2712 = vpop.f32.mrb[0].mxu0
      %2713 = vmatprep.mubr.bf16.mxu0 %v2112
      %2714 = vmatmul.mubr.bf16.gmra.mrb[0].mxu0 %v2111
      %v2715 = vpop.f32.mrb[0].mxu0
      %v2716 = vadd.f32 0.0, %v2715
      %v2717 = vpop.f32.mrb[0].mxu0
      %v2718 = vpop.f32.mrb[0].mxu0
      %v2719 = vadd.f32 0.0, %v2718
      %v2720 = vpop.f32.mrb[0].mxu0
      %2721 = vmatprep.mubr.bf16.mxu0 %v2116
      %2722 = vmatmul.mubr.bf16.gmra.mrb[0].mxu0 %v2115
      %v2723 = vpop.f32.mrb[0].mxu0
      %v2724 = vadd.f32 0.0, %v2723
      %v2725 = vpop.f32.mrb[0].mxu0
      %v2726 = vpop.f32.mrb[0].mxu0
      %v2727 = vadd.f32 0.0, %v2726
      %v2728 = vpop.f32.mrb[0].mxu0
      %2729 = vmatprep.mubr.bf16.mxu0 %v2120
      %2730 = vmatmul.mubr.bf16.gmra.mrb[0].mxu0 %v2119
      %v2731 = vpop.f32.mrb[0].mxu0
      %v2732 = vadd.f32 0.0, %v2731
      %v2733 = vpop.f32.mrb[0].mxu0
      %v2734 = vpop.f32.mrb[0].mxu0
      %v2735 = vadd.f32 0.0, %v2734
      %v2736 = vpop.f32.mrb[0].mxu0
      %2737 = vmatprep.mubr.bf16.mxu0 %v2124
      %2738 = vmatmul.mubr.bf16.gmra.mrb[0].mxu0 %v2123
      %v2739 = vpop.f32.mrb[0].mxu0
      %v2740 = vadd.f32 0.0, %v2739
      %v2741 = vpop.f32.mrb[0].mxu0
      %v2742 = vpop.f32.mrb[0].mxu0
      %v2743 = vadd.f32 0.0, %v2742
      %v2744 = vpop.f32.mrb[0].mxu0
      %2745 = vmatprep.mubr.bf16.mxu0 %v2128
      %2746 = vmatmul.mubr.bf16.gmra.mrb[0].mxu0 %v2127
      %v2747 = vpop.f32.mrb[0].mxu0
      %v2748 = vadd.f32 0.0, %v2747
      %v2749 = vpop.f32.mrb[0].mxu0
      %v2750 = vpop.f32.mrb[0].mxu0
      %v2751 = vadd.f32 0.0, %v2750
      %v2752 = vpop.f32.mrb[0].mxu0
      %2753 = vmatprep.mubr.bf16.mxu0 %v2132
      %2754 = vmatmul.mubr.bf16.gmra.mrb[0].mxu0 %v2131
      %v2755 = vpop.f32.mrb[0].mxu0
      %v2756 = vadd.f32 0.0, %v2755
      %v2757 = vpop.f32.mrb[0].mxu0
      %v2758 = vpop.f32.mrb[0].mxu0
      %v2759 = vadd.f32 0.0, %v2758
      %v2760 = vpop.f32.mrb[0].mxu0
      %2761 = vmatprep.mubr.bf16.mxu0 %v2136
      %2762 = vmatmul.mubr.bf16.gmra.mrb[0].mxu0 %v2135
      %v2763 = vpop.f32.mrb[0].mxu0
      %v2764 = vadd.f32 0.0, %v2763
      %v2765 = vpop.f32.mrb[0].mxu0
      %v2766 = vpop.f32.mrb[0].mxu0
      %v2767 = vadd.f32 0.0, %v2766
      %v2768 = vpop.f32.mrb[0].mxu0
      %2769 = vmatprep.mubr.bf16.mxu0 %v2140
      %2770 = vmatmul.mubr.bf16.gmra.mrb[0].mxu0 %v2139
      %v2771 = vpop.f32.mrb[0].mxu0
      %v2772 = vadd.f32 0.0, %v2771
      %v2773 = vpop.f32.mrb[0].mxu0
      %v2774 = vpop.f32.mrb[0].mxu0
      %v2775 = vadd.f32 0.0, %v2774
      %v2776 = vpop.f32.mrb[0].mxu0
      %2777 = vmatprep.mubr.bf16.mxu0 %v2144
      %2778 = vmatmul.mubr.bf16.gmra.mrb[0].mxu0 %v2143
      %v2779 = vpop.f32.mrb[0].mxu0
      %v2780 = vadd.f32 0.0, %v2779
      %v2781 = vpop.f32.mrb[0].mxu0
      %v2782 = vpop.f32.mrb[0].mxu0
      %v2783 = vadd.f32 0.0, %v2782
      %v2784 = vpop.f32.mrb[0].mxu0
      %2785 = vmatprep.mubr.bf16.mxu0 %v2148
      %2786 = vmatmul.mubr.bf16.gmra.mrb[0].mxu0 %v2147
      %v2787 = vpop.f32.mrb[0].mxu0
      %v2788 = vadd.f32 0.0, %v2787
      %v2789 = vpop.f32.mrb[0].mxu0
      %v2790 = vpop.f32.mrb[0].mxu0
      %v2791 = vadd.f32 0.0, %v2790
      %v2792 = vpop.f32.mrb[0].mxu0
      %2793 = vmatprep.mubr.bf16.mxu0 %v2152
      %2794 = vmatmul.mubr.bf16.gmra.mrb[0].mxu0 %v2151
      %v2795 = vpop.f32.mrb[0].mxu0
      %v2796 = vadd.f32 0.0, %v2795
      %v2797 = vpop.f32.mrb[0].mxu0
      %v2798 = vpop.f32.mrb[0].mxu0
      %v2799 = vadd.f32 0.0, %v2798
      %v2800 = vpop.f32.mrb[0].mxu0
      %2801 = vmatprep.mubr.bf16.mxu0 %v2156
      %2802 = vmatmul.mubr.bf16.gmra.mrb[0].mxu0 %v2155
      %v2803 = vpop.f32.mrb[0].mxu0
      %v2804 = vadd.f32 0.0, %v2803
      %v2805 = vpop.f32.mrb[0].mxu0
      %v2806 = vpop.f32.mrb[0].mxu0
      %v2807 = vadd.f32 0.0, %v2806
      %v2808 = vpop.f32.mrb[0].mxu0
      %2809 = vmatprep.mubr.bf16.mxu0 %v2160
      %2810 = vmatmul.mubr.bf16.gmra.mrb[0].mxu0 %v2159
      %v2811 = vpop.f32.mrb[0].mxu0
      %v2812 = vadd.f32 0.0, %v2811
      %v2813 = vpop.f32.mrb[0].mxu0
      %v2814 = vpop.f32.mrb[0].mxu0
      %v2815 = vadd.f32 0.0, %v2814
      %v2816 = vpop.f32.mrb[0].mxu0
      %2817 = vmatprep.mubr.bf16.mxu0 %v2164
      %2818 = vmatmul.mubr.bf16.gmra.mrb[0].mxu0 %v2163
      %v2819 = vpop.f32.mrb[0].mxu0
      %v2820 = vadd.f32 0.0, %v2819
      %v2821 = vpop.f32.mrb[0].mxu0
      %v2822 = vpop.f32.mrb[0].mxu0
      %v2823 = vadd.f32 0.0, %v2822
      %v2824 = vpop.f32.mrb[0].mxu0
      %2825 = vmatprep.mubr.bf16.mxu0 %v2168
      %2826 = vmatmul.mubr.bf16.gmra.mrb[0].mxu0 %v2167
      %v2827 = vpop.f32.mrb[0].mxu0
      %v2828 = vadd.f32 0.0, %v2827
      %v2829 = vpop.f32.mrb[0].mxu0
      %v2830 = vpop.f32.mrb[0].mxu0
      %v2831 = vadd.f32 0.0, %v2830
      %v2832 = vpop.f32.mrb[0].mxu0
      %2833 = vmatprep.mubr.bf16.mxu0 %v2172
      %2834 = vmatmul.mubr.bf16.gmra.mrb[0].mxu0 %v2171
      %v2835 = vpop.f32.mrb[0].mxu0
      %v2836 = vadd.f32 0.0, %v2835
      %v2837 = vpop.f32.mrb[0].mxu0
      %v2838 = vpop.f32.mrb[0].mxu0
      %v2839 = vadd.f32 0.0, %v2838
      %v2840 = vpop.f32.mrb[0].mxu0
      %2841 = vmatprep.mubr.bf16.mxu0 %v2176
      %2842 = vmatmul.mubr.bf16.gmra.mrb[0].mxu0 %v2175
      %v2843 = vpop.f32.mrb[0].mxu0
      %v2844 = vadd.f32 0.0, %v2843
      %v2845 = vpop.f32.mrb[0].mxu0
      %v2846 = vpop.f32.mrb[0].mxu0
      %v2847 = vadd.f32 0.0, %v2846
      %v2848 = vpop.f32.mrb[0].mxu0
      %2849 = vmatprep.mubr.bf16.mxu0 %v2180
      %2850 = vmatmul.mubr.bf16.gmra.mrb[0].mxu0 %v2179
      %v2851 = vpop.f32.mrb[0].mxu0
      %v2852 = vadd.f32 0.0, %v2851
      %v2853 = vpop.f32.mrb[0].mxu0
      %v2854 = vpop.f32.mrb[0].mxu0
      %v2855 = vadd.f32 0.0, %v2854
      %v2856 = vpop.f32.mrb[0].mxu0
      %2857 = vmatprep.mubr.bf16.mxu0 %v2184
      %2858 = vmatmul.mubr.bf16.gmra.mrb[0].mxu0 %v2183
      %v2859 = vpop.f32.mrb[0].mxu0
      %v2860 = vadd.f32 0.0, %v2859
      %v2861 = vpop.f32.mrb[0].mxu0
      %v2862 = vpop.f32.mrb[0].mxu0
      %v2863 = vadd.f32 0.0, %v2862
      %v2864 = vpop.f32.mrb[0].mxu0
      %2865 = vmatprep.mubr.bf16.mxu0 %v2188
      %2866 = vmatmul.mubr.bf16.gmra.mrb[0].mxu0 %v2187
      %v2867 = vpop.f32.mrb[0].mxu0
      %v2868 = vadd.f32 0.0, %v2867
      %v2869 = vpop.f32.mrb[0].mxu0
      %v2870 = vpop.f32.mrb[0].mxu0
      %v2871 = vadd.f32 0.0, %v2870
      %v2872 = vpop.f32.mrb[0].mxu0
      %2873 = vmatprep.mubr.bf16.mxu0 %v2192
      %2874 = vmatmul.mubr.bf16.gmra.mrb[0].mxu0 %v2191
      %v2875 = vpop.f32.mrb[0].mxu0
      %v2876 = vadd.f32 0.0, %v2875
      %v2877 = vpop.f32.mrb[0].mxu0
      %v2878 = vpop.f32.mrb[0].mxu0
      %v2879 = vadd.f32 0.0, %v2878
      %v2880 = vpop.f32.mrb[0].mxu0
      %2881 = vmatprep.mubr.bf16.mxu0 %v2196
      %2882 = vmatmul.mubr.bf16.gmra.mrb[0].mxu0 %v2195
      %v2883 = vpop.f32.mrb[0].mxu0
      %v2884 = vadd.f32 0.0, %v2883
      %v2885 = vpop.f32.mrb[0].mxu0
      %v2886 = vpop.f32.mrb[0].mxu0
      %v2887 = vadd.f32 0.0, %v2886
      %v2888 = vpop.f32.mrb[0].mxu0
      %2889 = vmatprep.mubr.bf16.mxu0 %v2200
      %2890 = vmatmul.mubr.bf16.gmra.mrb[0].mxu0 %v2199
      %v2891 = vpop.f32.mrb[0].mxu0
      %v2892 = vadd.f32 0.0, %v2891
      %v2893 = vpop.f32.mrb[0].mxu0
      %v2894 = vpop.f32.mrb[0].mxu0
      %v2895 = vadd.f32 0.0, %v2894
      %v2896 = vpop.f32.mrb[0].mxu0
      %2897 = vmatprep.mubr.bf16.mxu0 %v2204
      %2898 = vmatmul.mubr.bf16.gmra.mrb[0].mxu0 %v2203
      %v2899 = vpop.f32.mrb[0].mxu0
      %v2900 = vadd.f32 0.0, %v2899
      %v2901 = vpop.f32.mrb[0].mxu0
      %v2902 = vpop.f32.mrb[0].mxu0
      %v2903 = vadd.f32 0.0, %v2902
      %v2904 = vpop.f32.mrb[0].mxu0
      %2905 = vmatprep.mubr.bf16.mxu0 %v2208
      %2906 = vmatmul.mubr.bf16.gmra.mrb[0].mxu0 %v2207
      %v2907 = vpop.f32.mrb[0].mxu0
      %v2908 = vadd.f32 0.0, %v2907
      %v2909 = vpop.f32.mrb[0].mxu0
      %v2910 = vpop.f32.mrb[0].mxu0
      %v2911 = vpop.f32.mrb[0].mxu0
      %2912 = vdwg.mxu0
      %2913 = vmatprep.subr.bf16.mxu0 0
      %2914 = vmatpush1.bf16.msra.mxu0 %v2395
      %2915 = vmatprep.subr.bf16.mxu0 0
      %2916 = vmatpush1.bf16.msra.mxu0 %v2396
      %2917 = vmatprep.subr.bf16.mxu0 0
      %2918 = vmatpush1.bf16.msra.mxu0 %v2397
      %2919 = vmatprep.subr.bf16.mxu0 0
      %2920 = vmatpush1.bf16.msra.mxu0 %v2398
      %2921 = vmatprep.subr.bf16.mxu0 0
      %2922 = vmatpush1.bf16.msra.mxu0 %v2399
      %2923 = vmatprep.subr.bf16.mxu0 0
      %2924 = vmatpush1.bf16.msra.mxu0 %v2400
      %2925 = vmatprep.subr.bf16.mxu0 0
      %2926 = vmatpush1.bf16.msra.mxu0 %v2401
      %2927 = vmatprep.subr.bf16.mxu0 0
      %2928 = vmatpush1.bf16.msra.mxu0 %v2402
      %2929 = vmatprep.subr.bf16.mxu0 0
      %2930 = vmatpush1.bf16.msra.mxu0 %v2403
      %2931 = vmatprep.subr.bf16.mxu0 0
      %2932 = vmatpush1.bf16.msra.mxu0 %v2404
      %2933 = vmatprep.subr.bf16.mxu0 0
      %2934 = vmatpush1.bf16.msra.mxu0 %v2405
      %2935 = vmatprep.subr.bf16.mxu0 0
      %2936 = vmatpush1.bf16.msra.mxu0 %v2559
      %2937 = vmatprep.subr.bf16.mxu0 0
      %2938 = vmatpush1.bf16.msra.mxu0 0
      %2939 = vmatprep.subr.bf16.mxu0 0
      %2940 = vmatpush1.bf16.msra.mxu0 0
      %2941 = vmatprep.subr.bf16.mxu0 0
      %2942 = vmatpush1.bf16.msra.mxu0 0
      %2943 = vmatprep.subr.bf16.mxu0 0
      %2944 = vmatpush1.bf16.msra.mxu0 0
      %2945 = vmatprep.mubr.bf16.mxu0 %v2435
      %2946 = vmatmul.mubr.bf16.gmra.mrb[0].mxu0 %v2053
      %v2947 = vpop.f32.mrb[0].mxu0
      %v2948 = vadd.f32 %v2596, %v2947
      %v2949 = vpop.f32.mrb[0].mxu0
      %v2950 = vpop.f32.mrb[0].mxu0
      %v2951 = vadd.f32 %v2599, %v2950
      %v2952 = vpop.f32.mrb[0].mxu0
      %2953 = vmatprep.mubr.bf16.mxu0 %v2438
      %2954 = vmatmul.mubr.bf16.gmra.mrb[0].mxu0 %v2057
      %v2955 = vpop.f32.mrb[0].mxu0
      %v2956 = vadd.f32 %v2604, %v2955
      %v2957 = vpop.f32.mrb[0].mxu0
      %v2958 = vpop.f32.mrb[0].mxu0
      %v2959 = vadd.f32 %v2607, %v2958
      %v2960 = vpop.f32.mrb[0].mxu0
      %2961 = vmatprep.mubr.bf16.mxu0 %v2441
      %2962 = vmatmul.mubr.bf16.gmra.mrb[0].mxu0 %v2061
      %v2963 = vpop.f32.mrb[0].mxu0
      %v2964 = vadd.f32 %v2612, %v2963
      %v2965 = vpop.f32.mrb[0].mxu0
      %v2966 = vpop.f32.mrb[0].mxu0
      %v2967 = vadd.f32 %v2615, %v2966
      %v2968 = vpop.f32.mrb[0].mxu0
      %2969 = vmatprep.mubr.bf16.mxu0 %v2444
      %2970 = vmatmul.mubr.bf16.gmra.mrb[0].mxu0 %v2065
      %v2971 = vpop.f32.mrb[0].mxu0
      %v2972 = vadd.f32 %v2620, %v2971
      %v2973 = vpop.f32.mrb[0].mxu0
      %v2974 = vpop.f32.mrb[0].mxu0
      %v2975 = vadd.f32 %v2623, %v2974
      %v2976 = vpop.f32.mrb[0].mxu0
      %2977 = vmatprep.mubr.bf16.mxu0 %v2447
      %2978 = vmatmul.mubr.bf16.gmra.mrb[0].mxu0 %v2069
      %v2979 = vpop.f32.mrb[0].mxu0
      %v2980 = vadd.f32 %v2628, %v2979
      %v2981 = vpop.f32.mrb[0].mxu0
      %v2982 = vpop.f32.mrb[0].mxu0
      %v2983 = vadd.f32 %v2631, %v2982
      %v2984 = vpop.f32.mrb[0].mxu0
      %2985 = vmatprep.mubr.bf16.mxu0 %v2450
      %2986 = vmatmul.mubr.bf16.gmra.mrb[0].mxu0 %v2073
      %v2987 = vpop.f32.mrb[0].mxu0
      %v2988 = vadd.f32 %v2636, %v2987
      %v2989 = vpop.f32.mrb[0].mxu0
      %v2990 = vpop.f32.mrb[0].mxu0
      %v2991 = vadd.f32 %v2639, %v2990
      %v2992 = vpop.f32.mrb[0].mxu0
      %2993 = vmatprep.mubr.bf16.mxu0 %v2453
      %2994 = vmatmul.mubr.bf16.gmra.mrb[0].mxu0 %v2077
      %v2995 = vpop.f32.mrb[0].mxu0
      %v2996 = vadd.f32 %v2644, %v2995
      %v2997 = vpop.f32.mrb[0].mxu0
      %v2998 = vpop.f32.mrb[0].mxu0
      %v2999 = vadd.f32 %v2647, %v2998
      %v3000 = vpop.f32.mrb[0].mxu0
      %3001 = vmatprep.mubr.bf16.mxu0 %v2456
      %3002 = vmatmul.mubr.bf16.gmra.mrb[0].mxu0 %v2081
      %v3003 = vpop.f32.mrb[0].mxu0
      %v3004 = vadd.f32 %v2652, %v3003
      %v3005 = vpop.f32.mrb[0].mxu0
      %v3006 = vpop.f32.mrb[0].mxu0
      %v3007 = vadd.f32 %v2655, %v3006
      %v3008 = vpop.f32.mrb[0].mxu0
      %3009 = vmatprep.mubr.bf16.mxu0 %v2459
      %3010 = vmatmul.mubr.bf16.gmra.mrb[0].mxu0 %v2085
      %v3011 = vpop.f32.mrb[0].mxu0
      %v3012 = vadd.f32 %v2660, %v3011
      %v3013 = vpop.f32.mrb[0].mxu0
      %v3014 = vpop.f32.mrb[0].mxu0
      %v3015 = vadd.f32 %v2663, %v3014
      %v3016 = vpop.f32.mrb[0].mxu0
      %3017 = vmatprep.mubr.bf16.mxu0 %v2462
      %3018 = vmatmul.mubr.bf16.gmra.mrb[0].mxu0 %v2089
      %v3019 = vpop.f32.mrb[0].mxu0
      %v3020 = vadd.f32 %v2668, %v3019
      %v3021 = vpop.f32.mrb[0].mxu0
      %v3022 = vpop.f32.mrb[0].mxu0
      %v3023 = vadd.f32 %v2671, %v3022
      %v3024 = vpop.f32.mrb[0].mxu0
      %3025 = vmatprep.mubr.bf16.mxu0 %v2465
      %3026 = vmatmul.mubr.bf16.gmra.mrb[0].mxu0 %v2093
      %v3027 = vpop.f32.mrb[0].mxu0
      %v3028 = vadd.f32 %v2676, %v3027
      %v3029 = vpop.f32.mrb[0].mxu0
      %v3030 = vpop.f32.mrb[0].mxu0
      %v3031 = vadd.f32 %v2679, %v3030
      %v3032 = vpop.f32.mrb[0].mxu0
      %3033 = vmatprep.mubr.bf16.mxu0 %v2468
      %3034 = vmatmul.mubr.bf16.gmra.mrb[0].mxu0 %v2097
      %v3035 = vpop.f32.mrb[0].mxu0
      %v3036 = vadd.f32 %v2684, %v3035
      %v3037 = vpop.f32.mrb[0].mxu0
      %v3038 = vpop.f32.mrb[0].mxu0
      %v3039 = vadd.f32 %v2687, %v3038
      %v3040 = vpop.f32.mrb[0].mxu0
      %3041 = vmatprep.mubr.bf16.mxu0 %v2471
      %3042 = vmatmul.mubr.bf16.gmra.mrb[0].mxu0 %v2101
      %v3043 = vpop.f32.mrb[0].mxu0
      %v3044 = vadd.f32 %v2692, %v3043
      %v3045 = vpop.f32.mrb[0].mxu0
      %v3046 = vpop.f32.mrb[0].mxu0
      %v3047 = vadd.f32 %v2695, %v3046
      %v3048 = vpop.f32.mrb[0].mxu0
      %3049 = vmatprep.mubr.bf16.mxu0 %v2474
      %3050 = vmatmul.mubr.bf16.gmra.mrb[0].mxu0 %v2105
      %v3051 = vpop.f32.mrb[0].mxu0
      %v3052 = vadd.f32 %v2700, %v3051
      %v3053 = vpop.f32.mrb[0].mxu0
      %v3054 = vpop.f32.mrb[0].mxu0
      %v3055 = vadd.f32 %v2703, %v3054
      %v3056 = vpop.f32.mrb[0].mxu0
      %3057 = vmatprep.mubr.bf16.mxu0 %v2477
      %3058 = vmatmul.mubr.bf16.gmra.mrb[0].mxu0 %v2109
      %v3059 = vpop.f32.mrb[0].mxu0
      %v3060 = vadd.f32 %v2708, %v3059
      %v3061 = vpop.f32.mrb[0].mxu0
      %v3062 = vpop.f32.mrb[0].mxu0
      %v3063 = vadd.f32 %v2711, %v3062
      %v3064 = vpop.f32.mrb[0].mxu0
      %3065 = vmatprep.mubr.bf16.mxu0 %v2480
      %3066 = vmatmul.mubr.bf16.gmra.mrb[0].mxu0 %v2113
      %v3067 = vpop.f32.mrb[0].mxu0
      %v3068 = vadd.f32 %v2716, %v3067
      %v3069 = vpop.f32.mrb[0].mxu0
      %v3070 = vpop.f32.mrb[0].mxu0
      %v3071 = vadd.f32 %v2719, %v3070
      %v3072 = vpop.f32.mrb[0].mxu0
      %3073 = vmatprep.mubr.bf16.mxu0 %v2483
      %3074 = vmatmul.mubr.bf16.gmra.mrb[0].mxu0 %v2117
      %v3075 = vpop.f32.mrb[0].mxu0
      %v3076 = vadd.f32 %v2724, %v3075
      %v3077 = vpop.f32.mrb[0].mxu0
      %v3078 = vpop.f32.mrb[0].mxu0
      %v3079 = vadd.f32 %v2727, %v3078
      %v3080 = vpop.f32.mrb[0].mxu0
      %3081 = vmatprep.mubr.bf16.mxu0 %v2486
      %3082 = vmatmul.mubr.bf16.gmra.mrb[0].mxu0 %v2121
      %v3083 = vpop.f32.mrb[0].mxu0
      %v3084 = vadd.f32 %v2732, %v3083
      %v3085 = vpop.f32.mrb[0].mxu0
      %v3086 = vpop.f32.mrb[0].mxu0
      %v3087 = vadd.f32 %v2735, %v3086
      %v3088 = vpop.f32.mrb[0].mxu0
      %3089 = vmatprep.mubr.bf16.mxu0 %v2489
      %3090 = vmatmul.mubr.bf16.gmra.mrb[0].mxu0 %v2125
      %v3091 = vpop.f32.mrb[0].mxu0
      %v3092 = vadd.f32 %v2740, %v3091
      %v3093 = vpop.f32.mrb[0].mxu0
      %v3094 = vpop.f32.mrb[0].mxu0
      %v3095 = vadd.f32 %v2743, %v3094
      %v3096 = vpop.f32.mrb[0].mxu0
      %3097 = vmatprep.mubr.bf16.mxu0 %v2492
      %3098 = vmatmul.mubr.bf16.gmra.mrb[0].mxu0 %v2129
      %v3099 = vpop.f32.mrb[0].mxu0
      %v3100 = vadd.f32 %v2748, %v3099
      %v3101 = vpop.f32.mrb[0].mxu0
      %v3102 = vpop.f32.mrb[0].mxu0
      %v3103 = vadd.f32 %v2751, %v3102
      %v3104 = vpop.f32.mrb[0].mxu0
      %3105 = vmatprep.mubr.bf16.mxu0 %v2495
      %3106 = vmatmul.mubr.bf16.gmra.mrb[0].mxu0 %v2133
      %v3107 = vpop.f32.mrb[0].mxu0
      %v3108 = vadd.f32 %v2756, %v3107
      %v3109 = vpop.f32.mrb[0].mxu0
      %v3110 = vpop.f32.mrb[0].mxu0
      %v3111 = vadd.f32 %v2759, %v3110
      %v3112 = vpop.f32.mrb[0].mxu0
      %3113 = vmatprep.mubr.bf16.mxu0 %v2498
      %3114 = vmatmul.mubr.bf16.gmra.mrb[0].mxu0 %v2137
      %v3115 = vpop.f32.mrb[0].mxu0
      %v3116 = vadd.f32 %v2764, %v3115
      %v3117 = vpop.f32.mrb[0].mxu0
      %v3118 = vpop.f32.mrb[0].mxu0
      %v3119 = vadd.f32 %v2767, %v3118
      %v3120 = vpop.f32.mrb[0].mxu0
      %3121 = vmatprep.mubr.bf16.mxu0 %v2501
      %3122 = vmatmul.mubr.bf16.gmra.mrb[0].mxu0 %v2141
      %v3123 = vpop.f32.mrb[0].mxu0
      %v3124 = vadd.f32 %v2772, %v3123
      %v3125 = vpop.f32.mrb[0].mxu0
      %v3126 = vpop.f32.mrb[0].mxu0
      %v3127 = vadd.f32 %v2775, %v3126
      %v3128 = vpop.f32.mrb[0].mxu0
      %3129 = vmatprep.mubr.bf16.mxu0 %v2504
      %3130 = vmatmul.mubr.bf16.gmra.mrb[0].mxu0 %v2145
      %v3131 = vpop.f32.mrb[0].mxu0
      %v3132 = vadd.f32 %v2780, %v3131
      %v3133 = vpop.f32.mrb[0].mxu0
      %v3134 = vpop.f32.mrb[0].mxu0
      %v3135 = vadd.f32 %v2783, %v3134
      %v3136 = vpop.f32.mrb[0].mxu0
      %3137 = vmatprep.mubr.bf16.mxu0 %v2507
      %3138 = vmatmul.mubr.bf16.gmra.mrb[0].mxu0 %v2149
      %v3139 = vpop.f32.mrb[0].mxu0
      %v3140 = vadd.f32 %v2788, %v3139
      %v3141 = vpop.f32.mrb[0].mxu0
      %v3142 = vpop.f32.mrb[0].mxu0
      %v3143 = vadd.f32 %v2791, %v3142
      %v3144 = vpop.f32.mrb[0].mxu0
      %3145 = vmatprep.mubr.bf16.mxu0 %v2510
      %3146 = vmatmul.mubr.bf16.gmra.mrb[0].mxu0 %v2153
      %v3147 = vpop.f32.mrb[0].mxu0
      %v3148 = vadd.f32 %v2796, %v3147
      %v3149 = vpop.f32.mrb[0].mxu0
      %v3150 = vpop.f32.mrb[0].mxu0
      %v3151 = vadd.f32 %v2799, %v3150
      %v3152 = vpop.f32.mrb[0].mxu0
      %3153 = vmatprep.mubr.bf16.mxu0 %v2513
      %3154 = vmatmul.mubr.bf16.gmra.mrb[0].mxu0 %v2157
      %v3155 = vpop.f32.mrb[0].mxu0
      %v3156 = vadd.f32 %v2804, %v3155
      %v3157 = vpop.f32.mrb[0].mxu0
      %v3158 = vpop.f32.mrb[0].mxu0
      %v3159 = vadd.f32 %v2807, %v3158
      %v3160 = vpop.f32.mrb[0].mxu0
      %3161 = vmatprep.mubr.bf16.mxu0 %v2516
      %3162 = vmatmul.mubr.bf16.gmra.mrb[0].mxu0 %v2161
      %v3163 = vpop.f32.mrb[0].mxu0
      %v3164 = vadd.f32 %v2812, %v3163
      %v3165 = vpop.f32.mrb[0].mxu0
      %v3166 = vpop.f32.mrb[0].mxu0
      %v3167 = vadd.f32 %v2815, %v3166
      %v3168 = vpop.f32.mrb[0].mxu0
      %3169 = vmatprep.mubr.bf16.mxu0 %v2519
      %3170 = vmatmul.mubr.bf16.gmra.mrb[0].mxu0 %v2165
      %v3171 = vpop.f32.mrb[0].mxu0
      %v3172 = vadd.f32 %v2820, %v3171
      %v3173 = vpop.f32.mrb[0].mxu0
      %v3174 = vpop.f32.mrb[0].mxu0
      %v3175 = vadd.f32 %v2823, %v3174
      %v3176 = vpop.f32.mrb[0].mxu0
      %3177 = vmatprep.mubr.bf16.mxu0 %v2522
      %3178 = vmatmul.mubr.bf16.gmra.mrb[0].mxu0 %v2169
      %v3179 = vpop.f32.mrb[0].mxu0
      %v3180 = vadd.f32 %v2828, %v3179
      %v3181 = vpop.f32.mrb[0].mxu0
      %v3182 = vpop.f32.mrb[0].mxu0
      %v3183 = vadd.f32 %v2831, %v3182
      %v3184 = vpop.f32.mrb[0].mxu0
      %3185 = vmatprep.mubr.bf16.mxu0 %v2525
      %3186 = vmatmul.mubr.bf16.gmra.mrb[0].mxu0 %v2173
      %v3187 = vpop.f32.mrb[0].mxu0
      %v3188 = vadd.f32 %v2836, %v3187
      %v3189 = vpop.f32.mrb[0].mxu0
      %v3190 = vpop.f32.mrb[0].mxu0
      %v3191 = vadd.f32 %v2839, %v3190
      %v3192 = vpop.f32.mrb[0].mxu0
      %3193 = vmatprep.mubr.bf16.mxu0 %v2528
      %3194 = vmatmul.mubr.bf16.gmra.mrb[0].mxu0 %v2177
      %v3195 = vpop.f32.mrb[0].mxu0
      %v3196 = vadd.f32 %v2844, %v3195
      %v3197 = vpop.f32.mrb[0].mxu0
      %v3198 = vpop.f32.mrb[0].mxu0
      %v3199 = vadd.f32 %v2847, %v3198
      %v3200 = vpop.f32.mrb[0].mxu0
      %3201 = vmatprep.mubr.bf16.mxu0 %v2531
      %3202 = vmatmul.mubr.bf16.gmra.mrb[0].mxu0 %v2181
      %v3203 = vpop.f32.mrb[0].mxu0
      %v3204 = vadd.f32 %v2852, %v3203
      %v3205 = vpop.f32.mrb[0].mxu0
      %v3206 = vpop.f32.mrb[0].mxu0
      %v3207 = vadd.f32 %v2855, %v3206
      %v3208 = vpop.f32.mrb[0].mxu0
      %3209 = vmatprep.mubr.bf16.mxu0 %v2534
      %3210 = vmatmul.mubr.bf16.gmra.mrb[0].mxu0 %v2185
      %v3211 = vpop.f32.mrb[0].mxu0
      %v3212 = vadd.f32 %v2860, %v3211
      %v3213 = vpop.f32.mrb[0].mxu0
      %v3214 = vpop.f32.mrb[0].mxu0
      %v3215 = vadd.f32 %v2863, %v3214
      %v3216 = vpop.f32.mrb[0].mxu0
      %3217 = vmatprep.mubr.bf16.mxu0 %v2537
      %3218 = vmatmul.mubr.bf16.gmra.mrb[0].mxu0 %v2189
      %v3219 = vpop.f32.mrb[0].mxu0
      %v3220 = vadd.f32 %v2868, %v3219
      %v3221 = vpop.f32.mrb[0].mxu0
      %v3222 = vpop.f32.mrb[0].mxu0
      %v3223 = vadd.f32 %v2871, %v3222
      %v3224 = vpop.f32.mrb[0].mxu0
      %3225 = vmatprep.mubr.bf16.mxu0 %v2540
      %3226 = vmatmul.mubr.bf16.gmra.mrb[0].mxu0 %v2193
      %v3227 = vpop.f32.mrb[0].mxu0
      %v3228 = vadd.f32 %v2876, %v3227
      %v3229 = vpop.f32.mrb[0].mxu0
      %v3230 = vpop.f32.mrb[0].mxu0
      %v3231 = vadd.f32 %v2879, %v3230
      %v3232 = vpop.f32.mrb[0].mxu0
      %3233 = vmatprep.mubr.bf16.mxu0 %v2543
      %3234 = vmatmul.mubr.bf16.gmra.mrb[0].mxu0 %v2197
      %v3235 = vpop.f32.mrb[0].mxu0
      %v3236 = vadd.f32 %v2884, %v3235
      %v3237 = vpop.f32.mrb[0].mxu0
      %v3238 = vpop.f32.mrb[0].mxu0
      %v3239 = vadd.f32 %v2887, %v3238
      %v3240 = vpop.f32.mrb[0].mxu0
      %3241 = vmatprep.mubr.bf16.mxu0 %v2546
      %3242 = vmatmul.mubr.bf16.gmra.mrb[0].mxu0 %v2201
      %v3243 = vpop.f32.mrb[0].mxu0
      %v3244 = vadd.f32 %v2892, %v3243
      %v3245 = vpop.f32.mrb[0].mxu0
      %v3246 = vpop.f32.mrb[0].mxu0
      %v3247 = vadd.f32 %v2895, %v3246
      %v3248 = vpop.f32.mrb[0].mxu0
      %3249 = vmatprep.mubr.bf16.mxu0 %v2549
      %3250 = vmatmul.mubr.bf16.gmra.mrb[0].mxu0 %v2205
      %v3251 = vpop.f32.mrb[0].mxu0
      %v3252 = vadd.f32 %v2900, %v3251
      %v3253 = vpop.f32.mrb[0].mxu0
      %v3254 = vpop.f32.mrb[0].mxu0
      %v3255 = vadd.f32 %v2903, %v3254
      %v3256 = vpop.f32.mrb[0].mxu0
      %3257 = vmatprep.mubr.bf16.mxu0 %v2552
      %3258 = vmatmul.mubr.bf16.gmra.mrb[0].mxu0 %v2209
      %v3259 = vpop.f32.mrb[0].mxu0
      %v3260 = vadd.f32 %v2908, %v3259
      %v3261 = vpop.f32.mrb[0].mxu0
      %v3262 = vpop.f32.mrb[0].mxu0
      %v3263 = vpop.f32.mrb[0].mxu0
      %3264 = vdwg.mxu0
      %v3265 = vrcp.pop %v2948
      %v3266 = vrcp.pop %v2951
      %v3267 = vrcp.pop %v2956
      %v3268 = vrcp.pop %v2959
      %v3269 = vrcp.pop %v2964
      %v3270 = vrcp.pop %v2967
      %v3271 = vrcp.pop %v2972
      %v3272 = vrcp.pop %v2975
      %v3273 = vrcp.pop %v2980
      %v3274 = vrcp.pop %v2983
      %v3275 = vrcp.pop %v2988
      %v3276 = vrcp.pop %v2991
      %v3277 = vrcp.pop %v2996
      %v3278 = vrcp.pop %v2999
      %v3279 = vrcp.pop %v3004
      %v3280 = vrcp.pop %v3007
      %v3281 = vrcp.pop %v3012
      %v3282 = vrcp.pop %v3015
      %v3283 = vrcp.pop %v3020
      %v3284 = vrcp.pop %v3023
      %v3285 = vrcp.pop %v3028
      %v3286 = vrcp.pop %v3031
      %v3287 = vrcp.pop %v3036
      %v3288 = vrcp.pop %v3039
      %v3289 = vrcp.pop %v3044
      %v3290 = vrcp.pop %v3047
      %v3291 = vrcp.pop %v3052
      %v3292 = vrcp.pop %v3055
      %v3293 = vrcp.pop %v3060
      %v3294 = vrcp.pop %v3063
      %v3295 = vrcp.pop %v3068
      %v3296 = vrcp.pop %v3071
      %v3297 = vrcp.pop %v3076
      %v3298 = vrcp.pop %v3079
      %v3299 = vrcp.pop %v3084
      %v3300 = vrcp.pop %v3087
      %v3301 = vrcp.pop %v3092
      %v3302 = vrcp.pop %v3095
      %v3303 = vrcp.pop %v3100
      %v3304 = vrcp.pop %v3103
      %v3305 = vrcp.pop %v3108
      %v3306 = vrcp.pop %v3111
      %v3307 = vrcp.pop %v3116
      %v3308 = vrcp.pop %v3119
      %v3309 = vrcp.pop %v3124
      %v3310 = vrcp.pop %v3127
      %v3311 = vrcp.pop %v3132
      %v3312 = vrcp.pop %v3135
      %v3313 = vrcp.pop %v3140
      %v3314 = vrcp.pop %v3143
      %v3315 = vrcp.pop %v3148
      %v3316 = vrcp.pop %v3151
      %v3317 = vrcp.pop %v3156
      %v3318 = vrcp.pop %v3159
      %v3319 = vrcp.pop %v3164
      %v3320 = vrcp.pop %v3167
      %v3321 = vrcp.pop %v3172
      %v3322 = vrcp.pop %v3175
      %v3323 = vrcp.pop %v3180
      %v3324 = vrcp.pop %v3183
      %v3325 = vrcp.pop %v3188
      %v3326 = vrcp.pop %v3191
      %v3327 = vrcp.pop %v3196
      %v3328 = vrcp.pop %v3199
      %v3329 = vrcp.pop %v3204
      %v3330 = vrcp.pop %v3207
      %v3331 = vrcp.pop %v3212
      %v3332 = vrcp.pop %v3215
      %v3333 = vrcp.pop %v3220
      %v3334 = vrcp.pop %v3223
      %v3335 = vrcp.pop %v3228
      %v3336 = vrcp.pop %v3231
      %v3337 = vrcp.pop %v3236
      %v3338 = vrcp.pop %v3239
      %v3339 = vrcp.pop %v3244
      %v3340 = vrcp.pop %v3247
      %v3341 = vrcp.pop %v3252
      %v3342 = vrcp.pop %v3255
      %v3343 = vrcp.pop %v3260
      %3345 = vset.pattern.permute.xlu0 64
      %3346 = vperm.xlu0 %3345, %v3265
      %v3347 = vpop.permute.xlu0 %3346
      %3350 = vset.pattern.permute.xlu0 64
      %3351 = vperm.xlu0 %3350, %v3266
      %v3352 = vpop.permute.xlu0 %3351
      %3355 = vset.pattern.permute.xlu0 64
      %3356 = vperm.xlu0 %3355, %v3267
      %v3357 = vpop.permute.xlu0 %3356
      %3360 = vset.pattern.permute.xlu0 64
      %3361 = vperm.xlu0 %3360, %v3268
      %v3362 = vpop.permute.xlu0 %3361
      %3365 = vset.pattern.permute.xlu0 64
      %3366 = vperm.xlu0 %3365, %v3269
      %v3367 = vpop.permute.xlu0 %3366
      %3370 = vset.pattern.permute.xlu0 64
      %3371 = vperm.xlu0 %3370, %v3270
      %v3372 = vpop.permute.xlu0 %3371
      %3375 = vset.pattern.permute.xlu0 64
      %3376 = vperm.xlu0 %3375, %v3271
      %v3377 = vpop.permute.xlu0 %3376
      %3380 = vset.pattern.permute.xlu0 64
      %3381 = vperm.xlu0 %3380, %v3272
      %v3382 = vpop.permute.xlu0 %3381
      %3385 = vset.pattern.permute.xlu0 64
      %3386 = vperm.xlu0 %3385, %v3273
      %v3387 = vpop.permute.xlu0 %3386
      %3390 = vset.pattern.permute.xlu0 64
      %3391 = vperm.xlu0 %3390, %v3274
      %v3392 = vpop.permute.xlu0 %3391
      %3395 = vset.pattern.permute.xlu0 64
      %3396 = vperm.xlu0 %3395, %v3275
      %v3397 = vpop.permute.xlu0 %3396
      %3400 = vset.pattern.permute.xlu0 64
      %3401 = vperm.xlu0 %3400, %v3276
      %v3402 = vpop.permute.xlu0 %3401
      %3405 = vset.pattern.permute.xlu0 64
      %3406 = vperm.xlu0 %3405, %v3277
      %v3407 = vpop.permute.xlu0 %3406
      %3410 = vset.pattern.permute.xlu0 64
      %3411 = vperm.xlu0 %3410, %v3278
      %v3412 = vpop.permute.xlu0 %3411
      %3415 = vset.pattern.permute.xlu0 64
      %3416 = vperm.xlu0 %3415, %v3279
      %v3417 = vpop.permute.xlu0 %3416
      %3420 = vset.pattern.permute.xlu0 64
      %3421 = vperm.xlu0 %3420, %v3280
      %v3422 = vpop.permute.xlu0 %3421
      %3425 = vset.pattern.permute.xlu0 64
      %3426 = vperm.xlu0 %3425, %v3281
      %v3427 = vpop.permute.xlu0 %3426
      %3430 = vset.pattern.permute.xlu0 64
      %3431 = vperm.xlu0 %3430, %v3282
      %v3432 = vpop.permute.xlu0 %3431
      %3435 = vset.pattern.permute.xlu0 64
      %3436 = vperm.xlu0 %3435, %v3283
      %v3437 = vpop.permute.xlu0 %3436
      %3440 = vset.pattern.permute.xlu0 64
      %3441 = vperm.xlu0 %3440, %v3284
      %v3442 = vpop.permute.xlu0 %3441
      %3445 = vset.pattern.permute.xlu0 64
      %3446 = vperm.xlu0 %3445, %v3285
      %v3447 = vpop.permute.xlu0 %3446
      %3450 = vset.pattern.permute.xlu0 64
      %3451 = vperm.xlu0 %3450, %v3286
      %v3452 = vpop.permute.xlu0 %3451
      %3455 = vset.pattern.permute.xlu0 64
      %3456 = vperm.xlu0 %3455, %v3287
      %v3457 = vpop.permute.xlu0 %3456
      %3460 = vset.pattern.permute.xlu0 64
      %3461 = vperm.xlu0 %3460, %v3288
      %v3462 = vpop.permute.xlu0 %3461
      %3465 = vset.pattern.permute.xlu0 64
      %3466 = vperm.xlu0 %3465, %v3289
      %v3467 = vpop.permute.xlu0 %3466
      %3470 = vset.pattern.permute.xlu0 64
      %3471 = vperm.xlu0 %3470, %v3290
      %v3472 = vpop.permute.xlu0 %3471
      %3475 = vset.pattern.permute.xlu0 64
      %3476 = vperm.xlu0 %3475, %v3291
      %v3477 = vpop.permute.xlu0 %3476
      %3480 = vset.pattern.permute.xlu0 64
      %3481 = vperm.xlu0 %3480, %v3292
      %v3482 = vpop.permute.xlu0 %3481
      %3485 = vset.pattern.permute.xlu0 64
      %3486 = vperm.xlu0 %3485, %v3293
      %v3487 = vpop.permute.xlu0 %3486
      %3490 = vset.pattern.permute.xlu0 64
      %3491 = vperm.xlu0 %3490, %v3294
      %v3492 = vpop.permute.xlu0 %3491
      %3495 = vset.pattern.permute.xlu0 64
      %3496 = vperm.xlu0 %3495, %v3295
      %v3497 = vpop.permute.xlu0 %3496
      %3500 = vset.pattern.permute.xlu0 64
      %3501 = vperm.xlu0 %3500, %v3296
      %v3502 = vpop.permute.xlu0 %3501
      %3505 = vset.pattern.permute.xlu0 64
      %3506 = vperm.xlu0 %3505, %v3297
      %v3507 = vpop.permute.xlu0 %3506
      %3510 = vset.pattern.permute.xlu0 64
      %3511 = vperm.xlu0 %3510, %v3298
      %v3512 = vpop.permute.xlu0 %3511
      %3515 = vset.pattern.permute.xlu0 64
      %3516 = vperm.xlu0 %3515, %v3299
      %v3517 = vpop.permute.xlu0 %3516
      %3520 = vset.pattern.permute.xlu0 64
      %3521 = vperm.xlu0 %3520, %v3300
      %v3522 = vpop.permute.xlu0 %3521
      %3525 = vset.pattern.permute.xlu0 64
      %3526 = vperm.xlu0 %3525, %v3301
      %v3527 = vpop.permute.xlu0 %3526
      %3530 = vset.pattern.permute.xlu0 64
      %3531 = vperm.xlu0 %3530, %v3302
      %v3532 = vpop.permute.xlu0 %3531
      %3535 = vset.pattern.permute.xlu0 64
      %3536 = vperm.xlu0 %3535, %v3303
      %v3537 = vpop.permute.xlu0 %3536
      %3540 = vset.pattern.permute.xlu0 64
      %3541 = vperm.xlu0 %3540, %v3304
      %v3542 = vpop.permute.xlu0 %3541
      %3545 = vset.pattern.permute.xlu0 64
      %3546 = vperm.xlu0 %3545, %v3305
      %v3547 = vpop.permute.xlu0 %3546
      %3550 = vset.pattern.permute.xlu0 64
      %3551 = vperm.xlu0 %3550, %v3306
      %v3552 = vpop.permute.xlu0 %3551
      %3555 = vset.pattern.permute.xlu0 64
      %3556 = vperm.xlu0 %3555, %v3307
      %v3557 = vpop.permute.xlu0 %3556
      %3560 = vset.pattern.permute.xlu0 64
      %3561 = vperm.xlu0 %3560, %v3308
      %v3562 = vpop.permute.xlu0 %3561
      %3565 = vset.pattern.permute.xlu0 64
      %3566 = vperm.xlu0 %3565, %v3309
      %v3567 = vpop.permute.xlu0 %3566
      %3570 = vset.pattern.permute.xlu0 64
      %3571 = vperm.xlu0 %3570, %v3310
      %v3572 = vpop.permute.xlu0 %3571
      %3575 = vset.pattern.permute.xlu0 64
      %3576 = vperm.xlu0 %3575, %v3311
      %v3577 = vpop.permute.xlu0 %3576
      %3580 = vset.pattern.permute.xlu0 64
      %3581 = vperm.xlu0 %3580, %v3312
      %v3582 = vpop.permute.xlu0 %3581
      %3585 = vset.pattern.permute.xlu0 64
      %3586 = vperm.xlu0 %3585, %v3313
      %v3587 = vpop.permute.xlu0 %3586
      %3590 = vset.pattern.permute.xlu0 64
      %3591 = vperm.xlu0 %3590, %v3314
      %v3592 = vpop.permute.xlu0 %3591
      %3595 = vset.pattern.permute.xlu0 64
      %3596 = vperm.xlu0 %3595, %v3315
      %v3597 = vpop.permute.xlu0 %3596
      %3600 = vset.pattern.permute.xlu0 64
      %3601 = vperm.xlu0 %3600, %v3316
      %v3602 = vpop.permute.xlu0 %3601
      %3605 = vset.pattern.permute.xlu0 64
      %3606 = vperm.xlu0 %3605, %v3317
      %v3607 = vpop.permute.xlu0 %3606
      %3610 = vset.pattern.permute.xlu0 64
      %3611 = vperm.xlu0 %3610, %v3318
      %v3612 = vpop.permute.xlu0 %3611
      %3615 = vset.pattern.permute.xlu0 64
      %3616 = vperm.xlu0 %3615, %v3319
      %v3617 = vpop.permute.xlu0 %3616
      %3620 = vset.pattern.permute.xlu0 64
      %3621 = vperm.xlu0 %3620, %v3320
      %v3622 = vpop.permute.xlu0 %3621
      %3625 = vset.pattern.permute.xlu0 64
      %3626 = vperm.xlu0 %3625, %v3321
      %v3627 = vpop.permute.xlu0 %3626
      %3630 = vset.pattern.permute.xlu0 64
      %3631 = vperm.xlu0 %3630, %v3322
      %v3632 = vpop.permute.xlu0 %3631
      %3635 = vset.pattern.permute.xlu0 64
      %3636 = vperm.xlu0 %3635, %v3323
      %v3637 = vpop.permute.xlu0 %3636
      %3640 = vset.pattern.permute.xlu0 64
      %3641 = vperm.xlu0 %3640, %v3324
      %v3642 = vpop.permute.xlu0 %3641
      %3645 = vset.pattern.permute.xlu0 64
      %3646 = vperm.xlu0 %3645, %v3325
      %v3647 = vpop.permute.xlu0 %3646
      %3650 = vset.pattern.permute.xlu0 64
      %3651 = vperm.xlu0 %3650, %v3326
      %v3652 = vpop.permute.xlu0 %3651
      %3655 = vset.pattern.permute.xlu0 64
      %3656 = vperm.xlu0 %3655, %v3327
      %v3657 = vpop.permute.xlu0 %3656
      %3660 = vset.pattern.permute.xlu0 64
      %3661 = vperm.xlu0 %3660, %v3328
      %v3662 = vpop.permute.xlu0 %3661
      %3665 = vset.pattern.permute.xlu0 64
      %3666 = vperm.xlu0 %3665, %v3329
      %v3667 = vpop.permute.xlu0 %3666
      %3670 = vset.pattern.permute.xlu0 64
      %3671 = vperm.xlu0 %3670, %v3330
      %v3672 = vpop.permute.xlu0 %3671
      %3675 = vset.pattern.permute.xlu0 64
      %3676 = vperm.xlu0 %3675, %v3331
      %v3677 = vpop.permute.xlu0 %3676
      %3680 = vset.pattern.permute.xlu0 64
      %3681 = vperm.xlu0 %3680, %v3332
      %v3682 = vpop.permute.xlu0 %3681
      %3685 = vset.pattern.permute.xlu0 64
      %3686 = vperm.xlu0 %3685, %v3333
      %v3687 = vpop.permute.xlu0 %3686
      %3690 = vset.pattern.permute.xlu0 64
      %3691 = vperm.xlu0 %3690, %v3334
      %v3692 = vpop.permute.xlu0 %3691
      %3695 = vset.pattern.permute.xlu0 64
      %3696 = vperm.xlu0 %3695, %v3335
      %v3697 = vpop.permute.xlu0 %3696
      %3700 = vset.pattern.permute.xlu0 64
      %3701 = vperm.xlu0 %3700, %v3336
      %v3702 = vpop.permute.xlu0 %3701
      %3705 = vset.pattern.permute.xlu0 64
      %3706 = vperm.xlu0 %3705, %v3337
      %v3707 = vpop.permute.xlu0 %3706
      %3710 = vset.pattern.permute.xlu0 64
      %3711 = vperm.xlu0 %3710, %v3338
      %v3712 = vpop.permute.xlu0 %3711
      %3715 = vset.pattern.permute.xlu0 64
      %3716 = vperm.xlu0 %3715, %v3339
      %v3717 = vpop.permute.xlu0 %3716
      %3720 = vset.pattern.permute.xlu0 64
      %3721 = vperm.xlu0 %3720, %v3340
      %v3722 = vpop.permute.xlu0 %3721
      %3725 = vset.pattern.permute.xlu0 64
      %3726 = vperm.xlu0 %3725, %v3341
      %v3727 = vpop.permute.xlu0 %3726
      %3730 = vset.pattern.permute.xlu0 64
      %3731 = vperm.xlu0 %3730, %v3342
      %v3732 = vpop.permute.xlu0 %3731
      %3735 = vset.pattern.permute.xlu0 64
      %3736 = vperm.xlu0 %3735, %v3343
      %v3737 = vpop.permute.xlu0 %3736
      %v3739 = vmul.f32 %v2948, %v3347
      %v3740 = vmul.f32 %v2951, %v3352
      %v3741 = vmul.f32 %v2956, %v3357
      %v3742 = vmul.f32 %v2959, %v3362
      %v3743 = vmul.f32 %v2964, %v3367
      %v3744 = vmul.f32 %v2967, %v3372
      %v3745 = vmul.f32 %v2972, %v3377
      %v3746 = vmul.f32 %v2975, %v3382
      %v3747 = vmul.f32 %v2980, %v3387
      %v3748 = vmul.f32 %v2983, %v3392
      %v3749 = vmul.f32 %v2988, %v3397
      %v3750 = vmul.f32 %v2991, %v3402
      %v3751 = vmul.f32 %v2996, %v3407
      %v3752 = vmul.f32 %v2999, %v3412
      %v3753 = vmul.f32 %v3004, %v3417
      %v3754 = vmul.f32 %v3007, %v3422
      %v3755 = vmul.f32 %v3012, %v3427
      %v3756 = vmul.f32 %v3015, %v3432
      %v3757 = vmul.f32 %v3020, %v3437
      %v3758 = vmul.f32 %v3023, %v3442
      %v3759 = vmul.f32 %v3028, %v3447
      %v3760 = vmul.f32 %v3031, %v3452
      %v3761 = vmul.f32 %v3036, %v3457
      %v3762 = vmul.f32 %v3039, %v3462
      %v3763 = vmul.f32 %v3044, %v3467
      %v3764 = vmul.f32 %v3047, %v3472
      %v3765 = vmul.f32 %v3052, %v3477
      %v3766 = vmul.f32 %v3055, %v3482
      %v3767 = vmul.f32 %v3060, %v3487
      %v3768 = vmul.f32 %v3063, %v3492
      %v3769 = vmul.f32 %v3068, %v3497
      %v3770 = vmul.f32 %v3071, %v3502
      %v3771 = vmul.f32 %v3076, %v3507
      %v3772 = vmul.f32 %v3079, %v3512
      %v3773 = vmul.f32 %v3084, %v3517
      %v3774 = vmul.f32 %v3087, %v3522
      %v3775 = vmul.f32 %v3092, %v3527
      %v3776 = vmul.f32 %v3095, %v3532
      %v3777 = vmul.f32 %v3100, %v3537
      %v3778 = vmul.f32 %v3103, %v3542
      %v3779 = vmul.f32 %v3108, %v3547
      %v3780 = vmul.f32 %v3111, %v3552
      %v3781 = vmul.f32 %v3116, %v3557
      %v3782 = vmul.f32 %v3119, %v3562
      %v3783 = vmul.f32 %v3124, %v3567
      %v3784 = vmul.f32 %v3127, %v3572
      %v3785 = vmul.f32 %v3132, %v3577
      %v3786 = vmul.f32 %v3135, %v3582
      %v3787 = vmul.f32 %v3140, %v3587
      %v3788 = vmul.f32 %v3143, %v3592
      %v3789 = vmul.f32 %v3148, %v3597
      %v3790 = vmul.f32 %v3151, %v3602
      %v3791 = vmul.f32 %v3156, %v3607
      %v3792 = vmul.f32 %v3159, %v3612
      %v3793 = vmul.f32 %v3164, %v3617
      %v3794 = vmul.f32 %v3167, %v3622
      %v3795 = vmul.f32 %v3172, %v3627
      %v3796 = vmul.f32 %v3175, %v3632
      %v3797 = vmul.f32 %v3180, %v3637
      %v3798 = vmul.f32 %v3183, %v3642
      %v3799 = vmul.f32 %v3188, %v3647
      %v3800 = vmul.f32 %v3191, %v3652
      %v3801 = vmul.f32 %v3196, %v3657
      %v3802 = vmul.f32 %v3199, %v3662
      %v3803 = vmul.f32 %v3204, %v3667
      %v3804 = vmul.f32 %v3207, %v3672
      %v3805 = vmul.f32 %v3212, %v3677
      %v3806 = vmul.f32 %v3215, %v3682
      %v3807 = vmul.f32 %v3220, %v3687
      %v3808 = vmul.f32 %v3223, %v3692
      %v3809 = vmul.f32 %v3228, %v3697
      %v3810 = vmul.f32 %v3231, %v3702
      %v3811 = vmul.f32 %v3236, %v3707
      %v3812 = vmul.f32 %v3239, %v3712
      %v3813 = vmul.f32 %v3244, %v3717
      %v3814 = vmul.f32 %v3247, %v3722
      %v3815 = vmul.f32 %v3252, %v3727
      %v3816 = vmul.f32 %v3255, %v3732
      %v3817 = vmul.f32 %v3260, %v3737
      %v3818 = vld [vmem:[%s2] sm:$0x1]
      %v3820 = vlaneseq
      %v3821 = vshrl.u32 %v3820, 7
      %v3822 = vsub.s32 0, %v3821
      %v3823 = vrot.slane %v3818, %v3822
      %v3825 = vadd.f32 %v3739, %v3823
      %v3826 = vadd.f32 %v3740, %v3823
      %v3827 = vadd.f32 %v3741, %v3823
      %v3828 = vadd.f32 %v3742, %v3823
      %v3829 = vadd.f32 %v3743, %v3823
      %v3830 = vadd.f32 %v3744, %v3823
      %v3831 = vadd.f32 %v3745, %v3823
      %v3832 = vadd.f32 %v3746, %v3823
      %v3833 = vadd.f32 %v3747, %v3823
      %v3834 = vadd.f32 %v3748, %v3823
      %v3835 = vadd.f32 %v3749, %v3823
      %v3836 = vadd.f32 %v3750, %v3823
      %v3837 = vadd.f32 %v3751, %v3823
      %v3838 = vadd.f32 %v3752, %v3823
      %v3839 = vadd.f32 %v3753, %v3823
      %v3840 = vadd.f32 %v3754, %v3823
      %v3841 = vadd.f32 %v3755, %v3823
      %v3842 = vadd.f32 %v3756, %v3823
      %v3843 = vadd.f32 %v3757, %v3823
      %v3844 = vadd.f32 %v3758, %v3823
      %v3845 = vadd.f32 %v3759, %v3823
      %v3846 = vadd.f32 %v3760, %v3823
      %v3847 = vadd.f32 %v3761, %v3823
      %v3848 = vadd.f32 %v3762, %v3823
      %v3849 = vadd.f32 %v3763, %v3823
      %v3850 = vadd.f32 %v3764, %v3823
      %v3851 = vadd.f32 %v3765, %v3823
      %v3852 = vadd.f32 %v3766, %v3823
      %v3853 = vadd.f32 %v3767, %v3823
      %v3854 = vadd.f32 %v3768, %v3823
      %v3855 = vadd.f32 %v3769, %v3823
      %v3856 = vadd.f32 %v3770, %v3823
      %v3857 = vadd.f32 %v3771, %v3823
      %v3858 = vadd.f32 %v3772, %v3823
      %v3859 = vadd.f32 %v3773, %v3823
      %v3860 = vadd.f32 %v3774, %v3823
      %v3861 = vadd.f32 %v3775, %v3823
      %v3862 = vadd.f32 %v3776, %v3823
      %v3863 = vadd.f32 %v3777, %v3823
      %v3864 = vadd.f32 %v3778, %v3823
      %v3865 = vadd.f32 %v3779, %v3823
      %v3866 = vadd.f32 %v3780, %v3823
      %v3867 = vadd.f32 %v3781, %v3823
      %v3868 = vadd.f32 %v3782, %v3823
      %v3869 = vadd.f32 %v3783, %v3823
      %v3870 = vadd.f32 %v3784, %v3823
      %v3871 = vadd.f32 %v3785, %v3823
      %v3872 = vadd.f32 %v3786, %v3823
      %v3873 = vadd.f32 %v3787, %v3823
      %v3874 = vadd.f32 %v3788, %v3823
      %v3875 = vadd.f32 %v3789, %v3823
      %v3876 = vadd.f32 %v3790, %v3823
      %v3877 = vadd.f32 %v3791, %v3823
      %v3878 = vadd.f32 %v3792, %v3823
      %v3879 = vadd.f32 %v3793, %v3823
      %v3880 = vadd.f32 %v3794, %v3823
      %v3881 = vadd.f32 %v3795, %v3823
      %v3882 = vadd.f32 %v3796, %v3823
      %v3883 = vadd.f32 %v3797, %v3823
      %v3884 = vadd.f32 %v3798, %v3823
      %v3885 = vadd.f32 %v3799, %v3823
      %v3886 = vadd.f32 %v3800, %v3823
      %v3887 = vadd.f32 %v3801, %v3823
      %v3888 = vadd.f32 %v3802, %v3823
      %v3889 = vadd.f32 %v3803, %v3823
      %v3890 = vadd.f32 %v3804, %v3823
      %v3891 = vadd.f32 %v3805, %v3823
      %v3892 = vadd.f32 %v3806, %v3823
      %v3893 = vadd.f32 %v3807, %v3823
      %v3894 = vadd.f32 %v3808, %v3823
      %v3895 = vadd.f32 %v3809, %v3823
      %v3896 = vadd.f32 %v3810, %v3823
      %v3897 = vadd.f32 %v3811, %v3823
      %v3898 = vadd.f32 %v3812, %v3823
      %v3899 = vadd.f32 %v3813, %v3823
      %v3900 = vadd.f32 %v3814, %v3823
      %v3901 = vadd.f32 %v3815, %v3823
      %v3902 = vadd.f32 %v3816, %v3823
      %v3903 = vadd.f32 %v3817, %v3823
      %v3904 = vmax.f32 %v3825, 0.0
      %v3905 = vmax.f32 %v3826, 0.0
      %v3906 = vmax.f32 %v3827, 0.0
      %v3907 = vmax.f32 %v3828, 0.0
      %v3908 = vmax.f32 %v3829, 0.0
      %v3909 = vmax.f32 %v3830, 0.0
      %v3910 = vmax.f32 %v3831, 0.0
      %v3911 = vmax.f32 %v3832, 0.0
      %v3912 = vmax.f32 %v3833, 0.0
      %v3913 = vmax.f32 %v3834, 0.0
      %v3914 = vmax.f32 %v3835, 0.0
      %v3915 = vmax.f32 %v3836, 0.0
      %v3916 = vmax.f32 %v3837, 0.0
      %v3917 = vmax.f32 %v3838, 0.0
      %v3918 = vmax.f32 %v3839, 0.0
      %v3919 = vmax.f32 %v3840, 0.0
      %v3920 = vmax.f32 %v3841, 0.0
      %v3921 = vmax.f32 %v3842, 0.0
      %v3922 = vmax.f32 %v3843, 0.0
      %v3923 = vmax.f32 %v3844, 0.0
      %v3924 = vmax.f32 %v3845, 0.0
      %v3925 = vmax.f32 %v3846, 0.0
      %v3926 = vmax.f32 %v3847, 0.0
      %v3927 = vmax.f32 %v3848, 0.0
      %v3928 = vmax.f32 %v3849, 0.0
      %v3929 = vmax.f32 %v3850, 0.0
      %v3930 = vmax.f32 %v3851, 0.0
      %v3931 = vmax.f32 %v3852, 0.0
      %v3932 = vmax.f32 %v3853, 0.0
      %v3933 = vmax.f32 %v3854, 0.0
      %v3934 = vmax.f32 %v3855, 0.0
      %v3935 = vmax.f32 %v3856, 0.0
      %v3936 = vmax.f32 %v3857, 0.0
      %v3937 = vmax.f32 %v3858, 0.0
      %v3938 = vmax.f32 %v3859, 0.0
      %v3939 = vmax.f32 %v3860, 0.0
      %v3940 = vmax.f32 %v3861, 0.0
      %v3941 = vmax.f32 %v3862, 0.0
      %v3942 = vmax.f32 %v3863, 0.0
      %v3943 = vmax.f32 %v3864, 0.0
      %v3944 = vmax.f32 %v3865, 0.0
      %v3945 = vmax.f32 %v3866, 0.0
      %v3946 = vmax.f32 %v3867, 0.0
      %v3947 = vmax.f32 %v3868, 0.0
      %v3948 = vmax.f32 %v3869, 0.0
      %v3949 = vmax.f32 %v3870, 0.0
      %v3950 = vmax.f32 %v3871, 0.0
      %v3951 = vmax.f32 %v3872, 0.0
      %v3952 = vmax.f32 %v3873, 0.0
      %v3953 = vmax.f32 %v3874, 0.0
      %v3954 = vmax.f32 %v3875, 0.0
      %v3955 = vmax.f32 %v3876, 0.0
      %v3956 = vmax.f32 %v3877, 0.0
      %v3957 = vmax.f32 %v3878, 0.0
      %v3958 = vmax.f32 %v3879, 0.0
      %v3959 = vmax.f32 %v3880, 0.0
      %v3960 = vmax.f32 %v3881, 0.0
      %v3961 = vmax.f32 %v3882, 0.0
      %v3962 = vmax.f32 %v3883, 0.0
      %v3963 = vmax.f32 %v3884, 0.0
      %v3964 = vmax.f32 %v3885, 0.0
      %v3965 = vmax.f32 %v3886, 0.0
      %v3966 = vmax.f32 %v3887, 0.0
      %v3967 = vmax.f32 %v3888, 0.0
      %v3968 = vmax.f32 %v3889, 0.0
      %v3969 = vmax.f32 %v3890, 0.0
      %v3970 = vmax.f32 %v3891, 0.0
      %v3971 = vmax.f32 %v3892, 0.0
      %v3972 = vmax.f32 %v3893, 0.0
      %v3973 = vmax.f32 %v3894, 0.0
      %v3974 = vmax.f32 %v3895, 0.0
      %v3975 = vmax.f32 %v3896, 0.0
      %v3976 = vmax.f32 %v3897, 0.0
      %v3977 = vmax.f32 %v3898, 0.0
      %v3978 = vmax.f32 %v3899, 0.0
      %v3979 = vmax.f32 %v3900, 0.0
      %v3980 = vmax.f32 %v3901, 0.0
      %v3981 = vmax.f32 %v3902, 0.0
      %v3982 = vmax.f32 %v3903, 0.0
      %v3983 = vld [vmem:[%s3] sm:$0xff]
      %v3984 = vld [vmem:[%s3 + $0x8] sm:$0xff]
      %v3985 = vld [vmem:[%s3 + $0x10] sm:$0xff]
      %v3986 = vld [vmem:[%s3 + $0x18] sm:$0xff]
      %v3987 = vld [vmem:[%s3 + $0x20] sm:$0xff]
      %v3988 = vld [vmem:[%s3 + $0x28] sm:$0xff]
      %v3989 = vld [vmem:[%s3 + $0x30] sm:$0xff]
      %v3990 = vld [vmem:[%s3 + $0x38] sm:$0xff]
      %v3991 = vld [vmem:[%s4] sm:$0x1]
      %v3993 = vlaneseq
      %v3994 = vshrl.u32 %v3993, 7
      %v3995 = vsub.s32 0, %v3994
      %v3996 = vrot.slane %v3991, %v3995
      %vm3998 = vcmask 523264
      %v4000 = vsel %vm3998, %v3904, 0
      %v4003 = vsel %vm3998, %v3905, 0
      %v4006 = vsel %vm3998, %v3906, 0
      %v4009 = vsel %vm3998, %v3907, 0
      %v4012 = vsel %vm3998, %v3908, 0
      %v4015 = vsel %vm3998, %v3909, 0
      %v4018 = vsel %vm3998, %v3910, 0
      %v4021 = vsel %vm3998, %v3911, 0
      %v4024 = vsel %vm3998, %v3912, 0
      %v4027 = vsel %vm3998, %v3913, 0
      %v4030 = vsel %vm3998, %v3914, 0
      %v4033 = vsel %vm3998, %v3915, 0
      %v4036 = vsel %vm3998, %v3916, 0
      %v4039 = vsel %vm3998, %v3917, 0
      %v4042 = vsel %vm3998, %v3918, 0
      %v4045 = vsel %vm3998, %v3919, 0
      %v4048 = vsel %vm3998, %v3920, 0
      %v4051 = vsel %vm3998, %v3921, 0
      %v4054 = vsel %vm3998, %v3922, 0
      %v4057 = vsel %vm3998, %v3923, 0
      %v4060 = vsel %vm3998, %v3924, 0
      %v4063 = vsel %vm3998, %v3925, 0
      %v4066 = vsel %vm3998, %v3926, 0
      %v4069 = vsel %vm3998, %v3927, 0
      %v4072 = vsel %vm3998, %v3928, 0
      %v4075 = vsel %vm3998, %v3929, 0
      %v4078 = vsel %vm3998, %v3930, 0
      %v4081 = vsel %vm3998, %v3931, 0
      %v4084 = vsel %vm3998, %v3932, 0
      %v4087 = vsel %vm3998, %v3933, 0
      %v4090 = vsel %vm3998, %v3934, 0
      %v4093 = vsel %vm3998, %v3935, 0
      %v4096 = vsel %vm3998, %v3936, 0
      %v4099 = vsel %vm3998, %v3937, 0
      %v4102 = vsel %vm3998, %v3938, 0
      %v4105 = vsel %vm3998, %v3939, 0
      %v4108 = vsel %vm3998, %v3940, 0
      %v4111 = vsel %vm3998, %v3941, 0
      %v4114 = vsel %vm3998, %v3942, 0
      %v4117 = vsel %vm3998, %v3943, 0
      %v4120 = vsel %vm3998, %v3944, 0
      %v4123 = vsel %vm3998, %v3945, 0
      %v4126 = vsel %vm3998, %v3946, 0
      %v4129 = vsel %vm3998, %v3947, 0
      %v4132 = vsel %vm3998, %v3948, 0
      %v4135 = vsel %vm3998, %v3949, 0
      %v4138 = vsel %vm3998, %v3950, 0
      %v4141 = vsel %vm3998, %v3951, 0
      %v4144 = vsel %vm3998, %v3952, 0
      %v4147 = vsel %vm3998, %v3953, 0
      %v4150 = vsel %vm3998, %v3954, 0
      %v4153 = vsel %vm3998, %v3955, 0
      %v4156 = vsel %vm3998, %v3956, 0
      %v4159 = vsel %vm3998, %v3957, 0
      %v4162 = vsel %vm3998, %v3958, 0
      %v4165 = vsel %vm3998, %v3959, 0
      %v4168 = vsel %vm3998, %v3960, 0
      %v4171 = vsel %vm3998, %v3961, 0
      %v4174 = vsel %vm3998, %v3962, 0
      %v4177 = vsel %vm3998, %v3963, 0
      %v4180 = vsel %vm3998, %v3964, 0
      %v4183 = vsel %vm3998, %v3965, 0
      %v4186 = vsel %vm3998, %v3966, 0
      %v4189 = vsel %vm3998, %v3967, 0
      %v4192 = vsel %vm3998, %v3968, 0
      %v4195 = vsel %vm3998, %v3969, 0
      %v4198 = vsel %vm3998, %v3970, 0
      %v4201 = vsel %vm3998, %v3971, 0
      %v4204 = vsel %vm3998, %v3972, 0
      %v4207 = vsel %vm3998, %v3973, 0
      %v4210 = vsel %vm3998, %v3974, 0
      %v4213 = vsel %vm3998, %v3975, 0
      %v4216 = vsel %vm3998, %v3976, 0
      %v4219 = vsel %vm3998, %v3977, 0
      %v4222 = vsel %vm3998, %v3978, 0
      %v4225 = vsel %vm3998, %v3979, 0
      %v4228 = vsel %vm3998, %v3980, 0
      %v4231 = vsel %vm3998, %v3981, 0
      %v4234 = vsel %vm3998, %v3982, 0
      %4236 = vmatprep.subr.mxu0 0.0
      %4237 = vmatpush1.msra.mxu0 %v3983
      %4238 = vmatprep.subr.mxu0 0.0
      %4239 = vmatpush1.msra.mxu0 %v3984
      %4240 = vmatprep.subr.mxu0 0.0
      %4241 = vmatpush1.msra.mxu0 %v3985
      %4242 = vmatprep.subr.mxu0 0.0
      %4243 = vmatpush1.msra.mxu0 %v3986
      %4244 = vmatprep.subr.mxu0 0.0
      %4245 = vmatpush1.msra.mxu0 %v3987
      %4246 = vmatprep.subr.mxu0 0.0
      %4247 = vmatpush1.msra.mxu0 %v3988
      %4248 = vmatprep.subr.mxu0 0.0
      %4249 = vmatpush1.msra.mxu0 %v3989
      %4250 = vmatprep.subr.mxu0 0.0
      %4251 = vmatpush1.msra.mxu0 %v3990
      %4252 = vmatprep.subr.mxu0 0.0
      %4253 = vmatpush1.msra.mxu0 0.0
      %4254 = vmatprep.subr.mxu0 0.0
      %4255 = vmatpush1.msra.mxu0 0.0
      %4256 = vmatprep.subr.mxu0 0.0
      %4257 = vmatpush1.msra.mxu0 0.0
      %4258 = vmatprep.subr.mxu0 0.0
      %4259 = vmatpush1.msra.mxu0 0.0
      %4260 = vmatprep.subr.mxu0 0.0
      %4261 = vmatpush1.msra.mxu0 0.0
      %4262 = vmatprep.subr.mxu0 0.0
      %4263 = vmatpush1.msra.mxu0 0.0
      %4264 = vmatprep.subr.mxu0 0.0
      %4265 = vmatpush1.msra.mxu0 0.0
      %4266 = vmatprep.subr.mxu0 0.0
      %4267 = vmatpush1.msra.mxu0 0.0
      %4268 = vmatprep.subr.mxu0 0.0
      %4269 = vmatpush1.msra.mxu0 0.0
      %4270 = vmatprep.subr.mxu0 0.0
      %4271 = vmatpush1.msra.mxu0 0.0
      %4272 = vmatprep.subr.mxu0 0.0
      %4273 = vmatpush1.msra.mxu0 0.0
      %4274 = vmatprep.subr.mxu0 0.0
      %4275 = vmatpush1.msra.mxu0 0.0
      %4276 = vmatprep.subr.mxu0 0.0
      %4277 = vmatpush1.msra.mxu0 0.0
      %4278 = vmatprep.subr.mxu0 0.0
      %4279 = vmatpush1.msra.mxu0 0.0
      %4280 = vmatprep.subr.mxu0 0.0
      %4281 = vmatpush1.msra.mxu0 0.0
      %4282 = vmatprep.subr.mxu0 0.0
      %4283 = vmatpush1.msra.mxu0 0.0
      %4284 = vmatprep.subr.mxu0 0.0
      %4285 = vmatpush1.msra.mxu0 0.0
      %4286 = vmatprep.subr.mxu0 0.0
      %4287 = vmatpush1.msra.mxu0 0.0
      %4288 = vmatprep.subr.mxu0 0.0
      %4289 = vmatpush1.msra.mxu0 0.0
      %4290 = vmatprep.subr.mxu0 0.0
      %4291 = vmatpush1.msra.mxu0 0.0
      %4292 = vmatprep.subr.mxu0 0.0
      %4293 = vmatpush1.msra.mxu0 0.0
      %4294 = vmatprep.subr.mxu0 0.0
      %4295 = vmatpush1.msra.mxu0 0.0
      %4296 = vmatprep.subr.mxu0 0.0
      %4297 = vmatpush1.msra.mxu0 0.0
      %4298 = vmatprep.subr.mxu0 0.0
      %4299 = vmatpush1.msra.mxu0 0.0
      %4300 = vmatprep.mubr.f32.mxu0 0.0
      %4301 = vmatmul.mubr.f32.gmra.mrb[0].mxu0 %v4000
      %v4302 = vpop.f32.mrb[0].mxu0
      %v4303 = vadd.f32 %v3996, %v4302
      %v4304 = vpop.f32.mrb[0].mxu0
      %4305 = vmatprep.mubr.f32.mxu0 0.0
      %4306 = vmatmul.mubr.f32.gmra.mrb[0].mxu0 %v4003
      %v4307 = vpop.f32.mrb[0].mxu0
      %v4308 = vadd.f32 %v3996, %v4307
      %v4309 = vpop.f32.mrb[0].mxu0
      %4310 = vmatprep.mubr.f32.mxu0 0.0
      %4311 = vmatmul.mubr.f32.gmra.mrb[0].mxu0 %v4006
      %v4312 = vpop.f32.mrb[0].mxu0
      %v4313 = vadd.f32 %v3996, %v4312
      %v4314 = vpop.f32.mrb[0].mxu0
      %4315 = vmatprep.mubr.f32.mxu0 0.0
      %4316 = vmatmul.mubr.f32.gmra.mrb[0].mxu0 %v4009
      %v4317 = vpop.f32.mrb[0].mxu0
      %v4318 = vadd.f32 %v3996, %v4317
      %v4319 = vpop.f32.mrb[0].mxu0
      %4320 = vmatprep.mubr.f32.mxu0 0.0
      %4321 = vmatmul.mubr.f32.gmra.mrb[0].mxu0 %v4012
      %v4322 = vpop.f32.mrb[0].mxu0
      %v4323 = vadd.f32 %v3996, %v4322
      %v4324 = vpop.f32.mrb[0].mxu0
      %4325 = vmatprep.mubr.f32.mxu0 0.0
      %4326 = vmatmul.mubr.f32.gmra.mrb[0].mxu0 %v4015
      %v4327 = vpop.f32.mrb[0].mxu0
      %v4328 = vadd.f32 %v3996, %v4327
      %v4329 = vpop.f32.mrb[0].mxu0
      %4330 = vmatprep.mubr.f32.mxu0 0.0
      %4331 = vmatmul.mubr.f32.gmra.mrb[0].mxu0 %v4018
      %v4332 = vpop.f32.mrb[0].mxu0
      %v4333 = vadd.f32 %v3996, %v4332
      %v4334 = vpop.f32.mrb[0].mxu0
      %4335 = vmatprep.mubr.f32.mxu0 0.0
      %4336 = vmatmul.mubr.f32.gmra.mrb[0].mxu0 %v4021
      %v4337 = vpop.f32.mrb[0].mxu0
      %v4338 = vadd.f32 %v3996, %v4337
      %v4339 = vpop.f32.mrb[0].mxu0
      %4340 = vmatprep.mubr.f32.mxu0 0.0
      %4341 = vmatmul.mubr.f32.gmra.mrb[0].mxu0 %v4024
      %v4342 = vpop.f32.mrb[0].mxu0
      %v4343 = vadd.f32 %v3996, %v4342
      %v4344 = vpop.f32.mrb[0].mxu0
      %4345 = vmatprep.mubr.f32.mxu0 0.0
      %4346 = vmatmul.mubr.f32.gmra.mrb[0].mxu0 %v4027
      %v4347 = vpop.f32.mrb[0].mxu0
      %v4348 = vadd.f32 %v3996, %v4347
      %v4349 = vpop.f32.mrb[0].mxu0
      %4350 = vmatprep.mubr.f32.mxu0 0.0
      %4351 = vmatmul.mubr.f32.gmra.mrb[0].mxu0 %v4030
      %v4352 = vpop.f32.mrb[0].mxu0
      %v4353 = vadd.f32 %v3996, %v4352
      %v4354 = vpop.f32.mrb[0].mxu0
      %4355 = vmatprep.mubr.f32.mxu0 0.0
      %4356 = vmatmul.mubr.f32.gmra.mrb[0].mxu0 %v4033
      %v4357 = vpop.f32.mrb[0].mxu0
      %v4358 = vadd.f32 %v3996, %v4357
      %v4359 = vpop.f32.mrb[0].mxu0
      %4360 = vmatprep.mubr.f32.mxu0 0.0
      %4361 = vmatmul.mubr.f32.gmra.mrb[0].mxu0 %v4036
      %v4362 = vpop.f32.mrb[0].mxu0
      %v4363 = vadd.f32 %v3996, %v4362
      %v4364 = vpop.f32.mrb[0].mxu0
      %4365 = vmatprep.mubr.f32.mxu0 0.0
      %4366 = vmatmul.mubr.f32.gmra.mrb[0].mxu0 %v4039
      %v4367 = vpop.f32.mrb[0].mxu0
      %v4368 = vadd.f32 %v3996, %v4367
      %v4369 = vpop.f32.mrb[0].mxu0
      %4370 = vmatprep.mubr.f32.mxu0 0.0
      %4371 = vmatmul.mubr.f32.gmra.mrb[0].mxu0 %v4042
      %v4372 = vpop.f32.mrb[0].mxu0
      %v4373 = vadd.f32 %v3996, %v4372
      %v4374 = vpop.f32.mrb[0].mxu0
      %4375 = vmatprep.mubr.f32.mxu0 0.0
      %4376 = vmatmul.mubr.f32.gmra.mrb[0].mxu0 %v4045
      %v4377 = vpop.f32.mrb[0].mxu0
      %v4378 = vadd.f32 %v3996, %v4377
      %v4379 = vpop.f32.mrb[0].mxu0
      %4380 = vmatprep.mubr.f32.mxu0 0.0
      %4381 = vmatmul.mubr.f32.gmra.mrb[0].mxu0 %v4048
      %v4382 = vpop.f32.mrb[0].mxu0
      %v4383 = vadd.f32 %v3996, %v4382
      %v4384 = vpop.f32.mrb[0].mxu0
      %4385 = vmatprep.mubr.f32.mxu0 0.0
      %4386 = vmatmul.mubr.f32.gmra.mrb[0].mxu0 %v4051
      %v4387 = vpop.f32.mrb[0].mxu0
      %v4388 = vadd.f32 %v3996, %v4387
      %v4389 = vpop.f32.mrb[0].mxu0
      %4390 = vmatprep.mubr.f32.mxu0 0.0
      %4391 = vmatmul.mubr.f32.gmra.mrb[0].mxu0 %v4054
      %v4392 = vpop.f32.mrb[0].mxu0
      %v4393 = vadd.f32 %v3996, %v4392
      %v4394 = vpop.f32.mrb[0].mxu0
      %4395 = vmatprep.mubr.f32.mxu0 0.0
      %4396 = vmatmul.mubr.f32.gmra.mrb[0].mxu0 %v4057
      %v4397 = vpop.f32.mrb[0].mxu0
      %v4398 = vadd.f32 %v3996, %v4397
      %v4399 = vpop.f32.mrb[0].mxu0
      %4400 = vmatprep.mubr.f32.mxu0 0.0
      %4401 = vmatmul.mubr.f32.gmra.mrb[0].mxu0 %v4060
      %v4402 = vpop.f32.mrb[0].mxu0
      %v4403 = vadd.f32 %v3996, %v4402
      %v4404 = vpop.f32.mrb[0].mxu0
      %4405 = vmatprep.mubr.f32.mxu0 0.0
      %4406 = vmatmul.mubr.f32.gmra.mrb[0].mxu0 %v4063
      %v4407 = vpop.f32.mrb[0].mxu0
      %v4408 = vadd.f32 %v3996, %v4407
      %v4409 = vpop.f32.mrb[0].mxu0
      %4410 = vmatprep.mubr.f32.mxu0 0.0
      %4411 = vmatmul.mubr.f32.gmra.mrb[0].mxu0 %v4066
      %v4412 = vpop.f32.mrb[0].mxu0
      %v4413 = vadd.f32 %v3996, %v4412
      %v4414 = vpop.f32.mrb[0].mxu0
      %4415 = vmatprep.mubr.f32.mxu0 0.0
      %4416 = vmatmul.mubr.f32.gmra.mrb[0].mxu0 %v4069
      %v4417 = vpop.f32.mrb[0].mxu0
      %v4418 = vadd.f32 %v3996, %v4417
      %v4419 = vpop.f32.mrb[0].mxu0
      %4420 = vmatprep.mubr.f32.mxu0 0.0
      %4421 = vmatmul.mubr.f32.gmra.mrb[0].mxu0 %v4072
      %v4422 = vpop.f32.mrb[0].mxu0
      %v4423 = vadd.f32 %v3996, %v4422
      %v4424 = vpop.f32.mrb[0].mxu0
      %4425 = vmatprep.mubr.f32.mxu0 0.0
      %4426 = vmatmul.mubr.f32.gmra.mrb[0].mxu0 %v4075
      %v4427 = vpop.f32.mrb[0].mxu0
      %v4428 = vadd.f32 %v3996, %v4427
      %v4429 = vpop.f32.mrb[0].mxu0
      %4430 = vmatprep.mubr.f32.mxu0 0.0
      %4431 = vmatmul.mubr.f32.gmra.mrb[0].mxu0 %v4078
      %v4432 = vpop.f32.mrb[0].mxu0
      %v4433 = vadd.f32 %v3996, %v4432
      %v4434 = vpop.f32.mrb[0].mxu0
      %4435 = vmatprep.mubr.f32.mxu0 0.0
      %4436 = vmatmul.mubr.f32.gmra.mrb[0].mxu0 %v4081
      %v4437 = vpop.f32.mrb[0].mxu0
      %v4438 = vadd.f32 %v3996, %v4437
      %v4439 = vpop.f32.mrb[0].mxu0
      %4440 = vmatprep.mubr.f32.mxu0 0.0
      %4441 = vmatmul.mubr.f32.gmra.mrb[0].mxu0 %v4084
      %v4442 = vpop.f32.mrb[0].mxu0
      %v4443 = vadd.f32 %v3996, %v4442
      %v4444 = vpop.f32.mrb[0].mxu0
      %4445 = vmatprep.mubr.f32.mxu0 0.0
      %4446 = vmatmul.mubr.f32.gmra.mrb[0].mxu0 %v4087
      %v4447 = vpop.f32.mrb[0].mxu0
      %v4448 = vadd.f32 %v3996, %v4447
      %v4449 = vpop.f32.mrb[0].mxu0
      %4450 = vmatprep.mubr.f32.mxu0 0.0
      %4451 = vmatmul.mubr.f32.gmra.mrb[0].mxu0 %v4090
      %v4452 = vpop.f32.mrb[0].mxu0
      %v4453 = vadd.f32 %v3996, %v4452
      %v4454 = vpop.f32.mrb[0].mxu0
      %4455 = vmatprep.mubr.f32.mxu0 0.0
      %4456 = vmatmul.mubr.f32.gmra.mrb[0].mxu0 %v4093
      %v4457 = vpop.f32.mrb[0].mxu0
      %v4458 = vadd.f32 %v3996, %v4457
      %v4459 = vpop.f32.mrb[0].mxu0
      %4460 = vmatprep.mubr.f32.mxu0 0.0
      %4461 = vmatmul.mubr.f32.gmra.mrb[0].mxu0 %v4096
      %v4462 = vpop.f32.mrb[0].mxu0
      %v4463 = vadd.f32 %v3996, %v4462
      %v4464 = vpop.f32.mrb[0].mxu0
      %4465 = vmatprep.mubr.f32.mxu0 0.0
      %4466 = vmatmul.mubr.f32.gmra.mrb[0].mxu0 %v4099
      %v4467 = vpop.f32.mrb[0].mxu0
      %v4468 = vadd.f32 %v3996, %v4467
      %v4469 = vpop.f32.mrb[0].mxu0
      %4470 = vmatprep.mubr.f32.mxu0 0.0
      %4471 = vmatmul.mubr.f32.gmra.mrb[0].mxu0 %v4102
      %v4472 = vpop.f32.mrb[0].mxu0
      %v4473 = vadd.f32 %v3996, %v4472
      %v4474 = vpop.f32.mrb[0].mxu0
      %4475 = vmatprep.mubr.f32.mxu0 0.0
      %4476 = vmatmul.mubr.f32.gmra.mrb[0].mxu0 %v4105
      %v4477 = vpop.f32.mrb[0].mxu0
      %v4478 = vadd.f32 %v3996, %v4477
      %v4479 = vpop.f32.mrb[0].mxu0
      %4480 = vmatprep.mubr.f32.mxu0 0.0
      %4481 = vmatmul.mubr.f32.gmra.mrb[0].mxu0 %v4108
      %v4482 = vpop.f32.mrb[0].mxu0
      %v4483 = vadd.f32 %v3996, %v4482
      %v4484 = vpop.f32.mrb[0].mxu0
      %4485 = vmatprep.mubr.f32.mxu0 0.0
      %4486 = vmatmul.mubr.f32.gmra.mrb[0].mxu0 %v4111
      %v4487 = vpop.f32.mrb[0].mxu0
      %v4488 = vadd.f32 %v3996, %v4487
      %v4489 = vpop.f32.mrb[0].mxu0
      %4490 = vmatprep.mubr.f32.mxu0 0.0
      %4491 = vmatmul.mubr.f32.gmra.mrb[0].mxu0 %v4114
      %v4492 = vpop.f32.mrb[0].mxu0
      %v4493 = vadd.f32 %v3996, %v4492
      %v4494 = vpop.f32.mrb[0].mxu0
      %4495 = vmatprep.mubr.f32.mxu0 0.0
      %4496 = vmatmul.mubr.f32.gmra.mrb[0].mxu0 %v4117
      %v4497 = vpop.f32.mrb[0].mxu0
      %v4498 = vadd.f32 %v3996, %v4497
      %v4499 = vpop.f32.mrb[0].mxu0
      %4500 = vmatprep.mubr.f32.mxu0 0.0
      %4501 = vmatmul.mubr.f32.gmra.mrb[0].mxu0 %v4120
      %v4502 = vpop.f32.mrb[0].mxu0
      %v4503 = vadd.f32 %v3996, %v4502
      %v4504 = vpop.f32.mrb[0].mxu0
      %4505 = vmatprep.mubr.f32.mxu0 0.0
      %4506 = vmatmul.mubr.f32.gmra.mrb[0].mxu0 %v4123
      %v4507 = vpop.f32.mrb[0].mxu0
      %v4508 = vadd.f32 %v3996, %v4507
      %v4509 = vpop.f32.mrb[0].mxu0
      %4510 = vmatprep.mubr.f32.mxu0 0.0
      %4511 = vmatmul.mubr.f32.gmra.mrb[0].mxu0 %v4126
      %v4512 = vpop.f32.mrb[0].mxu0
      %v4513 = vadd.f32 %v3996, %v4512
      %v4514 = vpop.f32.mrb[0].mxu0
      %4515 = vmatprep.mubr.f32.mxu0 0.0
      %4516 = vmatmul.mubr.f32.gmra.mrb[0].mxu0 %v4129
      %v4517 = vpop.f32.mrb[0].mxu0
      %v4518 = vadd.f32 %v3996, %v4517
      %v4519 = vpop.f32.mrb[0].mxu0
      %4520 = vmatprep.mubr.f32.mxu0 0.0
      %4521 = vmatmul.mubr.f32.gmra.mrb[0].mxu0 %v4132
      %v4522 = vpop.f32.mrb[0].mxu0
      %v4523 = vadd.f32 %v3996, %v4522
      %v4524 = vpop.f32.mrb[0].mxu0
      %4525 = vmatprep.mubr.f32.mxu0 0.0
      %4526 = vmatmul.mubr.f32.gmra.mrb[0].mxu0 %v4135
      %v4527 = vpop.f32.mrb[0].mxu0
      %v4528 = vadd.f32 %v3996, %v4527
      %v4529 = vpop.f32.mrb[0].mxu0
      %4530 = vmatprep.mubr.f32.mxu0 0.0
      %4531 = vmatmul.mubr.f32.gmra.mrb[0].mxu0 %v4138
      %v4532 = vpop.f32.mrb[0].mxu0
      %v4533 = vadd.f32 %v3996, %v4532
      %v4534 = vpop.f32.mrb[0].mxu0
      %4535 = vmatprep.mubr.f32.mxu0 0.0
      %4536 = vmatmul.mubr.f32.gmra.mrb[0].mxu0 %v4141
      %v4537 = vpop.f32.mrb[0].mxu0
      %v4538 = vadd.f32 %v3996, %v4537
      %v4539 = vpop.f32.mrb[0].mxu0
      %4540 = vmatprep.mubr.f32.mxu0 0.0
      %4541 = vmatmul.mubr.f32.gmra.mrb[0].mxu0 %v4144
      %v4542 = vpop.f32.mrb[0].mxu0
      %v4543 = vadd.f32 %v3996, %v4542
      %v4544 = vpop.f32.mrb[0].mxu0
      %4545 = vmatprep.mubr.f32.mxu0 0.0
      %4546 = vmatmul.mubr.f32.gmra.mrb[0].mxu0 %v4147
      %v4547 = vpop.f32.mrb[0].mxu0
      %v4548 = vadd.f32 %v3996, %v4547
      %v4549 = vpop.f32.mrb[0].mxu0
      %4550 = vmatprep.mubr.f32.mxu0 0.0
      %4551 = vmatmul.mubr.f32.gmra.mrb[0].mxu0 %v4150
      %v4552 = vpop.f32.mrb[0].mxu0
      %v4553 = vadd.f32 %v3996, %v4552
      %v4554 = vpop.f32.mrb[0].mxu0
      %4555 = vmatprep.mubr.f32.mxu0 0.0
      %4556 = vmatmul.mubr.f32.gmra.mrb[0].mxu0 %v4153
      %v4557 = vpop.f32.mrb[0].mxu0
      %v4558 = vadd.f32 %v3996, %v4557
      %v4559 = vpop.f32.mrb[0].mxu0
      %4560 = vmatprep.mubr.f32.mxu0 0.0
      %4561 = vmatmul.mubr.f32.gmra.mrb[0].mxu0 %v4156
      %v4562 = vpop.f32.mrb[0].mxu0
      %v4563 = vadd.f32 %v3996, %v4562
      %v4564 = vpop.f32.mrb[0].mxu0
      %4565 = vmatprep.mubr.f32.mxu0 0.0
      %4566 = vmatmul.mubr.f32.gmra.mrb[0].mxu0 %v4159
      %v4567 = vpop.f32.mrb[0].mxu0
      %v4568 = vadd.f32 %v3996, %v4567
      %v4569 = vpop.f32.mrb[0].mxu0
      %4570 = vmatprep.mubr.f32.mxu0 0.0
      %4571 = vmatmul.mubr.f32.gmra.mrb[0].mxu0 %v4162
      %v4572 = vpop.f32.mrb[0].mxu0
      %v4573 = vadd.f32 %v3996, %v4572
      %v4574 = vpop.f32.mrb[0].mxu0
      %4575 = vmatprep.mubr.f32.mxu0 0.0
      %4576 = vmatmul.mubr.f32.gmra.mrb[0].mxu0 %v4165
      %v4577 = vpop.f32.mrb[0].mxu0
      %v4578 = vadd.f32 %v3996, %v4577
      %v4579 = vpop.f32.mrb[0].mxu0
      %4580 = vmatprep.mubr.f32.mxu0 0.0
      %4581 = vmatmul.mubr.f32.gmra.mrb[0].mxu0 %v4168
      %v4582 = vpop.f32.mrb[0].mxu0
      %v4583 = vadd.f32 %v3996, %v4582
      %v4584 = vpop.f32.mrb[0].mxu0
      %4585 = vmatprep.mubr.f32.mxu0 0.0
      %4586 = vmatmul.mubr.f32.gmra.mrb[0].mxu0 %v4171
      %v4587 = vpop.f32.mrb[0].mxu0
      %v4588 = vadd.f32 %v3996, %v4587
      %v4589 = vpop.f32.mrb[0].mxu0
      %4590 = vmatprep.mubr.f32.mxu0 0.0
      %4591 = vmatmul.mubr.f32.gmra.mrb[0].mxu0 %v4174
      %v4592 = vpop.f32.mrb[0].mxu0
      %v4593 = vadd.f32 %v3996, %v4592
      %v4594 = vpop.f32.mrb[0].mxu0
      %4595 = vmatprep.mubr.f32.mxu0 0.0
      %4596 = vmatmul.mubr.f32.gmra.mrb[0].mxu0 %v4177
      %v4597 = vpop.f32.mrb[0].mxu0
      %v4598 = vadd.f32 %v3996, %v4597
      %v4599 = vpop.f32.mrb[0].mxu0
      %4600 = vmatprep.mubr.f32.mxu0 0.0
      %4601 = vmatmul.mubr.f32.gmra.mrb[0].mxu0 %v4180
      %v4602 = vpop.f32.mrb[0].mxu0
      %v4603 = vadd.f32 %v3996, %v4602
      %v4604 = vpop.f32.mrb[0].mxu0
      %4605 = vmatprep.mubr.f32.mxu0 0.0
      %4606 = vmatmul.mubr.f32.gmra.mrb[0].mxu0 %v4183
      %v4607 = vpop.f32.mrb[0].mxu0
      %v4608 = vadd.f32 %v3996, %v4607
      %v4609 = vpop.f32.mrb[0].mxu0
      %4610 = vmatprep.mubr.f32.mxu0 0.0
      %4611 = vmatmul.mubr.f32.gmra.mrb[0].mxu0 %v4186
      %v4612 = vpop.f32.mrb[0].mxu0
      %v4613 = vadd.f32 %v3996, %v4612
      %v4614 = vpop.f32.mrb[0].mxu0
      %4615 = vmatprep.mubr.f32.mxu0 0.0
      %4616 = vmatmul.mubr.f32.gmra.mrb[0].mxu0 %v4189
      %v4617 = vpop.f32.mrb[0].mxu0
      %v4618 = vadd.f32 %v3996, %v4617
      %v4619 = vpop.f32.mrb[0].mxu0
      %4620 = vmatprep.mubr.f32.mxu0 0.0
      %4621 = vmatmul.mubr.f32.gmra.mrb[0].mxu0 %v4192
      %v4622 = vpop.f32.mrb[0].mxu0
      %v4623 = vadd.f32 %v3996, %v4622
      %v4624 = vpop.f32.mrb[0].mxu0
      %4625 = vmatprep.mubr.f32.mxu0 0.0
      %4626 = vmatmul.mubr.f32.gmra.mrb[0].mxu0 %v4195
      %v4627 = vpop.f32.mrb[0].mxu0
      %v4628 = vadd.f32 %v3996, %v4627
      %v4629 = vpop.f32.mrb[0].mxu0
      %4630 = vmatprep.mubr.f32.mxu0 0.0
      %4631 = vmatmul.mubr.f32.gmra.mrb[0].mxu0 %v4198
      %v4632 = vpop.f32.mrb[0].mxu0
      %v4633 = vadd.f32 %v3996, %v4632
      %v4634 = vpop.f32.mrb[0].mxu0
      %4635 = vmatprep.mubr.f32.mxu0 0.0
      %4636 = vmatmul.mubr.f32.gmra.mrb[0].mxu0 %v4201
      %v4637 = vpop.f32.mrb[0].mxu0
      %v4638 = vadd.f32 %v3996, %v4637
      %v4639 = vpop.f32.mrb[0].mxu0
      %4640 = vmatprep.mubr.f32.mxu0 0.0
      %4641 = vmatmul.mubr.f32.gmra.mrb[0].mxu0 %v4204
      %v4642 = vpop.f32.mrb[0].mxu0
      %v4643 = vadd.f32 %v3996, %v4642
      %v4644 = vpop.f32.mrb[0].mxu0
      %4645 = vmatprep.mubr.f32.mxu0 0.0
      %4646 = vmatmul.mubr.f32.gmra.mrb[0].mxu0 %v4207
      %v4647 = vpop.f32.mrb[0].mxu0
      %v4648 = vadd.f32 %v3996, %v4647
      %v4649 = vpop.f32.mrb[0].mxu0
      %4650 = vmatprep.mubr.f32.mxu0 0.0
      %4651 = vmatmul.mubr.f32.gmra.mrb[0].mxu0 %v4210
      %v4652 = vpop.f32.mrb[0].mxu0
      %v4653 = vadd.f32 %v3996, %v4652
      %v4654 = vpop.f32.mrb[0].mxu0
      %4655 = vmatprep.mubr.f32.mxu0 0.0
      %4656 = vmatmul.mubr.f32.gmra.mrb[0].mxu0 %v4213
      %v4657 = vpop.f32.mrb[0].mxu0
      %v4658 = vadd.f32 %v3996, %v4657
      %v4659 = vpop.f32.mrb[0].mxu0
      %4660 = vmatprep.mubr.f32.mxu0 0.0
      %4661 = vmatmul.mubr.f32.gmra.mrb[0].mxu0 %v4216
      %v4662 = vpop.f32.mrb[0].mxu0
      %v4663 = vadd.f32 %v3996, %v4662
      %v4664 = vpop.f32.mrb[0].mxu0
      %4665 = vmatprep.mubr.f32.mxu0 0.0
      %4666 = vmatmul.mubr.f32.gmra.mrb[0].mxu0 %v4219
      %v4667 = vpop.f32.mrb[0].mxu0
      %v4668 = vadd.f32 %v3996, %v4667
      %v4669 = vpop.f32.mrb[0].mxu0
      %4670 = vmatprep.mubr.f32.mxu0 0.0
      %4671 = vmatmul.mubr.f32.gmra.mrb[0].mxu0 %v4222
      %v4672 = vpop.f32.mrb[0].mxu0
      %v4673 = vadd.f32 %v3996, %v4672
      %v4674 = vpop.f32.mrb[0].mxu0
      %4675 = vmatprep.mubr.f32.mxu0 0.0
      %4676 = vmatmul.mubr.f32.gmra.mrb[0].mxu0 %v4225
      %v4677 = vpop.f32.mrb[0].mxu0
      %v4678 = vadd.f32 %v3996, %v4677
      %v4679 = vpop.f32.mrb[0].mxu0
      %4680 = vmatprep.mubr.f32.mxu0 0.0
      %4681 = vmatmul.mubr.f32.gmra.mrb[0].mxu0 %v4228
      %v4682 = vpop.f32.mrb[0].mxu0
      %v4683 = vadd.f32 %v3996, %v4682
      %v4684 = vpop.f32.mrb[0].mxu0
      %4685 = vmatprep.mubr.f32.mxu0 0.0
      %4686 = vmatmul.mubr.f32.gmra.mrb[0].mxu0 %v4231
      %v4687 = vpop.f32.mrb[0].mxu0
      %v4688 = vadd.f32 %v3996, %v4687
      %v4689 = vpop.f32.mrb[0].mxu0
      %4690 = vmatprep.mubr.f32.mxu0 0.0
      %4691 = vmatmul.mubr.f32.gmra.mrb[0].mxu0 %v4234
      %v4692 = vpop.f32.mrb[0].mxu0
      %v4693 = vadd.f32 %v3996, %v4692
      %v4694 = vpop.f32.mrb[0].mxu0
      %4695 = vdwg.mxu0
      %v4696 = vmax.f32 %v4303, 0.0
      %v4697 = vmax.f32 %v4308, 0.0
      %v4698 = vmax.f32 %v4313, 0.0
      %v4699 = vmax.f32 %v4318, 0.0
      %v4700 = vmax.f32 %v4323, 0.0
      %v4701 = vmax.f32 %v4328, 0.0
      %v4702 = vmax.f32 %v4333, 0.0
      %v4703 = vmax.f32 %v4338, 0.0
      %v4704 = vmax.f32 %v4343, 0.0
      %v4705 = vmax.f32 %v4348, 0.0
      %v4706 = vmax.f32 %v4353, 0.0
      %v4707 = vmax.f32 %v4358, 0.0
      %v4708 = vmax.f32 %v4363, 0.0
      %v4709 = vmax.f32 %v4368, 0.0
      %v4710 = vmax.f32 %v4373, 0.0
      %v4711 = vmax.f32 %v4378, 0.0
      %v4712 = vmax.f32 %v4383, 0.0
      %v4713 = vmax.f32 %v4388, 0.0
      %v4714 = vmax.f32 %v4393, 0.0
      %v4715 = vmax.f32 %v4398, 0.0
      %v4716 = vmax.f32 %v4403, 0.0
      %v4717 = vmax.f32 %v4408, 0.0
      %v4718 = vmax.f32 %v4413, 0.0
      %v4719 = vmax.f32 %v4418, 0.0
      %v4720 = vmax.f32 %v4423, 0.0
      %v4721 = vmax.f32 %v4428, 0.0
      %v4722 = vmax.f32 %v4433, 0.0
      %v4723 = vmax.f32 %v4438, 0.0
      %v4724 = vmax.f32 %v4443, 0.0
      %v4725 = vmax.f32 %v4448, 0.0
      %v4726 = vmax.f32 %v4453, 0.0
      %v4727 = vmax.f32 %v4458, 0.0
      %v4728 = vmax.f32 %v4463, 0.0
      %v4729 = vmax.f32 %v4468, 0.0
      %v4730 = vmax.f32 %v4473, 0.0
      %v4731 = vmax.f32 %v4478, 0.0
      %v4732 = vmax.f32 %v4483, 0.0
      %v4733 = vmax.f32 %v4488, 0.0
      %v4734 = vmax.f32 %v4493, 0.0
      %v4735 = vmax.f32 %v4498, 0.0
      %v4736 = vmax.f32 %v4503, 0.0
      %v4737 = vmax.f32 %v4508, 0.0
      %v4738 = vmax.f32 %v4513, 0.0
      %v4739 = vmax.f32 %v4518, 0.0
      %v4740 = vmax.f32 %v4523, 0.0
      %v4741 = vmax.f32 %v4528, 0.0
      %v4742 = vmax.f32 %v4533, 0.0
      %v4743 = vmax.f32 %v4538, 0.0
      %v4744 = vmax.f32 %v4543, 0.0
      %v4745 = vmax.f32 %v4548, 0.0
      %v4746 = vmax.f32 %v4553, 0.0
      %v4747 = vmax.f32 %v4558, 0.0
      %v4748 = vmax.f32 %v4563, 0.0
      %v4749 = vmax.f32 %v4568, 0.0
      %v4750 = vmax.f32 %v4573, 0.0
      %v4751 = vmax.f32 %v4578, 0.0
      %v4752 = vmax.f32 %v4583, 0.0
      %v4753 = vmax.f32 %v4588, 0.0
      %v4754 = vmax.f32 %v4593, 0.0
      %v4755 = vmax.f32 %v4598, 0.0
      %v4756 = vmax.f32 %v4603, 0.0
      %v4757 = vmax.f32 %v4608, 0.0
      %v4758 = vmax.f32 %v4613, 0.0
      %v4759 = vmax.f32 %v4618, 0.0
      %v4760 = vmax.f32 %v4623, 0.0
      %v4761 = vmax.f32 %v4628, 0.0
      %v4762 = vmax.f32 %v4633, 0.0
      %v4763 = vmax.f32 %v4638, 0.0
      %v4764 = vmax.f32 %v4643, 0.0
      %v4765 = vmax.f32 %v4648, 0.0
      %v4766 = vmax.f32 %v4653, 0.0
      %v4767 = vmax.f32 %v4658, 0.0
      %v4768 = vmax.f32 %v4663, 0.0
      %v4769 = vmax.f32 %v4668, 0.0
      %v4770 = vmax.f32 %v4673, 0.0
      %v4771 = vmax.f32 %v4678, 0.0
      %v4772 = vmax.f32 %v4683, 0.0
      %v4773 = vmax.f32 %v4688, 0.0
      %v4774 = vmax.f32 %v4693, 0.0
      %v4775 = vld [vmem:[%s5] sm:$0xff]
      %v4776 = vld [vmem:[%s5 + $0x8] sm:$0xff]
      %v4777 = vld [vmem:[%s5 + $0x10] sm:$0xff]
      %v4778 = vld [vmem:[%s5 + $0x18] sm:$0xff]
      %v4779 = vld [vmem:[%s5 + $0x20] sm:$0xff]
      %v4780 = vld [vmem:[%s5 + $0x28] sm:$0xff]
      %v4781 = vld [vmem:[%s5 + $0x30] sm:$0xff]
      %v4782 = vld [vmem:[%s5 + $0x38] sm:$0xff]
      %v4783 = vld [vmem:[#allocation2] sm:$0x1]
      %v4785 = vlaneseq
      %v4786 = vshrl.u32 %v4785, 7
      %v4787 = vsub.s32 0, %v4786
      %v4788 = vrot.slane %v4783, %v4787
      %v4791 = vsel %vm3998, %v4696, 0
      %v4794 = vsel %vm3998, %v4697, 0
      %v4797 = vsel %vm3998, %v4698, 0
      %v4800 = vsel %vm3998, %v4699, 0
      %v4803 = vsel %vm3998, %v4700, 0
      %v4806 = vsel %vm3998, %v4701, 0
      %v4809 = vsel %vm3998, %v4702, 0
      %v4812 = vsel %vm3998, %v4703, 0
      %v4815 = vsel %vm3998, %v4704, 0
      %v4818 = vsel %vm3998, %v4705, 0
      %v4821 = vsel %vm3998, %v4706, 0
      %v4824 = vsel %vm3998, %v4707, 0
      %v4827 = vsel %vm3998, %v4708, 0
      %v4830 = vsel %vm3998, %v4709, 0
      %v4833 = vsel %vm3998, %v4710, 0
      %v4836 = vsel %vm3998, %v4711, 0
      %v4839 = vsel %vm3998, %v4712, 0
      %v4842 = vsel %vm3998, %v4713, 0
      %v4845 = vsel %vm3998, %v4714, 0
      %v4848 = vsel %vm3998, %v4715, 0
      %v4851 = vsel %vm3998, %v4716, 0
      %v4854 = vsel %vm3998, %v4717, 0
      %v4857 = vsel %vm3998, %v4718, 0
      %v4860 = vsel %vm3998, %v4719, 0
      %v4863 = vsel %vm3998, %v4720, 0
      %v4866 = vsel %vm3998, %v4721, 0
      %v4869 = vsel %vm3998, %v4722, 0
      %v4872 = vsel %vm3998, %v4723, 0
      %v4875 = vsel %vm3998, %v4724, 0
      %v4878 = vsel %vm3998, %v4725, 0
      %v4881 = vsel %vm3998, %v4726, 0
      %v4884 = vsel %vm3998, %v4727, 0
      %v4887 = vsel %vm3998, %v4728, 0
      %v4890 = vsel %vm3998, %v4729, 0
      %v4893 = vsel %vm3998, %v4730, 0
      %v4896 = vsel %vm3998, %v4731, 0
      %v4899 = vsel %vm3998, %v4732, 0
      %v4902 = vsel %vm3998, %v4733, 0
      %v4905 = vsel %vm3998, %v4734, 0
      %v4908 = vsel %vm3998, %v4735, 0
      %v4911 = vsel %vm3998, %v4736, 0
      %v4914 = vsel %vm3998, %v4737, 0
      %v4917 = vsel %vm3998, %v4738, 0
      %v4920 = vsel %vm3998, %v4739, 0
      %v4923 = vsel %vm3998, %v4740, 0
      %v4926 = vsel %vm3998, %v4741, 0
      %v4929 = vsel %vm3998, %v4742, 0
      %v4932 = vsel %vm3998, %v4743, 0
      %v4935 = vsel %vm3998, %v4744, 0
      %v4938 = vsel %vm3998, %v4745, 0
      %v4941 = vsel %vm3998, %v4746, 0
      %v4944 = vsel %vm3998, %v4747, 0
      %v4947 = vsel %vm3998, %v4748, 0
      %v4950 = vsel %vm3998, %v4749, 0
      %v4953 = vsel %vm3998, %v4750, 0
      %v4956 = vsel %vm3998, %v4751, 0
      %v4959 = vsel %vm3998, %v4752, 0
      %v4962 = vsel %vm3998, %v4753, 0
      %v4965 = vsel %vm3998, %v4754, 0
      %v4968 = vsel %vm3998, %v4755, 0
      %v4971 = vsel %vm3998, %v4756, 0
      %v4974 = vsel %vm3998, %v4757, 0
      %v4977 = vsel %vm3998, %v4758, 0
      %v4980 = vsel %vm3998, %v4759, 0
      %v4983 = vsel %vm3998, %v4760, 0
      %v4986 = vsel %vm3998, %v4761, 0
      %v4989 = vsel %vm3998, %v4762, 0
      %v4992 = vsel %vm3998, %v4763, 0
      %v4995 = vsel %vm3998, %v4764, 0
      %v4998 = vsel %vm3998, %v4765, 0
      %v5001 = vsel %vm3998, %v4766, 0
      %v5004 = vsel %vm3998, %v4767, 0
      %v5007 = vsel %vm3998, %v4768, 0
      %v5010 = vsel %vm3998, %v4769, 0
      %v5013 = vsel %vm3998, %v4770, 0
      %v5016 = vsel %vm3998, %v4771, 0
      %v5019 = vsel %vm3998, %v4772, 0
      %v5022 = vsel %vm3998, %v4773, 0
      %v5025 = vsel %vm3998, %v4774, 0
      %5027 = vmatprep.subr.mxu0 0.0
      %5028 = vmatpush1.msra.mxu0 %v4775
      %5029 = vmatprep.subr.mxu0 0.0
      %5030 = vmatpush1.msra.mxu0 %v4776
      %5031 = vmatprep.subr.mxu0 0.0
      %5032 = vmatpush1.msra.mxu0 %v4777
      %5033 = vmatprep.subr.mxu0 0.0
      %5034 = vmatpush1.msra.mxu0 %v4778
      %5035 = vmatprep.subr.mxu0 0.0
      %5036 = vmatpush1.msra.mxu0 %v4779
      %5037 = vmatprep.subr.mxu0 0.0
      %5038 = vmatpush1.msra.mxu0 %v4780
      %5039 = vmatprep.subr.mxu0 0.0
      %5040 = vmatpush1.msra.mxu0 %v4781
      %5041 = vmatprep.subr.mxu0 0.0
      %5042 = vmatpush1.msra.mxu0 %v4782
      %5043 = vmatprep.subr.mxu0 0.0
      %5044 = vmatpush1.msra.mxu0 0.0
      %5045 = vmatprep.subr.mxu0 0.0
      %5046 = vmatpush1.msra.mxu0 0.0
      %5047 = vmatprep.subr.mxu0 0.0
      %5048 = vmatpush1.msra.mxu0 0.0
      %5049 = vmatprep.subr.mxu0 0.0
      %5050 = vmatpush1.msra.mxu0 0.0
      %5051 = vmatprep.subr.mxu0 0.0
      %5052 = vmatpush1.msra.mxu0 0.0
      %5053 = vmatprep.subr.mxu0 0.0
      %5054 = vmatpush1.msra.mxu0 0.0
      %5055 = vmatprep.subr.mxu0 0.0
      %5056 = vmatpush1.msra.mxu0 0.0
      %5057 = vmatprep.subr.mxu0 0.0
      %5058 = vmatpush1.msra.mxu0 0.0
      %5059 = vmatprep.subr.mxu0 0.0
      %5060 = vmatpush1.msra.mxu0 0.0
      %5061 = vmatprep.subr.mxu0 0.0
      %5062 = vmatpush1.msra.mxu0 0.0
      %5063 = vmatprep.subr.mxu0 0.0
      %5064 = vmatpush1.msra.mxu0 0.0
      %5065 = vmatprep.subr.mxu0 0.0
      %5066 = vmatpush1.msra.mxu0 0.0
      %5067 = vmatprep.subr.mxu0 0.0
      %5068 = vmatpush1.msra.mxu0 0.0
      %5069 = vmatprep.subr.mxu0 0.0
      %5070 = vmatpush1.msra.mxu0 0.0
      %5071 = vmatprep.subr.mxu0 0.0
      %5072 = vmatpush1.msra.mxu0 0.0
      %5073 = vmatprep.subr.mxu0 0.0
      %5074 = vmatpush1.msra.mxu0 0.0
      %5075 = vmatprep.subr.mxu0 0.0
      %5076 = vmatpush1.msra.mxu0 0.0
      %5077 = vmatprep.subr.mxu0 0.0
      %5078 = vmatpush1.msra.mxu0 0.0
      %5079 = vmatprep.subr.mxu0 0.0
      %5080 = vmatpush1.msra.mxu0 0.0
      %5081 = vmatprep.subr.mxu0 0.0
      %5082 = vmatpush1.msra.mxu0 0.0
      %5083 = vmatprep.subr.mxu0 0.0
      %5084 = vmatpush1.msra.mxu0 0.0
      %5085 = vmatprep.subr.mxu0 0.0
      %5086 = vmatpush1.msra.mxu0 0.0
      %5087 = vmatprep.subr.mxu0 0.0
      %5088 = vmatpush1.msra.mxu0 0.0
      %5089 = vmatprep.subr.mxu0 0.0
      %5090 = vmatpush1.msra.mxu0 0.0
      %5091 = vmatprep.mubr.f32.mxu0 0.0
      %5092 = vmatmul.mubr.f32.gmra.mrb[0].mxu0 %v4791
      %v5093 = vpop.f32.mrb[0].mxu0
      %v5094 = vadd.f32 %v4788, %v5093
      %v5095 = vpop.f32.mrb[0].mxu0
      %5096 = vmatprep.mubr.f32.mxu0 0.0
      %5097 = vmatmul.mubr.f32.gmra.mrb[0].mxu0 %v4794
      %v5098 = vpop.f32.mrb[0].mxu0
      %v5099 = vadd.f32 %v4788, %v5098
      %v5100 = vpop.f32.mrb[0].mxu0
      %5101 = vmatprep.mubr.f32.mxu0 0.0
      %5102 = vmatmul.mubr.f32.gmra.mrb[0].mxu0 %v4797
      %v5103 = vpop.f32.mrb[0].mxu0
      %v5104 = vadd.f32 %v4788, %v5103
      %v5105 = vpop.f32.mrb[0].mxu0
      %5106 = vmatprep.mubr.f32.mxu0 0.0
      %5107 = vmatmul.mubr.f32.gmra.mrb[0].mxu0 %v4800
      %v5108 = vpop.f32.mrb[0].mxu0
      %v5109 = vadd.f32 %v4788, %v5108
      %v5110 = vpop.f32.mrb[0].mxu0
      %5111 = vmatprep.mubr.f32.mxu0 0.0
      %5112 = vmatmul.mubr.f32.gmra.mrb[0].mxu0 %v4803
      %v5113 = vpop.f32.mrb[0].mxu0
      %v5114 = vadd.f32 %v4788, %v5113
      %v5115 = vpop.f32.mrb[0].mxu0
      %5116 = vmatprep.mubr.f32.mxu0 0.0
      %5117 = vmatmul.mubr.f32.gmra.mrb[0].mxu0 %v4806
      %v5118 = vpop.f32.mrb[0].mxu0
      %v5119 = vadd.f32 %v4788, %v5118
      %v5120 = vpop.f32.mrb[0].mxu0
      %5121 = vmatprep.mubr.f32.mxu0 0.0
      %5122 = vmatmul.mubr.f32.gmra.mrb[0].mxu0 %v4809
      %v5123 = vpop.f32.mrb[0].mxu0
      %v5124 = vadd.f32 %v4788, %v5123
      %v5125 = vpop.f32.mrb[0].mxu0
      %5126 = vmatprep.mubr.f32.mxu0 0.0
      %5127 = vmatmul.mubr.f32.gmra.mrb[0].mxu0 %v4812
      %v5128 = vpop.f32.mrb[0].mxu0
      %v5129 = vadd.f32 %v4788, %v5128
      %v5130 = vpop.f32.mrb[0].mxu0
      %5131 = vmatprep.mubr.f32.mxu0 0.0
      %5132 = vmatmul.mubr.f32.gmra.mrb[0].mxu0 %v4815
      %v5133 = vpop.f32.mrb[0].mxu0
      %v5134 = vadd.f32 %v4788, %v5133
      %v5135 = vpop.f32.mrb[0].mxu0
      %5136 = vmatprep.mubr.f32.mxu0 0.0
      %5137 = vmatmul.mubr.f32.gmra.mrb[0].mxu0 %v4818
      %v5138 = vpop.f32.mrb[0].mxu0
      %v5139 = vadd.f32 %v4788, %v5138
      %v5140 = vpop.f32.mrb[0].mxu0
      %5141 = vmatprep.mubr.f32.mxu0 0.0
      %5142 = vmatmul.mubr.f32.gmra.mrb[0].mxu0 %v4821
      %v5143 = vpop.f32.mrb[0].mxu0
      %v5144 = vadd.f32 %v4788, %v5143
      %v5145 = vpop.f32.mrb[0].mxu0
      %5146 = vmatprep.mubr.f32.mxu0 0.0
      %5147 = vmatmul.mubr.f32.gmra.mrb[0].mxu0 %v4824
      %v5148 = vpop.f32.mrb[0].mxu0
      %v5149 = vadd.f32 %v4788, %v5148
      %v5150 = vpop.f32.mrb[0].mxu0
      %5151 = vmatprep.mubr.f32.mxu0 0.0
      %5152 = vmatmul.mubr.f32.gmra.mrb[0].mxu0 %v4827
      %v5153 = vpop.f32.mrb[0].mxu0
      %v5154 = vadd.f32 %v4788, %v5153
      %v5155 = vpop.f32.mrb[0].mxu0
      %5156 = vmatprep.mubr.f32.mxu0 0.0
      %5157 = vmatmul.mubr.f32.gmra.mrb[0].mxu0 %v4830
      %v5158 = vpop.f32.mrb[0].mxu0
      %v5159 = vadd.f32 %v4788, %v5158
      %v5160 = vpop.f32.mrb[0].mxu0
      %5161 = vmatprep.mubr.f32.mxu0 0.0
      %5162 = vmatmul.mubr.f32.gmra.mrb[0].mxu0 %v4833
      %v5163 = vpop.f32.mrb[0].mxu0
      %v5164 = vadd.f32 %v4788, %v5163
      %v5165 = vpop.f32.mrb[0].mxu0
      %5166 = vmatprep.mubr.f32.mxu0 0.0
      %5167 = vmatmul.mubr.f32.gmra.mrb[0].mxu0 %v4836
      %v5168 = vpop.f32.mrb[0].mxu0
      %v5169 = vadd.f32 %v4788, %v5168
      %v5170 = vpop.f32.mrb[0].mxu0
      %5171 = vmatprep.mubr.f32.mxu0 0.0
      %5172 = vmatmul.mubr.f32.gmra.mrb[0].mxu0 %v4839
      %v5173 = vpop.f32.mrb[0].mxu0
      %v5174 = vadd.f32 %v4788, %v5173
      %v5175 = vpop.f32.mrb[0].mxu0
      %5176 = vmatprep.mubr.f32.mxu0 0.0
      %5177 = vmatmul.mubr.f32.gmra.mrb[0].mxu0 %v4842
      %v5178 = vpop.f32.mrb[0].mxu0
      %v5179 = vadd.f32 %v4788, %v5178
      %v5180 = vpop.f32.mrb[0].mxu0
      %5181 = vmatprep.mubr.f32.mxu0 0.0
      %5182 = vmatmul.mubr.f32.gmra.mrb[0].mxu0 %v4845
      %v5183 = vpop.f32.mrb[0].mxu0
      %v5184 = vadd.f32 %v4788, %v5183
      %v5185 = vpop.f32.mrb[0].mxu0
      %5186 = vmatprep.mubr.f32.mxu0 0.0
      %5187 = vmatmul.mubr.f32.gmra.mrb[0].mxu0 %v4848
      %v5188 = vpop.f32.mrb[0].mxu0
      %v5189 = vadd.f32 %v4788, %v5188
      %v5190 = vpop.f32.mrb[0].mxu0
      %5191 = vmatprep.mubr.f32.mxu0 0.0
      %5192 = vmatmul.mubr.f32.gmra.mrb[0].mxu0 %v4851
      %v5193 = vpop.f32.mrb[0].mxu0
      %v5194 = vadd.f32 %v4788, %v5193
      %v5195 = vpop.f32.mrb[0].mxu0
      %5196 = vmatprep.mubr.f32.mxu0 0.0
      %5197 = vmatmul.mubr.f32.gmra.mrb[0].mxu0 %v4854
      %v5198 = vpop.f32.mrb[0].mxu0
      %v5199 = vadd.f32 %v4788, %v5198
      %v5200 = vpop.f32.mrb[0].mxu0
      %5201 = vmatprep.mubr.f32.mxu0 0.0
      %5202 = vmatmul.mubr.f32.gmra.mrb[0].mxu0 %v4857
      %v5203 = vpop.f32.mrb[0].mxu0
      %v5204 = vadd.f32 %v4788, %v5203
      %v5205 = vpop.f32.mrb[0].mxu0
      %5206 = vmatprep.mubr.f32.mxu0 0.0
      %5207 = vmatmul.mubr.f32.gmra.mrb[0].mxu0 %v4860
      %v5208 = vpop.f32.mrb[0].mxu0
      %v5209 = vadd.f32 %v4788, %v5208
      %v5210 = vpop.f32.mrb[0].mxu0
      %5211 = vmatprep.mubr.f32.mxu0 0.0
      %5212 = vmatmul.mubr.f32.gmra.mrb[0].mxu0 %v4863
      %v5213 = vpop.f32.mrb[0].mxu0
      %v5214 = vadd.f32 %v4788, %v5213
      %v5215 = vpop.f32.mrb[0].mxu0
      %5216 = vmatprep.mubr.f32.mxu0 0.0
      %5217 = vmatmul.mubr.f32.gmra.mrb[0].mxu0 %v4866
      %v5218 = vpop.f32.mrb[0].mxu0
      %v5219 = vadd.f32 %v4788, %v5218
      %v5220 = vpop.f32.mrb[0].mxu0
      %5221 = vmatprep.mubr.f32.mxu0 0.0
      %5222 = vmatmul.mubr.f32.gmra.mrb[0].mxu0 %v4869
      %v5223 = vpop.f32.mrb[0].mxu0
      %v5224 = vadd.f32 %v4788, %v5223
      %v5225 = vpop.f32.mrb[0].mxu0
      %5226 = vmatprep.mubr.f32.mxu0 0.0
      %5227 = vmatmul.mubr.f32.gmra.mrb[0].mxu0 %v4872
      %v5228 = vpop.f32.mrb[0].mxu0
      %v5229 = vadd.f32 %v4788, %v5228
      %v5230 = vpop.f32.mrb[0].mxu0
      %5231 = vmatprep.mubr.f32.mxu0 0.0
      %5232 = vmatmul.mubr.f32.gmra.mrb[0].mxu0 %v4875
      %v5233 = vpop.f32.mrb[0].mxu0
      %v5234 = vadd.f32 %v4788, %v5233
      %v5235 = vpop.f32.mrb[0].mxu0
      %5236 = vmatprep.mubr.f32.mxu0 0.0
      %5237 = vmatmul.mubr.f32.gmra.mrb[0].mxu0 %v4878
      %v5238 = vpop.f32.mrb[0].mxu0
      %v5239 = vadd.f32 %v4788, %v5238
      %v5240 = vpop.f32.mrb[0].mxu0
      %5241 = vmatprep.mubr.f32.mxu0 0.0
      %5242 = vmatmul.mubr.f32.gmra.mrb[0].mxu0 %v4881
      %v5243 = vpop.f32.mrb[0].mxu0
      %v5244 = vadd.f32 %v4788, %v5243
      %v5245 = vpop.f32.mrb[0].mxu0
      %5246 = vmatprep.mubr.f32.mxu0 0.0
      %5247 = vmatmul.mubr.f32.gmra.mrb[0].mxu0 %v4884
      %v5248 = vpop.f32.mrb[0].mxu0
      %v5249 = vadd.f32 %v4788, %v5248
      %v5250 = vpop.f32.mrb[0].mxu0
      %5251 = vmatprep.mubr.f32.mxu0 0.0
      %5252 = vmatmul.mubr.f32.gmra.mrb[0].mxu0 %v4887
      %v5253 = vpop.f32.mrb[0].mxu0
      %v5254 = vadd.f32 %v4788, %v5253
      %v5255 = vpop.f32.mrb[0].mxu0
      %5256 = vmatprep.mubr.f32.mxu0 0.0
      %5257 = vmatmul.mubr.f32.gmra.mrb[0].mxu0 %v4890
      %v5258 = vpop.f32.mrb[0].mxu0
      %v5259 = vadd.f32 %v4788, %v5258
      %v5260 = vpop.f32.mrb[0].mxu0
      %5261 = vmatprep.mubr.f32.mxu0 0.0
      %5262 = vmatmul.mubr.f32.gmra.mrb[0].mxu0 %v4893
      %v5263 = vpop.f32.mrb[0].mxu0
      %v5264 = vadd.f32 %v4788, %v5263
      %v5265 = vpop.f32.mrb[0].mxu0
      %5266 = vmatprep.mubr.f32.mxu0 0.0
      %5267 = vmatmul.mubr.f32.gmra.mrb[0].mxu0 %v4896
      %v5268 = vpop.f32.mrb[0].mxu0
      %v5269 = vadd.f32 %v4788, %v5268
      %v5270 = vpop.f32.mrb[0].mxu0
      %5271 = vmatprep.mubr.f32.mxu0 0.0
      %5272 = vmatmul.mubr.f32.gmra.mrb[0].mxu0 %v4899
      %v5273 = vpop.f32.mrb[0].mxu0
      %v5274 = vadd.f32 %v4788, %v5273
      %v5275 = vpop.f32.mrb[0].mxu0
      %5276 = vmatprep.mubr.f32.mxu0 0.0
      %5277 = vmatmul.mubr.f32.gmra.mrb[0].mxu0 %v4902
      %v5278 = vpop.f32.mrb[0].mxu0
      %v5279 = vadd.f32 %v4788, %v5278
      %v5280 = vpop.f32.mrb[0].mxu0
      %5281 = vmatprep.mubr.f32.mxu0 0.0
      %5282 = vmatmul.mubr.f32.gmra.mrb[0].mxu0 %v4905
      %v5283 = vpop.f32.mrb[0].mxu0
      %v5284 = vadd.f32 %v4788, %v5283
      %v5285 = vpop.f32.mrb[0].mxu0
      %5286 = vmatprep.mubr.f32.mxu0 0.0
      %5287 = vmatmul.mubr.f32.gmra.mrb[0].mxu0 %v4908
      %v5288 = vpop.f32.mrb[0].mxu0
      %v5289 = vadd.f32 %v4788, %v5288
      %v5290 = vpop.f32.mrb[0].mxu0
      %5291 = vmatprep.mubr.f32.mxu0 0.0
      %5292 = vmatmul.mubr.f32.gmra.mrb[0].mxu0 %v4911
      %v5293 = vpop.f32.mrb[0].mxu0
      %v5294 = vadd.f32 %v4788, %v5293
      %v5295 = vpop.f32.mrb[0].mxu0
      %5296 = vmatprep.mubr.f32.mxu0 0.0
      %5297 = vmatmul.mubr.f32.gmra.mrb[0].mxu0 %v4914
      %v5298 = vpop.f32.mrb[0].mxu0
      %v5299 = vadd.f32 %v4788, %v5298
      %v5300 = vpop.f32.mrb[0].mxu0
      %5301 = vmatprep.mubr.f32.mxu0 0.0
      %5302 = vmatmul.mubr.f32.gmra.mrb[0].mxu0 %v4917
      %v5303 = vpop.f32.mrb[0].mxu0
      %v5304 = vadd.f32 %v4788, %v5303
      %v5305 = vpop.f32.mrb[0].mxu0
      %5306 = vmatprep.mubr.f32.mxu0 0.0
      %5307 = vmatmul.mubr.f32.gmra.mrb[0].mxu0 %v4920
      %v5308 = vpop.f32.mrb[0].mxu0
      %v5309 = vadd.f32 %v4788, %v5308
      %v5310 = vpop.f32.mrb[0].mxu0
      %5311 = vmatprep.mubr.f32.mxu0 0.0
      %5312 = vmatmul.mubr.f32.gmra.mrb[0].mxu0 %v4923
      %v5313 = vpop.f32.mrb[0].mxu0
      %v5314 = vadd.f32 %v4788, %v5313
      %v5315 = vpop.f32.mrb[0].mxu0
      %5316 = vmatprep.mubr.f32.mxu0 0.0
      %5317 = vmatmul.mubr.f32.gmra.mrb[0].mxu0 %v4926
      %v5318 = vpop.f32.mrb[0].mxu0
      %v5319 = vadd.f32 %v4788, %v5318
      %v5320 = vpop.f32.mrb[0].mxu0
      %5321 = vmatprep.mubr.f32.mxu0 0.0
      %5322 = vmatmul.mubr.f32.gmra.mrb[0].mxu0 %v4929
      %v5323 = vpop.f32.mrb[0].mxu0
      %v5324 = vadd.f32 %v4788, %v5323
      %v5325 = vpop.f32.mrb[0].mxu0
      %5326 = vmatprep.mubr.f32.mxu0 0.0
      %5327 = vmatmul.mubr.f32.gmra.mrb[0].mxu0 %v4932
      %v5328 = vpop.f32.mrb[0].mxu0
      %v5329 = vadd.f32 %v4788, %v5328
      %v5330 = vpop.f32.mrb[0].mxu0
      %5331 = vmatprep.mubr.f32.mxu0 0.0
      %5332 = vmatmul.mubr.f32.gmra.mrb[0].mxu0 %v4935
      %v5333 = vpop.f32.mrb[0].mxu0
      %v5334 = vadd.f32 %v4788, %v5333
      %v5335 = vpop.f32.mrb[0].mxu0
      %5336 = vmatprep.mubr.f32.mxu0 0.0
      %5337 = vmatmul.mubr.f32.gmra.mrb[0].mxu0 %v4938
      %v5338 = vpop.f32.mrb[0].mxu0
      %v5339 = vadd.f32 %v4788, %v5338
      %v5340 = vpop.f32.mrb[0].mxu0
      %5341 = vmatprep.mubr.f32.mxu0 0.0
      %5342 = vmatmul.mubr.f32.gmra.mrb[0].mxu0 %v4941
      %v5343 = vpop.f32.mrb[0].mxu0
      %v5344 = vadd.f32 %v4788, %v5343
      %v5345 = vpop.f32.mrb[0].mxu0
      %5346 = vmatprep.mubr.f32.mxu0 0.0
      %5347 = vmatmul.mubr.f32.gmra.mrb[0].mxu0 %v4944
      %v5348 = vpop.f32.mrb[0].mxu0
      %v5349 = vadd.f32 %v4788, %v5348
      %v5350 = vpop.f32.mrb[0].mxu0
      %5351 = vmatprep.mubr.f32.mxu0 0.0
      %5352 = vmatmul.mubr.f32.gmra.mrb[0].mxu0 %v4947
      %v5353 = vpop.f32.mrb[0].mxu0
      %v5354 = vadd.f32 %v4788, %v5353
      %v5355 = vpop.f32.mrb[0].mxu0
      %5356 = vmatprep.mubr.f32.mxu0 0.0
      %5357 = vmatmul.mubr.f32.gmra.mrb[0].mxu0 %v4950
      %v5358 = vpop.f32.mrb[0].mxu0
      %v5359 = vadd.f32 %v4788, %v5358
      %v5360 = vpop.f32.mrb[0].mxu0
      %5361 = vmatprep.mubr.f32.mxu0 0.0
      %5362 = vmatmul.mubr.f32.gmra.mrb[0].mxu0 %v4953
      %v5363 = vpop.f32.mrb[0].mxu0
      %v5364 = vadd.f32 %v4788, %v5363
      %v5365 = vpop.f32.mrb[0].mxu0
      %5366 = vmatprep.mubr.f32.mxu0 0.0
      %5367 = vmatmul.mubr.f32.gmra.mrb[0].mxu0 %v4956
      %v5368 = vpop.f32.mrb[0].mxu0
      %v5369 = vadd.f32 %v4788, %v5368
      %v5370 = vpop.f32.mrb[0].mxu0
      %5371 = vmatprep.mubr.f32.mxu0 0.0
      %5372 = vmatmul.mubr.f32.gmra.mrb[0].mxu0 %v4959
      %v5373 = vpop.f32.mrb[0].mxu0
      %v5374 = vadd.f32 %v4788, %v5373
      %v5375 = vpop.f32.mrb[0].mxu0
      %5376 = vmatprep.mubr.f32.mxu0 0.0
      %5377 = vmatmul.mubr.f32.gmra.mrb[0].mxu0 %v4962
      %v5378 = vpop.f32.mrb[0].mxu0
      %v5379 = vadd.f32 %v4788, %v5378
      %v5380 = vpop.f32.mrb[0].mxu0
      %5381 = vmatprep.mubr.f32.mxu0 0.0
      %5382 = vmatmul.mubr.f32.gmra.mrb[0].mxu0 %v4965
      %v5383 = vpop.f32.mrb[0].mxu0
      %v5384 = vadd.f32 %v4788, %v5383
      %v5385 = vpop.f32.mrb[0].mxu0
      %5386 = vmatprep.mubr.f32.mxu0 0.0
      %5387 = vmatmul.mubr.f32.gmra.mrb[0].mxu0 %v4968
      %v5388 = vpop.f32.mrb[0].mxu0
      %v5389 = vadd.f32 %v4788, %v5388
      %v5390 = vpop.f32.mrb[0].mxu0
      %5391 = vmatprep.mubr.f32.mxu0 0.0
      %5392 = vmatmul.mubr.f32.gmra.mrb[0].mxu0 %v4971
      %v5393 = vpop.f32.mrb[0].mxu0
      %v5394 = vadd.f32 %v4788, %v5393
      %v5395 = vpop.f32.mrb[0].mxu0
      %5396 = vmatprep.mubr.f32.mxu0 0.0
      %5397 = vmatmul.mubr.f32.gmra.mrb[0].mxu0 %v4974
      %v5398 = vpop.f32.mrb[0].mxu0
      %v5399 = vadd.f32 %v4788, %v5398
      %v5400 = vpop.f32.mrb[0].mxu0
      %5401 = vmatprep.mubr.f32.mxu0 0.0
      %5402 = vmatmul.mubr.f32.gmra.mrb[0].mxu0 %v4977
      %v5403 = vpop.f32.mrb[0].mxu0
      %v5404 = vadd.f32 %v4788, %v5403
      %v5405 = vpop.f32.mrb[0].mxu0
      %5406 = vmatprep.mubr.f32.mxu0 0.0
      %5407 = vmatmul.mubr.f32.gmra.mrb[0].mxu0 %v4980
      %v5408 = vpop.f32.mrb[0].mxu0
      %v5409 = vadd.f32 %v4788, %v5408
      %v5410 = vpop.f32.mrb[0].mxu0
      %5411 = vmatprep.mubr.f32.mxu0 0.0
      %5412 = vmatmul.mubr.f32.gmra.mrb[0].mxu0 %v4983
      %v5413 = vpop.f32.mrb[0].mxu0
      %v5414 = vadd.f32 %v4788, %v5413
      %v5415 = vpop.f32.mrb[0].mxu0
      %5416 = vmatprep.mubr.f32.mxu0 0.0
      %5417 = vmatmul.mubr.f32.gmra.mrb[0].mxu0 %v4986
      %v5418 = vpop.f32.mrb[0].mxu0
      %v5419 = vadd.f32 %v4788, %v5418
      %v5420 = vpop.f32.mrb[0].mxu0
      %5421 = vmatprep.mubr.f32.mxu0 0.0
      %5422 = vmatmul.mubr.f32.gmra.mrb[0].mxu0 %v4989
      %v5423 = vpop.f32.mrb[0].mxu0
      %v5424 = vadd.f32 %v4788, %v5423
      %v5425 = vpop.f32.mrb[0].mxu0
      %5426 = vmatprep.mubr.f32.mxu0 0.0
      %5427 = vmatmul.mubr.f32.gmra.mrb[0].mxu0 %v4992
      %v5428 = vpop.f32.mrb[0].mxu0
      %v5429 = vadd.f32 %v4788, %v5428
      %v5430 = vpop.f32.mrb[0].mxu0
      %5431 = vmatprep.mubr.f32.mxu0 0.0
      %5432 = vmatmul.mubr.f32.gmra.mrb[0].mxu0 %v4995
      %v5433 = vpop.f32.mrb[0].mxu0
      %v5434 = vadd.f32 %v4788, %v5433
      %v5435 = vpop.f32.mrb[0].mxu0
      %5436 = vmatprep.mubr.f32.mxu0 0.0
      %5437 = vmatmul.mubr.f32.gmra.mrb[0].mxu0 %v4998
      %v5438 = vpop.f32.mrb[0].mxu0
      %v5439 = vadd.f32 %v4788, %v5438
      %v5440 = vpop.f32.mrb[0].mxu0
      %5441 = vmatprep.mubr.f32.mxu0 0.0
      %5442 = vmatmul.mubr.f32.gmra.mrb[0].mxu0 %v5001
      %v5443 = vpop.f32.mrb[0].mxu0
      %v5444 = vadd.f32 %v4788, %v5443
      %v5445 = vpop.f32.mrb[0].mxu0
      %5446 = vmatprep.mubr.f32.mxu0 0.0
      %5447 = vmatmul.mubr.f32.gmra.mrb[0].mxu0 %v5004
      %v5448 = vpop.f32.mrb[0].mxu0
      %v5449 = vadd.f32 %v4788, %v5448
      %v5450 = vpop.f32.mrb[0].mxu0
      %5451 = vmatprep.mubr.f32.mxu0 0.0
      %5452 = vmatmul.mubr.f32.gmra.mrb[0].mxu0 %v5007
      %v5453 = vpop.f32.mrb[0].mxu0
      %v5454 = vadd.f32 %v4788, %v5453
      %v5455 = vpop.f32.mrb[0].mxu0
      %5456 = vmatprep.mubr.f32.mxu0 0.0
      %5457 = vmatmul.mubr.f32.gmra.mrb[0].mxu0 %v5010
      %v5458 = vpop.f32.mrb[0].mxu0
      %v5459 = vadd.f32 %v4788, %v5458
      %v5460 = vpop.f32.mrb[0].mxu0
      %5461 = vmatprep.mubr.f32.mxu0 0.0
      %5462 = vmatmul.mubr.f32.gmra.mrb[0].mxu0 %v5013
      %v5463 = vpop.f32.mrb[0].mxu0
      %v5464 = vadd.f32 %v4788, %v5463
      %v5465 = vpop.f32.mrb[0].mxu0
      %5466 = vmatprep.mubr.f32.mxu0 0.0
      %5467 = vmatmul.mubr.f32.gmra.mrb[0].mxu0 %v5016
      %v5468 = vpop.f32.mrb[0].mxu0
      %v5469 = vadd.f32 %v4788, %v5468
      %v5470 = vpop.f32.mrb[0].mxu0
      %5471 = vmatprep.mubr.f32.mxu0 0.0
      %5472 = vmatmul.mubr.f32.gmra.mrb[0].mxu0 %v5019
      %v5473 = vpop.f32.mrb[0].mxu0
      %v5474 = vadd.f32 %v4788, %v5473
      %v5475 = vpop.f32.mrb[0].mxu0
      %5476 = vmatprep.mubr.f32.mxu0 0.0
      %5477 = vmatmul.mubr.f32.gmra.mrb[0].mxu0 %v5022
      %v5478 = vpop.f32.mrb[0].mxu0
      %v5479 = vadd.f32 %v4788, %v5478
      %v5480 = vpop.f32.mrb[0].mxu0
      %5481 = vmatprep.mubr.f32.mxu0 0.0
      %5482 = vmatmul.mubr.f32.gmra.mrb[0].mxu0 %v5025
      %v5483 = vpop.f32.mrb[0].mxu0
      %v5484 = vadd.f32 %v4788, %v5483
      %v5485 = vpop.f32.mrb[0].mxu0
      %5486 = vdwg.mxu0
      %vm5487 = vcmask 7168
      %5488 = vst.msk [vmem:[%s310] sm:$0xff] %vm5487, %v5094
      %5489 = vst.msk [vmem:[%s310 + $0x8] sm:$0xff] %vm5487, %v5099
      %5490 = vst.msk [vmem:[%s310 + $0x10] sm:$0xff] %vm5487, %v5104
      %5491 = vst.msk [vmem:[%s310 + $0x18] sm:$0xff] %vm5487, %v5109
      %5492 = vst.msk [vmem:[%s310 + $0x20] sm:$0xff] %vm5487, %v5114
      %5493 = vst.msk [vmem:[%s310 + $0x28] sm:$0xff] %vm5487, %v5119
      %5494 = vst.msk [vmem:[%s310 + $0x30] sm:$0xff] %vm5487, %v5124
      %5495 = vst.msk [vmem:[%s310 + $0x38] sm:$0xff] %vm5487, %v5129
      %5496 = vst.msk [vmem:[%s310 + $0x40] sm:$0xff] %vm5487, %v5134
      %5497 = vst.msk [vmem:[%s310 + $0x48] sm:$0xff] %vm5487, %v5139
      %5498 = vst.msk [vmem:[%s310 + $0x50] sm:$0xff] %vm5487, %v5144
      %5499 = vst.msk [vmem:[%s310 + $0x58] sm:$0xff] %vm5487, %v5149
      %5500 = vst.msk [vmem:[%s310 + $0x60] sm:$0xff] %vm5487, %v5154
      %5501 = vst.msk [vmem:[%s310 + $0x68] sm:$0xff] %vm5487, %v5159
      %5502 = vst.msk [vmem:[%s310 + $0x70] sm:$0xff] %vm5487, %v5164
      %5503 = vst.msk [vmem:[%s310 + $0x78] sm:$0xff] %vm5487, %v5169
      %5504 = vst.msk [vmem:[%s310 + $0x80] sm:$0xff] %vm5487, %v5174
      %5505 = vst.msk [vmem:[%s310 + $0x88] sm:$0xff] %vm5487, %v5179
      %5506 = vst.msk [vmem:[%s310 + $0x90] sm:$0xff] %vm5487, %v5184
      %5507 = vst.msk [vmem:[%s310 + $0x98] sm:$0xff] %vm5487, %v5189
      %5508 = vst.msk [vmem:[%s310 + $0xa0] sm:$0xff] %vm5487, %v5194
      %5509 = vst.msk [vmem:[%s310 + $0xa8] sm:$0xff] %vm5487, %v5199
      %5510 = vst.msk [vmem:[%s310 + $0xb0] sm:$0xff] %vm5487, %v5204
      %5511 = vst.msk [vmem:[%s310 + $0xb8] sm:$0xff] %vm5487, %v5209
      %5512 = vst.msk [vmem:[%s310 + $0xc0] sm:$0xff] %vm5487, %v5214
      %5513 = vst.msk [vmem:[%s310 + $0xc8] sm:$0xff] %vm5487, %v5219
      %5514 = vst.msk [vmem:[%s310 + $0xd0] sm:$0xff] %vm5487, %v5224
      %5515 = vst.msk [vmem:[%s310 + $0xd8] sm:$0xff] %vm5487, %v5229
      %5516 = vst.msk [vmem:[%s310 + $0xe0] sm:$0xff] %vm5487, %v5234
      %5517 = vst.msk [vmem:[%s310 + $0xe8] sm:$0xff] %vm5487, %v5239
      %5518 = vst.msk [vmem:[%s310 + $0xf0] sm:$0xff] %vm5487, %v5244
      %5519 = vst.msk [vmem:[%s310 + $0xf8] sm:$0xff] %vm5487, %v5249
      %5520 = vst.msk [vmem:[%s310 + $0x100] sm:$0xff] %vm5487, %v5254
      %5521 = vst.msk [vmem:[%s310 + $0x108] sm:$0xff] %vm5487, %v5259
      %5522 = vst.msk [vmem:[%s310 + $0x110] sm:$0xff] %vm5487, %v5264
      %5523 = vst.msk [vmem:[%s310 + $0x118] sm:$0xff] %vm5487, %v5269
      %5524 = vst.msk [vmem:[%s310 + $0x120] sm:$0xff] %vm5487, %v5274
      %5525 = vst.msk [vmem:[%s310 + $0x128] sm:$0xff] %vm5487, %v5279
      %5526 = vst.msk [vmem:[%s310 + $0x130] sm:$0xff] %vm5487, %v5284
      %5527 = vst.msk [vmem:[%s310 + $0x138] sm:$0xff] %vm5487, %v5289
      %5528 = vst.msk [vmem:[%s310 + $0x140] sm:$0xff] %vm5487, %v5294
      %5529 = vst.msk [vmem:[%s310 + $0x148] sm:$0xff] %vm5487, %v5299
      %5530 = vst.msk [vmem:[%s310 + $0x150] sm:$0xff] %vm5487, %v5304
      %5531 = vst.msk [vmem:[%s310 + $0x158] sm:$0xff] %vm5487, %v5309
      %5532 = vst.msk [vmem:[%s310 + $0x160] sm:$0xff] %vm5487, %v5314
      %5533 = vst.msk [vmem:[%s310 + $0x168] sm:$0xff] %vm5487, %v5319
      %5534 = vst.msk [vmem:[%s310 + $0x170] sm:$0xff] %vm5487, %v5324
      %5535 = vst.msk [vmem:[%s310 + $0x178] sm:$0xff] %vm5487, %v5329
      %5536 = vst.msk [vmem:[%s310 + $0x180] sm:$0xff] %vm5487, %v5334
      %5537 = vst.msk [vmem:[%s310 + $0x188] sm:$0xff] %vm5487, %v5339
      %5538 = vst.msk [vmem:[%s310 + $0x190] sm:$0xff] %vm5487, %v5344
      %5539 = vst.msk [vmem:[%s310 + $0x198] sm:$0xff] %vm5487, %v5349
      %5540 = vst.msk [vmem:[%s310 + $0x1a0] sm:$0xff] %vm5487, %v5354
      %5541 = vst.msk [vmem:[%s310 + $0x1a8] sm:$0xff] %vm5487, %v5359
      %5542 = vst.msk [vmem:[%s310 + $0x1b0] sm:$0xff] %vm5487, %v5364
      %5543 = vst.msk [vmem:[%s310 + $0x1b8] sm:$0xff] %vm5487, %v5369
      %5544 = vst.msk [vmem:[%s310 + $0x1c0] sm:$0xff] %vm5487, %v5374
      %5545 = vst.msk [vmem:[%s310 + $0x1c8] sm:$0xff] %vm5487, %v5379
      %5546 = vst.msk [vmem:[%s310 + $0x1d0] sm:$0xff] %vm5487, %v5384
      %5547 = vst.msk [vmem:[%s310 + $0x1d8] sm:$0xff] %vm5487, %v5389
      %5548 = vst.msk [vmem:[%s310 + $0x1e0] sm:$0xff] %vm5487, %v5394
      %5549 = vst.msk [vmem:[%s310 + $0x1e8] sm:$0xff] %vm5487, %v5399
      %5550 = vst.msk [vmem:[%s310 + $0x1f0] sm:$0xff] %vm5487, %v5404
      %5551 = vst.msk [vmem:[%s310 + $0x1f8] sm:$0xff] %vm5487, %v5409
      %5552 = vst.msk [vmem:[%s310 + $0x200] sm:$0xff] %vm5487, %v5414
      %5553 = vst.msk [vmem:[%s310 + $0x208] sm:$0xff] %vm5487, %v5419
      %5554 = vst.msk [vmem:[%s310 + $0x210] sm:$0xff] %vm5487, %v5424
      %5555 = vst.msk [vmem:[%s310 + $0x218] sm:$0xff] %vm5487, %v5429
      %5556 = vst.msk [vmem:[%s310 + $0x220] sm:$0xff] %vm5487, %v5434
      %5557 = vst.msk [vmem:[%s310 + $0x228] sm:$0xff] %vm5487, %v5439
      %5558 = vst.msk [vmem:[%s310 + $0x230] sm:$0xff] %vm5487, %v5444
      %5559 = vst.msk [vmem:[%s310 + $0x238] sm:$0xff] %vm5487, %v5449
      %5560 = vst.msk [vmem:[%s310 + $0x240] sm:$0xff] %vm5487, %v5454
      %5561 = vst.msk [vmem:[%s310 + $0x248] sm:$0xff] %vm5487, %v5459
      %5562 = vst.msk [vmem:[%s310 + $0x250] sm:$0xff] %vm5487, %v5464
      %5563 = vst.msk [vmem:[%s310 + $0x258] sm:$0xff] %vm5487, %v5469
      %5564 = vst.msk [vmem:[%s310 + $0x260] sm:$0xff] %vm5487, %v5474
      %5565 = vst.msk [vmem:[%s310 + $0x268] sm:$0xff] %vm5487, %v5479
      %5566 = vst.msk [vmem:[%s310 + $0x270] sm:$0xff] %vm5487, %v5484
      %p5567 = scmp.lt.s32.totalorder %s20, 1
      %s5568 = scalar_select %p5567, %s20, 1
      %s5569 = smul.addr %s5568, 79
      %s5570 = smul.addr %s5569, 8
      %s5571 = scalar_lea.vmem %s7, %s5570
      // Predicated region
      $region49: #{tpu_custom_call.1} parent=47 // pred_check
        %p5572 = pneg %p190
      $region50: #{tpu_custom_call.1} parent=47 // pred_check_branch
        %5574 = sbr.rel (%p5572) target = $region52
      $region51: #{tpu_custom_call.1} parent=47 // pred_region
        _
      $region52: #{tpu_custom_call.1} parent=47 // pred_fallthru
        _
    $region48: #{tpu_custom_call.1} parent=5 // pred_fallthru
      _
    %p5575 = scmp.le.s32.totalorder 2, %s15
    // Predicated region
    $region53: #{tpu_custom_call.1} parent=5 // pred_check
      %p5576 = pneg %p5575
    $region54: #{tpu_custom_call.1} parent=5 // pred_check_branch
      %5578 = sbr.rel (%p5576) target = $region56
    $region55: #{tpu_custom_call.1} parent=5 // pred_region
      %s5579 = ssub.s32 %s15, 2
      // Predicated region
      $region57: #{tpu_custom_call.1} parent=55 // pred_check
        %p5580 = pneg %p196
      $region58: #{tpu_custom_call.1} parent=55 // pred_check_branch
        %5582 = sbr.rel (%p5580) target = $region60
      $region59: #{tpu_custom_call.1} parent=55 // pred_region
        %p5583 = scmp.lt.s32.totalorder %s21, 1
        %s5584 = scalar_select %p5583, %s21, 1
        %s5585 = smul.addr %s5584, 79
        %s5586 = smul.addr %s5585, 8
        %s5587 = scalar_lea.vmem %s7, %s5586
      $region60: #{tpu_custom_call.1} parent=55 // pred_fallthru
        _
    $region56: #{tpu_custom_call.1} parent=5 // pred_fallthru
      _
  $region6: #{tpu_custom_call.1} parent=0 // loop_footer
    %s19 = sadd.s32 1, %s15
  $region7: #{tpu_custom_call.1} parent=0 // loop_footer_branch
    %14 = sbr.rel target = $region3
  $region8: #{tpu_custom_call.1} parent=0 // loop_exit
    _

</llo_original>
